<compile_context>
chip_gen: v7x
topology: tpu7x:2x2x1
jax: 0.10.0
libtpu: 0.0.40
codegen_flags: <defaults>
</compile_context>

<pallas_src>
import jax
import jax.numpy as jnp
from jax.experimental import pallas as pl
from jax.experimental.pallas import tpu as pltpu

LANE = 128


def _round_up(n, m=LANE):
    return ((n + m - 1) // m) * m


def _leaky_relu(v, slope=0.2):
    # Equivalent to nn.LeakyReLU(0.2) for 0 < slope < 1: max(v, slope*v).
    return jnp.maximum(v, slope * v)


def vae_kernel(
    x_ref, eps_ref,
    w_in_ref, b_in_ref, w_in2_ref, b_in2_ref,
    w_mv_ref, b_mv_ref,
    w_h_ref, b_h_ref, w_h2_ref, b_h2_ref,
    w_out_ref, b_out_ref,
    xhat_ref, mlv_ref,
):
    bf = jnp.bfloat16
    ld = eps_ref.shape[-1]          # true (unpadded) latent dim
    lp = mlv_ref.shape[-1] // 2     # lane-dense padded latent dim (multiple of 128)

    x = x_ref[...].astype(bf)       # [tb, indim] (indim unpadded; Mosaic masks K)

    # ---- Encoder ----
    h = _leaky_relu(
        jnp.dot(x, w_in_ref[...], preferred_element_type=jnp.float32) + b_in_ref[...]
    )
    h = _leaky_relu(
        jnp.dot(h.astype(bf), w_in2_ref[...], preferred_element_type=jnp.float32)
        + b_in2_ref[...]
    )

    # Fused mean|log_var head: one lane-dense [tb, 2*lp] matmul (f32 accumulate).
    mlv = (
        jnp.dot(h.astype(bf), w_mv_ref[...], preferred_element_type=jnp.float32)
        + b_mv_ref[...]
    )

    # ---- Reparameterization on the true latent lanes only ----
    # z = mean + exp(0.5 * log_var) * eps.  Decoder weight rows beyond ld are the
    # only consumers of padded z lanes and they are zero, so we simply never
    # build them: the first decoder matmul contracts over K = ld.
    mean_s = mlv[:, :ld]
    log_var_s = mlv[:, lp:lp + ld]
    z = mean_s + jnp.exp(0.5 * log_var_s) * eps_ref[...]       # [tb, ld] f32

    # ---- Decoder ----
    d = _leaky_relu(
        jnp.dot(z.astype(bf), w_h_ref[...], preferred_element_type=jnp.float32)
        + b_h_ref[...]
    )
    d = _leaky_relu(
        jnp.dot(d.astype(bf), w_h2_ref[...], preferred_element_type=jnp.float32)
        + b_h2_ref[...]
    )
    logits = (
        jnp.dot(d.astype(bf), w_out_ref[...], preferred_element_type=jnp.float32)
        + b_out_ref[...]
    )

    # Sigmoid with the divide on the EUP slot (approx vrcp, ~2^-12 rel error).
    xhat = pl.reciprocal(1.0 + jnp.exp(-logits), approx=True)

    # bf16 lane-dense stores (outputs upcast / split in the wrapper).
    xhat_ref[...] = xhat.astype(xhat_ref.dtype)
    mlv_ref[...] = mlv.astype(mlv_ref.dtype)


# ----------------------------------------------------------------------------
# Parameters: logical (PyTorch-equivalent) init + padding / fusing / bf16 prep.
# ----------------------------------------------------------------------------
def init_params(key, indim, outdim, hiddim, latentdim):
    """torch.nn.Linear-style init; weights stored pre-transposed [in, out], bias [out]."""
    def linear(k, fan_in, fan_out):
        kw, kb = jax.random.split(k)
        bound = 1.0 / jnp.sqrt(fan_in)
        w = jax.random.uniform(kw, (fan_in, fan_out), jnp.float32, -bound, bound)
        b = jax.random.uniform(kb, (fan_out,), jnp.float32, -bound, bound)
        return w, b

    keys = jax.random.split(key, 7)
    p = {}
    p["w_in"], p["b_in"] = linear(keys[0], indim, hiddim)
    p["w_in2"], p["b_in2"] = linear(keys[1], hiddim, hiddim)
    p["w_mean"], p["b_mean"] = linear(keys[2], hiddim, latentdim)
    p["w_var"], p["b_var"] = linear(keys[3], hiddim, latentdim)
    p["w_h"], p["b_h"] = linear(keys[4], latentdim, hiddim)
    p["w_h2"], p["b_h2"] = linear(keys[5], hiddim, hiddim)
    p["w_out"], p["b_out"] = linear(keys[6], hiddim, outdim)
    return p


def _pad2(a, rows, cols):
    return jnp.pad(a, ((0, rows - a.shape[0]), (0, cols - a.shape[1])))


def prepare_params(p, indim, outdim, hiddim, latentdim):
    """One-time (outside the hot path) weight prep:
    lane-dense zero padding of OUT dims, fused mean|log_var head, bf16 weights.
    Contraction (K) dims that come straight from activations (indim, latentdim)
    stay unpadded so the activations need no padding at all."""
    hp, lp, op = _round_up(hiddim), _round_up(latentdim), _round_up(outdim)
    bf = jnp.bfloat16
    wp = {}
    wp["w_in"] = _pad2(p["w_in"], indim, hp).astype(bf)           # [indim, hp]
    wp["b_in"] = _pad2(p["b_in"].reshape(1, -1), 1, hp)
    wp["w_in2"] = _pad2(p["w_in2"], hp, hp).astype(bf)            # [hp, hp]
    wp["b_in2"] = _pad2(p["b_in2"].reshape(1, -1), 1, hp)
    # fused mean | log_var head -> [hp, 2*lp] (padded columns are zero -> inert)
    wp["w_mv"] = jnp.concatenate(
        [_pad2(p["w_mean"], hp, lp), _pad2(p["w_var"], hp, lp)], axis=1
    ).astype(bf)
    wp["b_mv"] = jnp.concatenate(
        [_pad2(p["b_mean"].reshape(1, -1), 1, lp),
         _pad2(p["b_var"].reshape(1, -1), 1, lp)], axis=1
    )
    wp["w_h"] = _pad2(p["w_h"], latentdim, hp).astype(bf)         # [latentdim, hp]
    wp["b_h"] = _pad2(p["b_h"].reshape(1, -1), 1, hp)
    wp["w_h2"] = _pad2(p["w_h2"], hp, hp).astype(bf)              # [hp, hp]
    wp["b_h2"] = _pad2(p["b_h2"].reshape(1, -1), 1, hp)
    wp["w_out"] = _pad2(p["w_out"], hp, op).astype(bf)            # [hp, op]
    wp["b_out"] = _pad2(p["b_out"].reshape(1, -1), 1, op)
    wp["dims"] = (indim, hiddim, latentdim, outdim, hp, lp, op)
    return wp


# ----------------------------------------------------------------------------
# Wrapper
# ----------------------------------------------------------------------------
def _pick_batch_tile(B):
    """Big tiles amortize per-step overhead; keep >=2 grid steps when possible
    so the 'parallel' axis can split across v7x's two TensorCores."""
    if B <= 256:
        return B
    for tb in (1024, 512, 256):
        if B % tb == 0 and B // tb >= 2:
            return tb
    upper = min(B // 2, 1024)
    for tb in range(upper - upper % 8, 7, -8):
        if B % tb == 0:
            return tb
    return B


def vae_forward(x, eps, wp, *, batch_tile=None):
    """Fused VAE forward.
    x:   [B, indim]     f32 (unpadded)
    eps: [B, latentdim] f32 (unpadded)  -- randn_like(std)
    Returns (x_hat [B, outdim], mean [B, latentdim], log_var [B, latentdim]) as f32."""
    indim, hiddim, latentdim, outdim, hp, lp, op = wp["dims"]
    B = x.shape[0]
    tb = batch_tile if batch_tile is not None else _pick_batch_tile(B)
    assert B % tb == 0, "batch must be divisible by batch_tile"
    assert tb == B or tb % 8 == 0, "batch_tile must be a multiple of 8 (sublane)"
    grid = (B // tb,)

    weight_args = [
        wp["w_in"], wp["b_in"], wp["w_in2"], wp["b_in2"],
        wp["w_mv"], wp["b_mv"],
        wp["w_h"], wp["b_h"], wp["w_h2"], wp["b_h2"],
        wp["w_out"], wp["b_out"],
    ]

    def row_spec(feat):
        # Full last dim (may be non-128) is legal; batch is blocked along rows.
        return pl.BlockSpec((tb, feat), lambda i: (i, 0))

    def full_spec(a):
        # Grid-invariant weights: whole array, block index never changes.
        # (At large hiddim, switch these to single buffering to save VMEM.)
        return pl.BlockSpec(a.shape, lambda i: (0, 0))

    in_specs = [row_spec(indim), row_spec(latentdim)] + [full_spec(a) for a in weight_args]
    out_specs = [row_spec(op), row_spec(2 * lp)]
    out_shape = [
        jax.ShapeDtypeStruct((B, op), jnp.bfloat16),        # x_hat (padded, bf16)
        jax.ShapeDtypeStruct((B, 2 * lp), jnp.bfloat16),    # packed mean|log_var
    ]

    # Explicit scoped-VMEM budget: double-buffered batch blocks + weights +
    # generous slack for f32 intermediates; clamped to [32 MiB, 64 MiB] so it is
    # valid on every generation (v7x physical VMEM is 64 MiB).
    io_bytes = 2 * tb * (indim * 4 + latentdim * 4 + op * 2 + 2 * lp * 2)
    w_bytes = 2 * sum(int(a.size) * a.dtype.itemsize for a in weight_args)
    act_bytes = 8 * tb * max(hp, op, 2 * lp) * 4
    vmem_limit = int(min(64 << 20, max(32 << 20, 2 * (io_bytes + w_bytes + act_bytes))))

    fn = pl.pallas_call(
        vae_kernel,
        grid_spec=pltpu.PrefetchScalarGridSpec(
            num_scalar_prefetch=0,
            grid=grid,
            in_specs=in_specs,
            out_specs=out_specs,
        ),
        out_shape=out_shape,
        compiler_params=pltpu.CompilerParams(
            dimension_semantics=("parallel",),
            vmem_limit_bytes=vmem_limit,
        ),
    )
    xhat_p, mlv = fn(x, eps, *weight_args)

    # Split / upcast outside the kernel (tiny arrays; fuses with downstream use).
    x_hat = xhat_p[:, :outdim].astype(jnp.float32)
    mean = mlv[:, :latentdim].astype(jnp.float32)
    log_var = mlv[:, lp:lp + latentdim].astype(jnp.float32)
    return x_hat, mean, log_var


# ----------------------------------------------------------------------------
# Plain-JAX reference (same bf16-matmul / f32-accumulate math as the kernel)
# ----------------------------------------------------------------------------
def reference_forward(x, eps, p):
    bf = jnp.bfloat16

    def dot(a, w):
        return jnp.dot(a.astype(bf), w.astype(bf), preferred_element_type=jnp.float32)

    lrelu = lambda v: jnp.where(v > 0, v, 0.2 * v)
    h = lrelu(dot(x, p["w_in"]) + p["b_in"])
    h = lrelu(dot(h, p["w_in2"]) + p["b_in2"])
    mean = dot(h, p["w_mean"]) + p["b_mean"]
    log_var = dot(h, p["w_var"]) + p["b_var"]
    z = mean + jnp.exp(0.5 * log_var) * eps
    d = lrelu(dot(z, p["w_h"]) + p["b_h"])
    d = lrelu(dot(d, p["w_h2"]) + p["b_h2"])
    x_hat = jax.nn.sigmoid(dot(d, p["w_out"]) + p["b_out"])
    return x_hat, mean, log_var


if __name__ == "__main__":
    # Shapes consistent with VAEModel(indim, outdim, hiddim, latentdim);
    # intentionally non-128-aligned feature dims to exercise the unpadded-K /
    # padded-output paths.  B=512 with the default tile (256) gives grid=(2,)
    # so the parallel axis can split across v7x's two TensorCores.
    B, indim, outdim, hiddim, latentdim = 512, 200, 200, 100, 16

    key = jax.random.PRNGKey(0)
    k_params, k_x, k_eps = jax.random.split(key, 3)

    params = init_params(k_params, indim, outdim, hiddim, latentdim)
    wp = prepare_params(params, indim, outdim, hiddim, latentdim)

    x = jax.random.normal(k_x, (B, indim), jnp.float32)
    eps = jax.random.normal(k_eps, (B, latentdim), jnp.float32)  # randn_like(std)

    x_hat, mean, log_var = vae_forward(x, eps, wp)  # default batch_tile -> 256
    jax.block_until_ready((x_hat, mean, log_var))

    # Sanity check against the plain-JAX reference (same bf16 matmul precision;
    # kernel outputs pass through a bf16 store, hence the loose tolerance).
    ref_x_hat, ref_mean, ref_log_var = reference_forward(x, eps, params)
    assert x_hat.shape == (B, outdim)
    assert mean.shape == (B, latentdim) and log_var.shape == (B, latentdim)
    assert jnp.allclose(x_hat, ref_x_hat, atol=2e-2, rtol=2e-2)
    assert jnp.allclose(mean, ref_mean, atol=2e-2, rtol=2e-2)
    assert jnp.allclose(log_var, ref_log_var, atol=2e-2, rtol=2e-2)

    print("KERNEL_OK")
</pallas_src>

<mosaic_0001>
module attributes {stable_mosaic.version = 11 : i64} {
  func.func @vae_kernel(%arg0: i32, %arg1: memref<256x200xf32, #tpu.memory_space<vmem>>, %arg2: memref<256x16xf32, #tpu.memory_space<vmem>>, %arg3: memref<200x128xbf16, #tpu.memory_space<vmem>>, %arg4: memref<1x128xf32, #tpu.memory_space<vmem>>, %arg5: memref<128x128xbf16, #tpu.memory_space<vmem>>, %arg6: memref<1x128xf32, #tpu.memory_space<vmem>>, %arg7: memref<128x256xbf16, #tpu.memory_space<vmem>>, %arg8: memref<1x256xf32, #tpu.memory_space<vmem>>, %arg9: memref<16x128xbf16, #tpu.memory_space<vmem>>, %arg10: memref<1x128xf32, #tpu.memory_space<vmem>>, %arg11: memref<128x128xbf16, #tpu.memory_space<vmem>>, %arg12: memref<1x128xf32, #tpu.memory_space<vmem>>, %arg13: memref<128x256xbf16, #tpu.memory_space<vmem>>, %arg14: memref<1x256xf32, #tpu.memory_space<vmem>>, %arg15: memref<256x256xbf16, #tpu.memory_space<vmem>>, %arg16: memref<256x256xbf16, #tpu.memory_space<vmem>>) attributes {dimension_semantics = [#tpu.dimension_semantics<parallel>], iteration_bounds = array<i64: 2>, scalar_prefetch = 0 : i64, scratch_operands = 0 : i64, tpu.core_type = #tpu.core_type<tc>, window_params = [{transform_indices = @transform_0, window_bounds = array<i64: 256, 200>}, {transform_indices = @transform_1, window_bounds = array<i64: 256, 16>}, {pipeline_mode = #tpu.pipeline_mode<synchronous>, transform_indices = @transform_2, window_bounds = array<i64: 200, 128>}, {pipeline_mode = #tpu.pipeline_mode<synchronous>, transform_indices = @transform_3, window_bounds = array<i64: 1, 128>}, {pipeline_mode = #tpu.pipeline_mode<synchronous>, transform_indices = @transform_4, window_bounds = array<i64: 128, 128>}, {pipeline_mode = #tpu.pipeline_mode<synchronous>, transform_indices = @transform_5, window_bounds = array<i64: 1, 128>}, {pipeline_mode = #tpu.pipeline_mode<synchronous>, transform_indices = @transform_6, window_bounds = array<i64: 128, 256>}, {pipeline_mode = #tpu.pipeline_mode<synchronous>, transform_indices = @transform_7, window_bounds = array<i64: 1, 256>}, {pipeline_mode = #tpu.pipeline_mode<synchronous>, transform_indices = @transform_8, window_bounds = array<i64: 16, 128>}, {pipeline_mode = #tpu.pipeline_mode<synchronous>, transform_indices = @transform_9, window_bounds = array<i64: 1, 128>}, {pipeline_mode = #tpu.pipeline_mode<synchronous>, transform_indices = @transform_10, window_bounds = array<i64: 128, 128>}, {pipeline_mode = #tpu.pipeline_mode<synchronous>, transform_indices = @transform_11, window_bounds = array<i64: 1, 128>}, {pipeline_mode = #tpu.pipeline_mode<synchronous>, transform_indices = @transform_12, window_bounds = array<i64: 128, 256>}, {pipeline_mode = #tpu.pipeline_mode<synchronous>, transform_indices = @transform_13, window_bounds = array<i64: 1, 256>}, {transform_indices = @transform_14, window_bounds = array<i64: 256, 256>}, {transform_indices = @transform_15, window_bounds = array<i64: 256, 256>}]} {
    %c0 = arith.constant 0 : index
    %c0_0 = arith.constant 0 : index
    %0 = vector.load %arg1[%c0, %c0_0] : memref<256x200xf32, #tpu.memory_space<vmem>>, vector<256x200xf32>
    %1 = arith.truncf %0 : vector<256x200xf32> to vector<256x200xbf16>
    %c0_1 = arith.constant 0 : index
    %c0_2 = arith.constant 0 : index
    %2 = vector.load %arg3[%c0_1, %c0_2] : memref<200x128xbf16, #tpu.memory_space<vmem>>, vector<200x128xbf16>
    %cst = arith.constant dense<0.000000e+00> : vector<256x128xf32>
    %3 = tpu.matmul %1, %2, %cst {dimension_numbers = #tpu.dot_dimension_numbers<[1], [0], [0], [1], [0, 0, 1, 1], [], []>} : vector<256x200xbf16>, vector<200x128xbf16>, vector<256x128xf32> -> vector<256x128xf32>
    %c0_3 = arith.constant 0 : index
    %c0_4 = arith.constant 0 : index
    %4 = vector.load %arg4[%c0_3, %c0_4] : memref<1x128xf32, #tpu.memory_space<vmem>>, vector<1x128xf32>
    %5 = vector.broadcast %4 : vector<1x128xf32> to vector<256x128xf32>
    %6 = arith.addf %3, %5 : vector<256x128xf32>
    %cst_5 = arith.constant 2.000000e-01 : f32
    %7 = vector.broadcast %cst_5 : f32 to vector<256x128xf32>
    %8 = arith.mulf %7, %6 : vector<256x128xf32>
    %9 = arith.maximumf %6, %8 : vector<256x128xf32>
    %10 = arith.truncf %9 : vector<256x128xf32> to vector<256x128xbf16>
    %c0_6 = arith.constant 0 : index
    %c0_7 = arith.constant 0 : index
    %11 = vector.load %arg5[%c0_6, %c0_7] : memref<128x128xbf16, #tpu.memory_space<vmem>>, vector<128x128xbf16>
    %cst_8 = arith.constant dense<0.000000e+00> : vector<256x128xf32>
    %12 = tpu.matmul %10, %11, %cst_8 {dimension_numbers = #tpu.dot_dimension_numbers<[1], [0], [0], [1], [0, 0, 1, 1], [], []>} : vector<256x128xbf16>, vector<128x128xbf16>, vector<256x128xf32> -> vector<256x128xf32>
    %c0_9 = arith.constant 0 : index
    %c0_10 = arith.constant 0 : index
    %13 = vector.load %arg6[%c0_9, %c0_10] : memref<1x128xf32, #tpu.memory_space<vmem>>, vector<1x128xf32>
    %14 = vector.broadcast %13 : vector<1x128xf32> to vector<256x128xf32>
    %15 = arith.addf %12, %14 : vector<256x128xf32>
    %cst_11 = arith.constant 2.000000e-01 : f32
    %16 = vector.broadcast %cst_11 : f32 to vector<256x128xf32>
    %17 = arith.mulf %16, %15 : vector<256x128xf32>
    %18 = arith.maximumf %15, %17 : vector<256x128xf32>
    %19 = arith.truncf %18 : vector<256x128xf32> to vector<256x128xbf16>
    %c0_12 = arith.constant 0 : index
    %c0_13 = arith.constant 0 : index
    %20 = vector.load %arg7[%c0_12, %c0_13] : memref<128x256xbf16, #tpu.memory_space<vmem>>, vector<128x256xbf16>
    %cst_14 = arith.constant dense<0.000000e+00> : vector<256x256xf32>
    %21 = tpu.matmul %19, %20, %cst_14 {dimension_numbers = #tpu.dot_dimension_numbers<[1], [0], [0], [1], [0, 0, 1, 1], [], []>} : vector<256x128xbf16>, vector<128x256xbf16>, vector<256x256xf32> -> vector<256x256xf32>
    %c0_15 = arith.constant 0 : index
    %c0_16 = arith.constant 0 : index
    %22 = vector.load %arg8[%c0_15, %c0_16] : memref<1x256xf32, #tpu.memory_space<vmem>>, vector<1x256xf32>
    %23 = vector.broadcast %22 : vector<1x256xf32> to vector<256x256xf32>
    %24 = arith.addf %21, %23 : vector<256x256xf32>
    %25 = vector.extract_strided_slice %24 {offsets = [0, 0], sizes = [256, 16], strides = [1, 1]} : vector<256x256xf32> to vector<256x16xf32>
    %26 = vector.extract_strided_slice %24 {offsets = [0, 128], sizes = [256, 16], strides = [1, 1]} : vector<256x256xf32> to vector<256x16xf32>
    %cst_17 = arith.constant 5.000000e-01 : f32
    %27 = vector.broadcast %cst_17 : f32 to vector<256x16xf32>
    %28 = arith.mulf %27, %26 : vector<256x16xf32>
    %29 = math.exp %28 : vector<256x16xf32>
    %c0_18 = arith.constant 0 : index
    %c0_19 = arith.constant 0 : index
    %30 = vector.load %arg2[%c0_18, %c0_19] : memref<256x16xf32, #tpu.memory_space<vmem>>, vector<256x16xf32>
    %31 = arith.mulf %29, %30 : vector<256x16xf32>
    %32 = arith.addf %25, %31 : vector<256x16xf32>
    %33 = arith.truncf %32 : vector<256x16xf32> to vector<256x16xbf16>
    %c0_20 = arith.constant 0 : index
    %c0_21 = arith.constant 0 : index
    %34 = vector.load %arg9[%c0_20, %c0_21] : memref<16x128xbf16, #tpu.memory_space<vmem>>, vector<16x128xbf16>
    %cst_22 = arith.constant dense<0.000000e+00> : vector<256x128xf32>
    %35 = tpu.matmul %33, %34, %cst_22 {dimension_numbers = #tpu.dot_dimension_numbers<[1], [0], [0], [1], [0, 0, 1, 1], [], []>} : vector<256x16xbf16>, vector<16x128xbf16>, vector<256x128xf32> -> vector<256x128xf32>
    %c0_23 = arith.constant 0 : index
    %c0_24 = arith.constant 0 : index
    %36 = vector.load %arg10[%c0_23, %c0_24] : memref<1x128xf32, #tpu.memory_space<vmem>>, vector<1x128xf32>
    %37 = vector.broadcast %36 : vector<1x128xf32> to vector<256x128xf32>
    %38 = arith.addf %35, %37 : vector<256x128xf32>
    %cst_25 = arith.constant 2.000000e-01 : f32
    %39 = vector.broadcast %cst_25 : f32 to vector<256x128xf32>
    %40 = arith.mulf %39, %38 : vector<256x128xf32>
    %41 = arith.maximumf %38, %40 : vector<256x128xf32>
    %42 = arith.truncf %41 : vector<256x128xf32> to vector<256x128xbf16>
    %c0_26 = arith.constant 0 : index
    %c0_27 = arith.constant 0 : index
    %43 = vector.load %arg11[%c0_26, %c0_27] : memref<128x128xbf16, #tpu.memory_space<vmem>>, vector<128x128xbf16>
    %cst_28 = arith.constant dense<0.000000e+00> : vector<256x128xf32>
    %44 = tpu.matmul %42, %43, %cst_28 {dimension_numbers = #tpu.dot_dimension_numbers<[1], [0], [0], [1], [0, 0, 1, 1], [], []>} : vector<256x128xbf16>, vector<128x128xbf16>, vector<256x128xf32> -> vector<256x128xf32>
    %c0_29 = arith.constant 0 : index
    %c0_30 = arith.constant 0 : index
    %45 = vector.load %arg12[%c0_29, %c0_30] : memref<1x128xf32, #tpu.memory_space<vmem>>, vector<1x128xf32>
    %46 = vector.broadcast %45 : vector<1x128xf32> to vector<256x128xf32>
    %47 = arith.addf %44, %46 : vector<256x128xf32>
    %cst_31 = arith.constant 2.000000e-01 : f32
    %48 = vector.broadcast %cst_31 : f32 to vector<256x128xf32>
    %49 = arith.mulf %48, %47 : vector<256x128xf32>
    %50 = arith.maximumf %47, %49 : vector<256x128xf32>
    %51 = arith.truncf %50 : vector<256x128xf32> to vector<256x128xbf16>
    %c0_32 = arith.constant 0 : index
    %c0_33 = arith.constant 0 : index
    %52 = vector.load %arg13[%c0_32, %c0_33] : memref<128x256xbf16, #tpu.memory_space<vmem>>, vector<128x256xbf16>
    %cst_34 = arith.constant dense<0.000000e+00> : vector<256x256xf32>
    %53 = tpu.matmul %51, %52, %cst_34 {dimension_numbers = #tpu.dot_dimension_numbers<[1], [0], [0], [1], [0, 0, 1, 1], [], []>} : vector<256x128xbf16>, vector<128x256xbf16>, vector<256x256xf32> -> vector<256x256xf32>
    %c0_35 = arith.constant 0 : index
    %c0_36 = arith.constant 0 : index
    %54 = vector.load %arg14[%c0_35, %c0_36] : memref<1x256xf32, #tpu.memory_space<vmem>>, vector<1x256xf32>
    %55 = vector.broadcast %54 : vector<1x256xf32> to vector<256x256xf32>
    %56 = arith.addf %53, %55 : vector<256x256xf32>
    %cst_37 = arith.constant 0.000000e+00 : f32
    %57 = vector.broadcast %cst_37 : f32 to vector<256x256xf32>
    %58 = arith.subf %57, %56 : vector<256x256xf32>
    %59 = math.exp %58 : vector<256x256xf32>
    %cst_38 = arith.constant 1.000000e+00 : f32
    %60 = vector.broadcast %cst_38 : f32 to vector<256x256xf32>
    %61 = arith.addf %60, %59 : vector<256x256xf32>
    %62 = tpu.reciprocal %61 {approx = true} : vector<256x256xf32> -> vector<256x256xf32>
    %63 = arith.truncf %62 : vector<256x256xf32> to vector<256x256xbf16>
    %c0_39 = arith.constant 0 : index
    %c0_40 = arith.constant 0 : index
    %64 = vector.load %arg15[%c0_39, %c0_40] : memref<256x256xbf16, #tpu.memory_space<vmem>>, vector<256x256xbf16>
    tpu.vector_store %arg15[%c0_39, %c0_40], %63 {strides = array<i32>} : memref<256x256xbf16, #tpu.memory_space<vmem>>, vector<256x256xbf16>,
    %65 = arith.truncf %24 : vector<256x256xf32> to vector<256x256xbf16>
    %c0_41 = arith.constant 0 : index
    %c0_42 = arith.constant 0 : index
    %66 = vector.load %arg16[%c0_41, %c0_42] : memref<256x256xbf16, #tpu.memory_space<vmem>>, vector<256x256xbf16>
    tpu.vector_store %arg16[%c0_41, %c0_42], %65 {strides = array<i32>} : memref<256x256xbf16, #tpu.memory_space<vmem>>, vector<256x256xbf16>,
    return
  }
  func.func @transform_0(%arg0: i32) -> (i32, i32) {
    %c0_i32 = arith.constant 0 : i32
    %c0_i32_0 = arith.constant 0 : i32
    return %arg0, %c0_i32 : i32, i32
  }
  func.func @transform_1(%arg0: i32) -> (i32, i32) {
    %c0_i32 = arith.constant 0 : i32
    %c0_i32_0 = arith.constant 0 : i32
    return %arg0, %c0_i32 : i32, i32
  }
  func.func @transform_2(%arg0: i32) -> (i32, i32) {
    %c0_i32 = arith.constant 0 : i32
    %c0_i32_0 = arith.constant 0 : i32
    %c0_i32_1 = arith.constant 0 : i32
    return %c0_i32, %c0_i32_0 : i32, i32
  }
  func.func @transform_3(%arg0: i32) -> (i32, i32) {
    %c0_i32 = arith.constant 0 : i32
    %c0_i32_0 = arith.constant 0 : i32
    %c0_i32_1 = arith.constant 0 : i32
    return %c0_i32, %c0_i32_0 : i32, i32
  }
  func.func @transform_4(%arg0: i32) -> (i32, i32) {
    %c0_i32 = arith.constant 0 : i32
    %c0_i32_0 = arith.constant 0 : i32
    %c0_i32_1 = arith.constant 0 : i32
    return %c0_i32, %c0_i32_0 : i32, i32
  }
  func.func @transform_5(%arg0: i32) -> (i32, i32) {
    %c0_i32 = arith.constant 0 : i32
    %c0_i32_0 = arith.constant 0 : i32
    %c0_i32_1 = arith.constant 0 : i32
    return %c0_i32, %c0_i32_0 : i32, i32
  }
  func.func @transform_6(%arg0: i32) -> (i32, i32) {
    %c0_i32 = arith.constant 0 : i32
    %c0_i32_0 = arith.constant 0 : i32
    %c0_i32_1 = arith.constant 0 : i32
    return %c0_i32, %c0_i32_0 : i32, i32
  }
  func.func @transform_7(%arg0: i32) -> (i32, i32) {
    %c0_i32 = arith.constant 0 : i32
    %c0_i32_0 = arith.constant 0 : i32
    %c0_i32_1 = arith.constant 0 : i32
    return %c0_i32, %c0_i32_0 : i32, i32
  }
  func.func @transform_8(%arg0: i32) -> (i32, i32) {
    %c0_i32 = arith.constant 0 : i32
    %c0_i32_0 = arith.constant 0 : i32
    %c0_i32_1 = arith.constant 0 : i32
    return %c0_i32, %c0_i32_0 : i32, i32
  }
  func.func @transform_9(%arg0: i32) -> (i32, i32) {
    %c0_i32 = arith.constant 0 : i32
    %c0_i32_0 = arith.constant 0 : i32
    %c0_i32_1 = arith.constant 0 : i32
    return %c0_i32, %c0_i32_0 : i32, i32
  }
  func.func @transform_10(%arg0: i32) -> (i32, i32) {
    %c0_i32 = arith.constant 0 : i32
    %c0_i32_0 = arith.constant 0 : i32
    %c0_i32_1 = arith.constant 0 : i32
    return %c0_i32, %c0_i32_0 : i32, i32
  }
  func.func @transform_11(%arg0: i32) -> (i32, i32) {
    %c0_i32 = arith.constant 0 : i32
    %c0_i32_0 = arith.constant 0 : i32
    %c0_i32_1 = arith.constant 0 : i32
    return %c0_i32, %c0_i32_0 : i32, i32
  }
  func.func @transform_12(%arg0: i32) -> (i32, i32) {
    %c0_i32 = arith.constant 0 : i32
    %c0_i32_0 = arith.constant 0 : i32
    %c0_i32_1 = arith.constant 0 : i32
    return %c0_i32, %c0_i32_0 : i32, i32
  }
  func.func @transform_13(%arg0: i32) -> (i32, i32) {
    %c0_i32 = arith.constant 0 : i32
    %c0_i32_0 = arith.constant 0 : i32
    %c0_i32_1 = arith.constant 0 : i32
    return %c0_i32, %c0_i32_0 : i32, i32
  }
  func.func @transform_14(%arg0: i32) -> (i32, i32) {
    %c0_i32 = arith.constant 0 : i32
    %c0_i32_0 = arith.constant 0 : i32
    return %arg0, %c0_i32 : i32, i32
  }
  func.func @transform_15(%arg0: i32) -> (i32, i32) {
    %c0_i32 = arith.constant 0 : i32
    %c0_i32_0 = arith.constant 0 : i32
    return %arg0, %c0_i32 : i32, i32
  }
}

</mosaic_0001>

<llo_original>
// kernel: tpu_custom_call.1
$region0: #{tpu_custom_call.1}
  #allocation0 [shape = 'u32[]', space=smem, size = 0x4, offset = 0x4, fixed_abs, tag = 'smem constant byte address 0x4 - core index']
  #allocation1 [shape = 'u32[144,128]{1,0:T(1,128)}', space=vmem, size = 0x12000, scoped, tag = 'internal scratch']
  %s0 = inlined_call_operand.vmem [shape: f32[512,200], index: 0, kind: input, shape index: {}]
  %s1 = inlined_call_operand.vmem [shape: f32[512,16], index: 1, kind: input, shape index: {}]
  %s2 = inlined_call_operand.vmem [shape: bf16[200,128], index: 2, kind: input, shape index: {}]
  %s3 = inlined_call_operand.vmem [shape: f32[1,128], index: 3, kind: input, shape index: {}]
  %s4 = inlined_call_operand.vmem [shape: bf16[128,128], index: 4, kind: input, shape index: {}]
  %s5 = inlined_call_operand.vmem [shape: f32[1,128], index: 5, kind: input, shape index: {}]
  %s6 = inlined_call_operand.vmem [shape: bf16[128,256], index: 6, kind: input, shape index: {}]
  %s7 = inlined_call_operand.vmem [shape: f32[1,256], index: 7, kind: input, shape index: {}]
  %s8 = inlined_call_operand.vmem [shape: bf16[16,128], index: 8, kind: input, shape index: {}]
  %s9 = inlined_call_operand.vmem [shape: f32[1,128], index: 9, kind: input, shape index: {}]
  %s10 = inlined_call_operand.vmem [shape: bf16[128,128], index: 10, kind: input, shape index: {}]
  %s11 = inlined_call_operand.vmem [shape: f32[1,128], index: 11, kind: input, shape index: {}]
  %s12 = inlined_call_operand.vmem [shape: bf16[128,256], index: 12, kind: input, shape index: {}]
  %s13 = inlined_call_operand.vmem [shape: f32[1,256], index: 13, kind: input, shape index: {}]
  %s14 = inlined_call_operand.hbm [shape: bf16[512,256], index: 14, kind: output, shape index: {0}]
  %s15 = inlined_call_operand.hbm [shape: bf16[512,256], index: 15, kind: output, shape index: {1}]
  %16 = xla_tuple %s14, %s15
  %s17 = sld [smem:[#allocation0]]
  $region97: #{tpu_custom_call.1} parent=0
    _
  %s19 = ssub.s32 1, %s17
  %s20 = scalar_select 0, %s19, %s17
  $region1: #{tpu_custom_call.1} parent=0
    #allocation2 [shape = 'u8[262144]{0}', space=vmem, size = 0x40000, scoped, tag = 'output window, operand 0']
    #allocation3 [shape = 's32[2]{0}', space=sflag, size = 0x8, scoped, tag = 'scoped memory for tpu_custom_call.1']
    #allocation4 [shape = 'u8[262144]{0}', space=vmem, size = 0x40000, scoped, tag = 'output window, operand 1']
    #allocation5 [shape = 's32[2]{0}', space=sflag, size = 0x8, scoped, tag = 'scoped memory for tpu_custom_call.1']
    %21 = vsyncpa [#allocation3], 0
    %s22 = scalar_lea.sflag [#allocation3], 1
    %23 = vsyncpa %s22, 0
    %24 = vsyncpa [#allocation5], 0
    %s25 = scalar_lea.sflag [#allocation5], 1
    %26 = vsyncpa %s25, 0
    loop: start=0, step=1, limit=4
    $region2: #{tpu_custom_call.1} parent=1 // loop_pre_header
      _
    $region3: #{tpu_custom_call.1} parent=1 // loop_header
      %s28 = sphi 0, %s32
      %p29 = scmp.ge.s32.totalorder %s28, 4
      %s38 = sphi 0, %s40
      %s41 = sphi 0, %s38
      %s42 = sphi 0, %s41
      %s58 = sphi 0, %s42
      %s64 = sphi 0, %s66
      %s67 = sphi 0, %s64
      %s68 = sphi 0, %s67
      %s84 = sphi 0, %s68
      %s88 = sphi 0, %s88
      %s90 = sphi 0, %s88
      %s91 = sphi 0, %s90
      %s105 = sphi 0, %s91
      %s109 = sphi 0, %s109
      %s111 = sphi 0, %s109
      %s112 = sphi 0, %s111
      %s126 = sphi 0, %s112
      %s130 = sphi 0, %s130
      %s132 = sphi 0, %s130
      %s133 = sphi 0, %s132
      %s147 = sphi 0, %s133
      %s151 = sphi 0, %s151
      %s153 = sphi 0, %s151
      %s154 = sphi 0, %s153
      %s168 = sphi 0, %s154
      %s172 = sphi 0, %s172
      %s174 = sphi 0, %s172
      %s175 = sphi 0, %s174
      %s189 = sphi 0, %s175
      %s193 = sphi 0, %s193
      %s195 = sphi 0, %s193
      %s196 = sphi 0, %s195
      %s210 = sphi 0, %s196
      %s214 = sphi 0, %s214
      %s216 = sphi 0, %s214
      %s217 = sphi 0, %s216
      %s231 = sphi 0, %s217
      %s235 = sphi 0, %s235
      %s237 = sphi 0, %s235
      %s238 = sphi 0, %s237
      %s252 = sphi 0, %s238
      %s256 = sphi 0, %s256
      %s258 = sphi 0, %s256
      %s259 = sphi 0, %s258
      %s273 = sphi 0, %s259
      %s277 = sphi 0, %s277
      %s279 = sphi 0, %s277
      %s280 = sphi 0, %s279
      %s294 = sphi 0, %s280
      %s298 = sphi 0, %s298
      %s300 = sphi 0, %s298
      %s301 = sphi 0, %s300
      %s315 = sphi 0, %s301
      %s319 = sphi 0, %s319
      %s321 = sphi 0, %s319
      %s322 = sphi 0, %s321
      %s336 = sphi 0, %s322
      %s342 = sphi 0, %s344
      %s345 = sphi 0, %s342
      %s346 = sphi 0, %s345
      %s362 = sphi 0, %s346
      %s368 = sphi 0, %s370
      %s371 = sphi 0, %s368
      %s372 = sphi 0, %s371
      %s388 = sphi 0, %s372
    $region4: #{tpu_custom_call.1} parent=1 // loop_header_branch
      %31 = sbr.rel (%p29) target = $region8
    $region5: #{tpu_custom_call.1} parent=1 // loop_body
      %s33 = ssub.s32 %s28, 1
      %s34 = ssub.s32 %s28, 2
      %s35 = sadd.s32 %s28, 1
      %s36 = ssub.s32 %s28, %s35
      %p37 = scmp.eq.s32.totalorder %s36, 0
      %s39 = sadd.s32 %s38, 1
      %s40 = scalar_select %p37, %s38, %s39
      %p43 = pneg %p37
      %p44 = scmp.eq.s32.totalorder %s28, 1
      %p45 = por %p43, %p44
      %p46 = scmp.ne.s32.totalorder %s38, %s41
      %p47 = scmp.eq.s32.totalorder %s28, 0
      %p48 = por %p46, %p47
      %p49 = scmp.ne.s32.totalorder %s38, %s41
      %p50 = scmp.eq.s32.totalorder %s33, 1
      %p51 = por %p49, %p50
      %p52 = scmp.ne.s32.totalorder %s41, %s42
      %p53 = scmp.eq.s32.totalorder %s33, 0
      %p54 = por %p52, %p53
      %p55 = scmp.ne.s32.totalorder %s41, %s42
      %p56 = scmp.eq.s32.totalorder %s34, 1
      %p57 = por %p55, %p56
      %p59 = scmp.ne.s32.totalorder %s42, %s58
      %p60 = scmp.eq.s32.totalorder %s34, 0
      %p61 = por %p59, %p60
      %s62 = ssub.s32 %s28, %s35
      %p63 = scmp.eq.s32.totalorder %s62, 0
      %s65 = sadd.s32 %s64, 1
      %s66 = scalar_select %p63, %s64, %s65
      %p69 = pneg %p63
      %p70 = scmp.eq.s32.totalorder %s28, 1
      %p71 = por %p69, %p70
      %p72 = scmp.ne.s32.totalorder %s64, %s67
      %p73 = scmp.eq.s32.totalorder %s28, 0
      %p74 = por %p72, %p73
      %p75 = scmp.ne.s32.totalorder %s64, %s67
      %p76 = scmp.eq.s32.totalorder %s33, 1
      %p77 = por %p75, %p76
      %p78 = scmp.ne.s32.totalorder %s67, %s68
      %p79 = scmp.eq.s32.totalorder %s33, 0
      %p80 = por %p78, %p79
      %p81 = scmp.ne.s32.totalorder %s67, %s68
      %p82 = scmp.eq.s32.totalorder %s34, 1
      %p83 = por %p81, %p82
      %p85 = scmp.ne.s32.totalorder %s68, %s84
      %p86 = scmp.eq.s32.totalorder %s34, 0
      %p87 = por %p85, %p86
      %s89 = sadd.s32 %s88, 1
      %p92 = scmp.eq.s32.totalorder %s28, 1
      %p93 = scmp.ne.s32.totalorder %s88, %s90
      %p94 = scmp.eq.s32.totalorder %s28, 0
      %p95 = por %p93, %p94
      %p96 = scmp.ne.s32.totalorder %s88, %s90
      %p97 = scmp.eq.s32.totalorder %s33, 1
      %p98 = por %p96, %p97
      %p99 = scmp.ne.s32.totalorder %s90, %s91
      %p100 = scmp.eq.s32.totalorder %s33, 0
      %p101 = por %p99, %p100
      %p102 = scmp.ne.s32.totalorder %s90, %s91
      %p103 = scmp.eq.s32.totalorder %s34, 1
      %p104 = por %p102, %p103
      %p106 = scmp.ne.s32.totalorder %s91, %s105
      %p107 = scmp.eq.s32.totalorder %s34, 0
      %p108 = por %p106, %p107
      %s110 = sadd.s32 %s109, 1
      %p113 = scmp.eq.s32.totalorder %s28, 1
      %p114 = scmp.ne.s32.totalorder %s109, %s111
      %p115 = scmp.eq.s32.totalorder %s28, 0
      %p116 = por %p114, %p115
      %p117 = scmp.ne.s32.totalorder %s109, %s111
      %p118 = scmp.eq.s32.totalorder %s33, 1
      %p119 = por %p117, %p118
      %p120 = scmp.ne.s32.totalorder %s111, %s112
      %p121 = scmp.eq.s32.totalorder %s33, 0
      %p122 = por %p120, %p121
      %p123 = scmp.ne.s32.totalorder %s111, %s112
      %p124 = scmp.eq.s32.totalorder %s34, 1
      %p125 = por %p123, %p124
      %p127 = scmp.ne.s32.totalorder %s112, %s126
      %p128 = scmp.eq.s32.totalorder %s34, 0
      %p129 = por %p127, %p128
      %s131 = sadd.s32 %s130, 1
      %p134 = scmp.eq.s32.totalorder %s28, 1
      %p135 = scmp.ne.s32.totalorder %s130, %s132
      %p136 = scmp.eq.s32.totalorder %s28, 0
      %p137 = por %p135, %p136
      %p138 = scmp.ne.s32.totalorder %s130, %s132
      %p139 = scmp.eq.s32.totalorder %s33, 1
      %p140 = por %p138, %p139
      %p141 = scmp.ne.s32.totalorder %s132, %s133
      %p142 = scmp.eq.s32.totalorder %s33, 0
      %p143 = por %p141, %p142
      %p144 = scmp.ne.s32.totalorder %s132, %s133
      %p145 = scmp.eq.s32.totalorder %s34, 1
      %p146 = por %p144, %p145
      %p148 = scmp.ne.s32.totalorder %s133, %s147
      %p149 = scmp.eq.s32.totalorder %s34, 0
      %p150 = por %p148, %p149
      %s152 = sadd.s32 %s151, 1
      %p155 = scmp.eq.s32.totalorder %s28, 1
      %p156 = scmp.ne.s32.totalorder %s151, %s153
      %p157 = scmp.eq.s32.totalorder %s28, 0
      %p158 = por %p156, %p157
      %p159 = scmp.ne.s32.totalorder %s151, %s153
      %p160 = scmp.eq.s32.totalorder %s33, 1
      %p161 = por %p159, %p160
      %p162 = scmp.ne.s32.totalorder %s153, %s154
      %p163 = scmp.eq.s32.totalorder %s33, 0
      %p164 = por %p162, %p163
      %p165 = scmp.ne.s32.totalorder %s153, %s154
      %p166 = scmp.eq.s32.totalorder %s34, 1
      %p167 = por %p165, %p166
      %p169 = scmp.ne.s32.totalorder %s154, %s168
      %p170 = scmp.eq.s32.totalorder %s34, 0
      %p171 = por %p169, %p170
      %s173 = sadd.s32 %s172, 1
      %p176 = scmp.eq.s32.totalorder %s28, 1
      %p177 = scmp.ne.s32.totalorder %s172, %s174
      %p178 = scmp.eq.s32.totalorder %s28, 0
      %p179 = por %p177, %p178
      %p180 = scmp.ne.s32.totalorder %s172, %s174
      %p181 = scmp.eq.s32.totalorder %s33, 1
      %p182 = por %p180, %p181
      %p183 = scmp.ne.s32.totalorder %s174, %s175
      %p184 = scmp.eq.s32.totalorder %s33, 0
      %p185 = por %p183, %p184
      %p186 = scmp.ne.s32.totalorder %s174, %s175
      %p187 = scmp.eq.s32.totalorder %s34, 1
      %p188 = por %p186, %p187
      %p190 = scmp.ne.s32.totalorder %s175, %s189
      %p191 = scmp.eq.s32.totalorder %s34, 0
      %p192 = por %p190, %p191
      %s194 = sadd.s32 %s193, 1
      %p197 = scmp.eq.s32.totalorder %s28, 1
      %p198 = scmp.ne.s32.totalorder %s193, %s195
      %p199 = scmp.eq.s32.totalorder %s28, 0
      %p200 = por %p198, %p199
      %p201 = scmp.ne.s32.totalorder %s193, %s195
      %p202 = scmp.eq.s32.totalorder %s33, 1
      %p203 = por %p201, %p202
      %p204 = scmp.ne.s32.totalorder %s195, %s196
      %p205 = scmp.eq.s32.totalorder %s33, 0
      %p206 = por %p204, %p205
      %p207 = scmp.ne.s32.totalorder %s195, %s196
      %p208 = scmp.eq.s32.totalorder %s34, 1
      %p209 = por %p207, %p208
      %p211 = scmp.ne.s32.totalorder %s196, %s210
      %p212 = scmp.eq.s32.totalorder %s34, 0
      %p213 = por %p211, %p212
      %s215 = sadd.s32 %s214, 1
      %p218 = scmp.eq.s32.totalorder %s28, 1
      %p219 = scmp.ne.s32.totalorder %s214, %s216
      %p220 = scmp.eq.s32.totalorder %s28, 0
      %p221 = por %p219, %p220
      %p222 = scmp.ne.s32.totalorder %s214, %s216
      %p223 = scmp.eq.s32.totalorder %s33, 1
      %p224 = por %p222, %p223
      %p225 = scmp.ne.s32.totalorder %s216, %s217
      %p226 = scmp.eq.s32.totalorder %s33, 0
      %p227 = por %p225, %p226
      %p228 = scmp.ne.s32.totalorder %s216, %s217
      %p229 = scmp.eq.s32.totalorder %s34, 1
      %p230 = por %p228, %p229
      %p232 = scmp.ne.s32.totalorder %s217, %s231
      %p233 = scmp.eq.s32.totalorder %s34, 0
      %p234 = por %p232, %p233
      %s236 = sadd.s32 %s235, 1
      %p239 = scmp.eq.s32.totalorder %s28, 1
      %p240 = scmp.ne.s32.totalorder %s235, %s237
      %p241 = scmp.eq.s32.totalorder %s28, 0
      %p242 = por %p240, %p241
      %p243 = scmp.ne.s32.totalorder %s235, %s237
      %p244 = scmp.eq.s32.totalorder %s33, 1
      %p245 = por %p243, %p244
      %p246 = scmp.ne.s32.totalorder %s237, %s238
      %p247 = scmp.eq.s32.totalorder %s33, 0
      %p248 = por %p246, %p247
      %p249 = scmp.ne.s32.totalorder %s237, %s238
      %p250 = scmp.eq.s32.totalorder %s34, 1
      %p251 = por %p249, %p250
      %p253 = scmp.ne.s32.totalorder %s238, %s252
      %p254 = scmp.eq.s32.totalorder %s34, 0
      %p255 = por %p253, %p254
      %s257 = sadd.s32 %s256, 1
      %p260 = scmp.eq.s32.totalorder %s28, 1
      %p261 = scmp.ne.s32.totalorder %s256, %s258
      %p262 = scmp.eq.s32.totalorder %s28, 0
      %p263 = por %p261, %p262
      %p264 = scmp.ne.s32.totalorder %s256, %s258
      %p265 = scmp.eq.s32.totalorder %s33, 1
      %p266 = por %p264, %p265
      %p267 = scmp.ne.s32.totalorder %s258, %s259
      %p268 = scmp.eq.s32.totalorder %s33, 0
      %p269 = por %p267, %p268
      %p270 = scmp.ne.s32.totalorder %s258, %s259
      %p271 = scmp.eq.s32.totalorder %s34, 1
      %p272 = por %p270, %p271
      %p274 = scmp.ne.s32.totalorder %s259, %s273
      %p275 = scmp.eq.s32.totalorder %s34, 0
      %p276 = por %p274, %p275
      %s278 = sadd.s32 %s277, 1
      %p281 = scmp.eq.s32.totalorder %s28, 1
      %p282 = scmp.ne.s32.totalorder %s277, %s279
      %p283 = scmp.eq.s32.totalorder %s28, 0
      %p284 = por %p282, %p283
      %p285 = scmp.ne.s32.totalorder %s277, %s279
      %p286 = scmp.eq.s32.totalorder %s33, 1
      %p287 = por %p285, %p286
      %p288 = scmp.ne.s32.totalorder %s279, %s280
      %p289 = scmp.eq.s32.totalorder %s33, 0
      %p290 = por %p288, %p289
      %p291 = scmp.ne.s32.totalorder %s279, %s280
      %p292 = scmp.eq.s32.totalorder %s34, 1
      %p293 = por %p291, %p292
      %p295 = scmp.ne.s32.totalorder %s280, %s294
      %p296 = scmp.eq.s32.totalorder %s34, 0
      %p297 = por %p295, %p296
      %s299 = sadd.s32 %s298, 1
      %p302 = scmp.eq.s32.totalorder %s28, 1
      %p303 = scmp.ne.s32.totalorder %s298, %s300
      %p304 = scmp.eq.s32.totalorder %s28, 0
      %p305 = por %p303, %p304
      %p306 = scmp.ne.s32.totalorder %s298, %s300
      %p307 = scmp.eq.s32.totalorder %s33, 1
      %p308 = por %p306, %p307
      %p309 = scmp.ne.s32.totalorder %s300, %s301
      %p310 = scmp.eq.s32.totalorder %s33, 0
      %p311 = por %p309, %p310
      %p312 = scmp.ne.s32.totalorder %s300, %s301
      %p313 = scmp.eq.s32.totalorder %s34, 1
      %p314 = por %p312, %p313
      %p316 = scmp.ne.s32.totalorder %s301, %s315
      %p317 = scmp.eq.s32.totalorder %s34, 0
      %p318 = por %p316, %p317
      %s320 = sadd.s32 %s319, 1
      %p323 = scmp.eq.s32.totalorder %s28, 1
      %p324 = scmp.ne.s32.totalorder %s319, %s321
      %p325 = scmp.eq.s32.totalorder %s28, 0
      %p326 = por %p324, %p325
      %p327 = scmp.ne.s32.totalorder %s319, %s321
      %p328 = scmp.eq.s32.totalorder %s33, 1
      %p329 = por %p327, %p328
      %p330 = scmp.ne.s32.totalorder %s321, %s322
      %p331 = scmp.eq.s32.totalorder %s33, 0
      %p332 = por %p330, %p331
      %p333 = scmp.ne.s32.totalorder %s321, %s322
      %p334 = scmp.eq.s32.totalorder %s34, 1
      %p335 = por %p333, %p334
      %p337 = scmp.ne.s32.totalorder %s322, %s336
      %p338 = scmp.eq.s32.totalorder %s34, 0
      %p339 = por %p337, %p338
      %s340 = ssub.s32 %s28, %s35
      %p341 = scmp.eq.s32.totalorder %s340, 0
      %s343 = sadd.s32 %s342, 1
      %s344 = scalar_select %p341, %s342, %s343
      %p347 = pneg %p341
      %p348 = scmp.eq.s32.totalorder %s28, 1
      %p349 = por %p347, %p348
      %p350 = scmp.ne.s32.totalorder %s342, %s345
      %p351 = scmp.eq.s32.totalorder %s28, 0
      %p352 = por %p350, %p351
      %p353 = scmp.ne.s32.totalorder %s342, %s345
      %p354 = scmp.eq.s32.totalorder %s33, 1
      %p355 = por %p353, %p354
      %p356 = scmp.ne.s32.totalorder %s345, %s346
      %p357 = scmp.eq.s32.totalorder %s33, 0
      %p358 = por %p356, %p357
      %p359 = scmp.ne.s32.totalorder %s345, %s346
      %p360 = scmp.eq.s32.totalorder %s34, 1
      %p361 = por %p359, %p360
      %p363 = scmp.ne.s32.totalorder %s346, %s362
      %p364 = scmp.eq.s32.totalorder %s34, 0
      %p365 = por %p363, %p364
      %s366 = ssub.s32 %s28, %s35
      %p367 = scmp.eq.s32.totalorder %s366, 0
      %s369 = sadd.s32 %s368, 1
      %s370 = scalar_select %p367, %s368, %s369
      %p373 = pneg %p367
      %p374 = scmp.eq.s32.totalorder %s28, 1
      %p375 = por %p373, %p374
      %p376 = scmp.ne.s32.totalorder %s368, %s371
      %p377 = scmp.eq.s32.totalorder %s28, 0
      %p378 = por %p376, %p377
      %p379 = scmp.ne.s32.totalorder %s368, %s371
      %p380 = scmp.eq.s32.totalorder %s33, 1
      %p381 = por %p379, %p380
      %p382 = scmp.ne.s32.totalorder %s371, %s372
      %p383 = scmp.eq.s32.totalorder %s33, 0
      %p384 = por %p382, %p383
      %p385 = scmp.ne.s32.totalorder %s371, %s372
      %p386 = scmp.eq.s32.totalorder %s34, 1
      %p387 = por %p385, %p386
      %p389 = scmp.ne.s32.totalorder %s372, %s388
      %p390 = scmp.eq.s32.totalorder %s34, 0
      %p391 = por %p389, %p390
      %p392 = scmp.le.s32.totalorder 1, %s28
      %p393 = scmp.lt.s32.totalorder %s28, 3
      %p394 = pnand %p392, %p393
      %p395 = pneg %p394
      // Predicated region
      $region9: #{tpu_custom_call.1} parent=5 // pred_check
        _
      $region10: #{tpu_custom_call.1} parent=5 // pred_check_branch
        %397 = sbr.rel (%p394) target = $region12
      $region11: #{tpu_custom_call.1} parent=5 // pred_region
        %s398 = ssub.s32 %s28, 1
        // Predicated region
        $region13: #{tpu_custom_call.1} parent=11 // pred_check
          %p399 = pneg %p101
        $region14: #{tpu_custom_call.1} parent=11 // pred_check_branch
          %401 = sbr.rel (%p399) target = $region16
        $region15: #{tpu_custom_call.1} parent=11 // pred_region
          _
        $region16: #{tpu_custom_call.1} parent=11 // pred_fallthru
          _
        // Predicated region
        $region17: #{tpu_custom_call.1} parent=11 // pred_check
          %p402 = pneg %p122
        $region18: #{tpu_custom_call.1} parent=11 // pred_check_branch
          %404 = sbr.rel (%p402) target = $region20
        $region19: #{tpu_custom_call.1} parent=11 // pred_region
          _
        $region20: #{tpu_custom_call.1} parent=11 // pred_fallthru
          _
        // Predicated region
        $region21: #{tpu_custom_call.1} parent=11 // pred_check
          %p405 = pneg %p143
        $region22: #{tpu_custom_call.1} parent=11 // pred_check_branch
          %407 = sbr.rel (%p405) target = $region24
        $region23: #{tpu_custom_call.1} parent=11 // pred_region
          _
        $region24: #{tpu_custom_call.1} parent=11 // pred_fallthru
          _
        // Predicated region
        $region25: #{tpu_custom_call.1} parent=11 // pred_check
          %p408 = pneg %p164
        $region26: #{tpu_custom_call.1} parent=11 // pred_check_branch
          %410 = sbr.rel (%p408) target = $region28
        $region27: #{tpu_custom_call.1} parent=11 // pred_region
          _
        $region28: #{tpu_custom_call.1} parent=11 // pred_fallthru
          _
        // Predicated region
        $region29: #{tpu_custom_call.1} parent=11 // pred_check
          %p411 = pneg %p185
        $region30: #{tpu_custom_call.1} parent=11 // pred_check_branch
          %413 = sbr.rel (%p411) target = $region32
        $region31: #{tpu_custom_call.1} parent=11 // pred_region
          _
        $region32: #{tpu_custom_call.1} parent=11 // pred_fallthru
          _
        // Predicated region
        $region33: #{tpu_custom_call.1} parent=11 // pred_check
          %p414 = pneg %p206
        $region34: #{tpu_custom_call.1} parent=11 // pred_check_branch
          %416 = sbr.rel (%p414) target = $region36
        $region35: #{tpu_custom_call.1} parent=11 // pred_region
          _
        $region36: #{tpu_custom_call.1} parent=11 // pred_fallthru
          _
        // Predicated region
        $region37: #{tpu_custom_call.1} parent=11 // pred_check
          %p417 = pneg %p227
        $region38: #{tpu_custom_call.1} parent=11 // pred_check_branch
          %419 = sbr.rel (%p417) target = $region40
        $region39: #{tpu_custom_call.1} parent=11 // pred_region
          _
        $region40: #{tpu_custom_call.1} parent=11 // pred_fallthru
          _
        // Predicated region
        $region41: #{tpu_custom_call.1} parent=11 // pred_check
          %p420 = pneg %p248
        $region42: #{tpu_custom_call.1} parent=11 // pred_check_branch
          %422 = sbr.rel (%p420) target = $region44
        $region43: #{tpu_custom_call.1} parent=11 // pred_region
          _
        $region44: #{tpu_custom_call.1} parent=11 // pred_fallthru
          _
        // Predicated region
        $region45: #{tpu_custom_call.1} parent=11 // pred_check
          %p423 = pneg %p269
        $region46: #{tpu_custom_call.1} parent=11 // pred_check_branch
          %425 = sbr.rel (%p423) target = $region48
        $region47: #{tpu_custom_call.1} parent=11 // pred_region
          _
        $region48: #{tpu_custom_call.1} parent=11 // pred_fallthru
          _
        // Predicated region
        $region49: #{tpu_custom_call.1} parent=11 // pred_check
          %p426 = pneg %p290
        $region50: #{tpu_custom_call.1} parent=11 // pred_check_branch
          %428 = sbr.rel (%p426) target = $region52
        $region51: #{tpu_custom_call.1} parent=11 // pred_region
          _
        $region52: #{tpu_custom_call.1} parent=11 // pred_fallthru
          _
        // Predicated region
        $region53: #{tpu_custom_call.1} parent=11 // pred_check
          %p429 = pneg %p311
        $region54: #{tpu_custom_call.1} parent=11 // pred_check_branch
          %431 = sbr.rel (%p429) target = $region56
        $region55: #{tpu_custom_call.1} parent=11 // pred_region
          _
        $region56: #{tpu_custom_call.1} parent=11 // pred_fallthru
          _
        // Predicated region
        $region57: #{tpu_custom_call.1} parent=11 // pred_check
          %p432 = pneg %p332
        $region58: #{tpu_custom_call.1} parent=11 // pred_check_branch
          %434 = sbr.rel (%p432) target = $region60
        $region59: #{tpu_custom_call.1} parent=11 // pred_region
          _
        $region60: #{tpu_custom_call.1} parent=11 // pred_fallthru
          _
      $region12: #{tpu_custom_call.1} parent=5 // pred_fallthru
        _
      %p435 = scmp.lt.s32.totalorder %s28, 2
      // Predicated region
      $region61: #{tpu_custom_call.1} parent=5 // pred_check
        %p436 = pneg %p435
      $region62: #{tpu_custom_call.1} parent=5 // pred_check_branch
        %438 = sbr.rel (%p436) target = $region64
      $region63: #{tpu_custom_call.1} parent=5 // pred_region
        // Predicated region
        $region65: #{tpu_custom_call.1} parent=63 // pred_check
          %p439 = pneg %p48
        $region66: #{tpu_custom_call.1} parent=63 // pred_check_branch
          %441 = sbr.rel (%p439) target = $region68
        $region67: #{tpu_custom_call.1} parent=63 // pred_region
          %s442 = smul.u32 32, %s28
          %p443 = scmp.lt.s32.totalorder %s442, 63
          %s444 = scalar_select %p443, %s442, 63
          %s445 = smul.addr %s444, 2
          %s446 = smul.addr %s445, 8
          %s447 = scalar_lea.vmem %s0, %s446
          %s448 = smul.u32 32, %s28
        $region68: #{tpu_custom_call.1} parent=63 // pred_fallthru
          _
        // Predicated region
        $region69: #{tpu_custom_call.1} parent=63 // pred_check
          %p449 = pneg %p74
        $region70: #{tpu_custom_call.1} parent=63 // pred_check_branch
          %451 = sbr.rel (%p449) target = $region72
        $region71: #{tpu_custom_call.1} parent=63 // pred_region
          %s452 = smul.u32 32, %s28
          %p453 = scmp.lt.s32.totalorder %s452, 63
          %s454 = scalar_select %p453, %s452, 63
          %s455 = smul.addr %s454, 8
          %s456 = scalar_lea.vmem %s1, %s455
          %s457 = smul.u32 32, %s28
        $region72: #{tpu_custom_call.1} parent=63 // pred_fallthru
          _
      $region64: #{tpu_custom_call.1} parent=5 // pred_fallthru
        _
      %p458 = scmp.le.s32.totalorder 1, %s28
      %p459 = scmp.lt.s32.totalorder %s28, 3
      %p460 = pnand %p458, %p459
      %p461 = pneg %p460
      // Predicated region
      $region73: #{tpu_custom_call.1} parent=5 // pred_check
        _
      $region74: #{tpu_custom_call.1} parent=5 // pred_check_branch
        %463 = sbr.rel (%p460) target = $region76
      $region75: #{tpu_custom_call.1} parent=5 // pred_region
        %s464 = ssub.s32 %s28, 1
        %s465 = smul.u32 32, %s33
        %p466 = scmp.lt.s32.totalorder %s465, 63
        %s467 = scalar_select %p466, %s465, 63
        %s468 = smul.addr %s467, 2
        %s469 = smul.addr %s468, 8
        %s470 = scalar_lea.vmem %s0, %s469
        %p471 = pneg %p54
        %p472 = pneg %p51
        %s473 = smul.u32 32, %s33
        %p474 = scmp.lt.s32.totalorder %s473, 63
        %s475 = scalar_select %p474, %s473, 63
        %s476 = smul.addr %s475, 8
        %s477 = scalar_lea.vmem %s1, %s476
        %p478 = pneg %p80
        %p479 = pneg %p77
        %p480 = pneg %p101
        %p481 = pneg %p98
        %p482 = pneg %p122
        %p483 = pneg %p119
        %p484 = pneg %p143
        %p485 = pneg %p140
        %p486 = pneg %p164
        %p487 = pneg %p161
        %p488 = pneg %p185
        %p489 = pneg %p182
        %p490 = pneg %p206
        %p491 = pneg %p203
        %p492 = pneg %p227
        %p493 = pneg %p224
        %p494 = pneg %p248
        %p495 = pneg %p245
        %p496 = pneg %p269
        %p497 = pneg %p266
        %p498 = pneg %p290
        %p499 = pneg %p287
        %p500 = pneg %p311
        %p501 = pneg %p308
        %p502 = pneg %p332
        %p503 = pneg %p329
        %p504 = pneg %p358
        %p505 = pneg %p355
        %s506 = sand.u32 %s345, 1
        %s507 = scalar_lea.sflag [#allocation3], %s506
        %s508 = sand.u32 %s345, 1
        %s509 = smul.addr %s508, 256
        %s510 = scalar_lea.vmem [#allocation2], %s509
        %p511 = pneg %p384
        %p512 = pneg %p381
        %s513 = sand.u32 %s371, 1
        %s514 = scalar_lea.sflag [#allocation5], %s513
        %s515 = sand.u32 %s371, 1
        %s516 = smul.addr %s515, 256
        %s517 = scalar_lea.vmem [#allocation4], %s516
        %s518 = smul.u32 32, %s33
        %p519 = scmp.lt.s32.totalorder %s518, 63
        %s520 = scalar_select %p519, %s518, 63
        %s521 = smul.addr %s520, 2
        %s522 = smul.addr %s521, 8
        %s523 = scalar_lea.vmem %s0, %s522
        %s524 = smul.u32 32, %s33
        %s525 = smul.u32 32, %s33
        %p526 = scmp.lt.s32.totalorder %s525, 63
        %s527 = scalar_select %p526, %s525, 63
        %s528 = smul.addr %s527, 8
        %s529 = scalar_lea.vmem %s1, %s528
        %s530 = smul.u32 32, %s33
        %s531 = smul.u32 32, %s33
        %s532 = smul.u32 32, %s33
        %v534 = vld [vmem:[%s523] sm:$0xff]
        %v535 = vld [vmem:[%s523 + $0x8] sm:$0xff]
        %v536 = vld [vmem:[%s523 + $0x10] sm:$0xff]
        %v537 = vld [vmem:[%s523 + $0x18] sm:$0xff]
        %v538 = vld [vmem:[%s523 + $0x20] sm:$0xff]
        %v539 = vld [vmem:[%s523 + $0x28] sm:$0xff]
        %v540 = vld [vmem:[%s523 + $0x30] sm:$0xff]
        %v541 = vld [vmem:[%s523 + $0x38] sm:$0xff]
        %v542 = vld [vmem:[%s523 + $0x40] sm:$0xff]
        %v543 = vld [vmem:[%s523 + $0x48] sm:$0xff]
        %v544 = vld [vmem:[%s523 + $0x50] sm:$0xff]
        %v545 = vld [vmem:[%s523 + $0x58] sm:$0xff]
        %v546 = vld [vmem:[%s523 + $0x60] sm:$0xff]
        %v547 = vld [vmem:[%s523 + $0x68] sm:$0xff]
        %v548 = vld [vmem:[%s523 + $0x70] sm:$0xff]
        %v549 = vld [vmem:[%s523 + $0x78] sm:$0xff]
        %v550 = vld [vmem:[%s523 + $0x80] sm:$0xff]
        %v551 = vld [vmem:[%s523 + $0x88] sm:$0xff]
        %v552 = vld [vmem:[%s523 + $0x90] sm:$0xff]
        %v553 = vld [vmem:[%s523 + $0x98] sm:$0xff]
        %v554 = vld [vmem:[%s523 + $0xa0] sm:$0xff]
        %v555 = vld [vmem:[%s523 + $0xa8] sm:$0xff]
        %v556 = vld [vmem:[%s523 + $0xb0] sm:$0xff]
        %v557 = vld [vmem:[%s523 + $0xb8] sm:$0xff]
        %v558 = vld [vmem:[%s523 + $0xc0] sm:$0xff]
        %v559 = vld [vmem:[%s523 + $0xc8] sm:$0xff]
        %v560 = vld [vmem:[%s523 + $0xd0] sm:$0xff]
        %v561 = vld [vmem:[%s523 + $0xd8] sm:$0xff]
        %v562 = vld [vmem:[%s523 + $0xe0] sm:$0xff]
        %v563 = vld [vmem:[%s523 + $0xe8] sm:$0xff]
        %v564 = vld [vmem:[%s523 + $0xf0] sm:$0xff]
        %v565 = vld [vmem:[%s523 + $0xf8] sm:$0xff]
        %v566 = vld [vmem:[%s523 + $0x100] sm:$0xff]
        %v567 = vld [vmem:[%s523 + $0x108] sm:$0xff]
        %v568 = vld [vmem:[%s523 + $0x110] sm:$0xff]
        %v569 = vld [vmem:[%s523 + $0x118] sm:$0xff]
        %v570 = vld [vmem:[%s523 + $0x120] sm:$0xff]
        %v571 = vld [vmem:[%s523 + $0x128] sm:$0xff]
        %v572 = vld [vmem:[%s523 + $0x130] sm:$0xff]
        %v573 = vld [vmem:[%s523 + $0x138] sm:$0xff]
        %v574 = vld [vmem:[%s523 + $0x140] sm:$0xff]
        %v575 = vld [vmem:[%s523 + $0x148] sm:$0xff]
        %v576 = vld [vmem:[%s523 + $0x150] sm:$0xff]
        %v577 = vld [vmem:[%s523 + $0x158] sm:$0xff]
        %v578 = vld [vmem:[%s523 + $0x160] sm:$0xff]
        %v579 = vld [vmem:[%s523 + $0x168] sm:$0xff]
        %v580 = vld [vmem:[%s523 + $0x170] sm:$0xff]
        %v581 = vld [vmem:[%s523 + $0x178] sm:$0xff]
        %v582 = vld [vmem:[%s523 + $0x180] sm:$0xff]
        %v583 = vld [vmem:[%s523 + $0x188] sm:$0xff]
        %v584 = vld [vmem:[%s523 + $0x190] sm:$0xff]
        %v585 = vld [vmem:[%s523 + $0x198] sm:$0xff]
        %v586 = vld [vmem:[%s523 + $0x1a0] sm:$0xff]
        %v587 = vld [vmem:[%s523 + $0x1a8] sm:$0xff]
        %v588 = vld [vmem:[%s523 + $0x1b0] sm:$0xff]
        %v589 = vld [vmem:[%s523 + $0x1b8] sm:$0xff]
        %v590 = vld [vmem:[%s523 + $0x1c0] sm:$0xff]
        %v591 = vld [vmem:[%s523 + $0x1c8] sm:$0xff]
        %v592 = vld [vmem:[%s523 + $0x1d0] sm:$0xff]
        %v593 = vld [vmem:[%s523 + $0x1d8] sm:$0xff]
        %v594 = vld [vmem:[%s523 + $0x1e0] sm:$0xff]
        %v595 = vld [vmem:[%s523 + $0x1e8] sm:$0xff]
        %v596 = vld [vmem:[%s523 + $0x1f0] sm:$0xff]
        %v597 = vld [vmem:[%s523 + $0x1f8] sm:$0xff]
        %v598 = vpack.c.bf16 %v536, %v534
        %v599 = vpack.c.bf16 %v537, %v535
        %v600 = vpack.c.bf16 %v540, %v538
        %v601 = vpack.c.bf16 %v541, %v539
        %v602 = vpack.c.bf16 %v544, %v542
        %v603 = vpack.c.bf16 %v545, %v543
        %v604 = vpack.c.bf16 %v548, %v546
        %v605 = vpack.c.bf16 %v549, %v547
        %v606 = vpack.c.bf16 %v552, %v550
        %v607 = vpack.c.bf16 %v553, %v551
        %v608 = vpack.c.bf16 %v556, %v554
        %v609 = vpack.c.bf16 %v557, %v555
        %v610 = vpack.c.bf16 %v560, %v558
        %v611 = vpack.c.bf16 %v561, %v559
        %v612 = vpack.c.bf16 %v564, %v562
        %v613 = vpack.c.bf16 %v565, %v563
        %v614 = vpack.c.bf16 %v568, %v566
        %v615 = vpack.c.bf16 %v569, %v567
        %v616 = vpack.c.bf16 %v572, %v570
        %v617 = vpack.c.bf16 %v573, %v571
        %v618 = vpack.c.bf16 %v576, %v574
        %v619 = vpack.c.bf16 %v577, %v575
        %v620 = vpack.c.bf16 %v580, %v578
        %v621 = vpack.c.bf16 %v581, %v579
        %v622 = vpack.c.bf16 %v584, %v582
        %v623 = vpack.c.bf16 %v585, %v583
        %v624 = vpack.c.bf16 %v588, %v586
        %v625 = vpack.c.bf16 %v589, %v587
        %v626 = vpack.c.bf16 %v592, %v590
        %v627 = vpack.c.bf16 %v593, %v591
        %v628 = vpack.c.bf16 %v596, %v594
        %v629 = vpack.c.bf16 %v597, %v595
        %v630 = vld [vmem:[%s2] sm:$0xf]
        %v631 = vld [vmem:[%s2 + $0x4] sm:$0xf]
        %v632 = vld [vmem:[%s2 + $0x8] sm:$0xf]
        %v633 = vld [vmem:[%s2 + $0xc] sm:$0xf]
        %v634 = vld [vmem:[%s2 + $0x10] sm:$0xf]
        %v635 = vld [vmem:[%s2 + $0x14] sm:$0xf]
        %v636 = vld [vmem:[%s2 + $0x18] sm:$0xf]
        %v637 = vld [vmem:[%s2 + $0x1c] sm:$0xf]
        %v638 = vld [vmem:[%s2 + $0x20] sm:$0xf]
        %v639 = vld [vmem:[%s2 + $0x24] sm:$0xf]
        %v640 = vld [vmem:[%s2 + $0x28] sm:$0xf]
        %v641 = vld [vmem:[%s2 + $0x2c] sm:$0xf]
        %v642 = vld [vmem:[%s2 + $0x30] sm:$0xf]
        %v643 = vld [vmem:[%s2 + $0x34] sm:$0xf]
        %v644 = vld [vmem:[%s2 + $0x38] sm:$0xf]
        %v645 = vld [vmem:[%s2 + $0x3c] sm:$0xf]
        %v646 = vld [vmem:[%s2 + $0x40] sm:$0xf]
        %v647 = vld [vmem:[%s2 + $0x44] sm:$0xf]
        %v648 = vld [vmem:[%s2 + $0x48] sm:$0xf]
        %v649 = vld [vmem:[%s2 + $0x4c] sm:$0xf]
        %v650 = vld [vmem:[%s2 + $0x50] sm:$0xf]
        %v651 = vld [vmem:[%s2 + $0x54] sm:$0xf]
        %v652 = vld [vmem:[%s2 + $0x58] sm:$0xf]
        %v653 = vld [vmem:[%s2 + $0x5c] sm:$0xf]
        %v654 = vld [vmem:[%s2 + $0x60] sm:$0xf]
        %v655 = vld [vmem:[%s3] sm:$0x1]
        %v657 = vlaneseq
        %v658 = vshrl.u32 %v657, 7
        %v659 = vsub.s32 0, %v658
        %v660 = vrot.slane %v655, %v659
        %v687 = vunpack.c.l.b16 %v630
        %v688 = vunpack.c.l.b16 %v631
        %v689 = vunpack.c.l.b16 %v632
        %v690 = vunpack.c.l.b16 %v633
        %v691 = vunpack.c.l.b16 %v634
        %v692 = vunpack.c.l.b16 %v635
        %v693 = vunpack.c.l.b16 %v636
        %v694 = vunpack.c.l.b16 %v637
        %v695 = vunpack.c.l.b16 %v638
        %v696 = vunpack.c.l.b16 %v639
        %v697 = vunpack.c.l.b16 %v640
        %v698 = vunpack.c.l.b16 %v641
        %v699 = vunpack.c.l.b16 %v642
        %v700 = vunpack.c.l.b16 %v643
        %v701 = vunpack.c.l.b16 %v644
        %v702 = vunpack.c.l.b16 %v645
        %v703 = vunpack.c.l.b16 %v646
        %v704 = vunpack.c.l.b16 %v647
        %v705 = vunpack.c.l.b16 %v648
        %v706 = vunpack.c.l.b16 %v649
        %v707 = vunpack.c.l.b16 %v650
        %v708 = vunpack.c.l.b16 %v651
        %v709 = vunpack.c.l.b16 %v652
        %v710 = vunpack.c.l.b16 %v653
        %v711 = vunpack.c.l.b16 %v654
        %v712 = vpack.c.b16 %v688, %v687
        %v713 = vpack.c.b16 %v690, %v689
        %v714 = vpack.c.b16 %v692, %v691
        %v715 = vpack.c.b16 %v694, %v693
        %v716 = vpack.c.b16 %v696, %v695
        %v717 = vpack.c.b16 %v698, %v697
        %v718 = vpack.c.b16 %v700, %v699
        %v719 = vpack.c.b16 %v702, %v701
        %v720 = vpack.c.b16 %v704, %v703
        %v721 = vpack.c.b16 %v706, %v705
        %v722 = vpack.c.b16 %v708, %v707
        %v723 = vpack.c.b16 %v710, %v709
        %v724 = vpack.c.b16 %v711, %v711
        %vm737 = vcmask 588800
        %v739 = vsel %vm737, %v599, 0
        %v742 = vsel %vm737, %v601, 0
        %v745 = vsel %vm737, %v603, 0
        %v748 = vsel %vm737, %v605, 0
        %v751 = vsel %vm737, %v607, 0
        %v754 = vsel %vm737, %v609, 0
        %v757 = vsel %vm737, %v611, 0
        %v760 = vsel %vm737, %v613, 0
        %v763 = vsel %vm737, %v615, 0
        %v766 = vsel %vm737, %v617, 0
        %v769 = vsel %vm737, %v619, 0
        %v772 = vsel %vm737, %v621, 0
        %v775 = vsel %vm737, %v623, 0
        %v778 = vsel %vm737, %v625, 0
        %v781 = vsel %vm737, %v627, 0
        %v784 = vsel %vm737, %v629, 0
        %vm786 = vcmask 1043456
        %v788 = vsel %vm786, %v724, 0
        %790 = vmatprep.subr.bf16.mxu0 0
        %791 = vmatpush1.bf16.msra.mxu0 %v712
        %792 = vmatprep.subr.bf16.mxu0 0
        %793 = vmatpush1.bf16.msra.mxu0 %v713
        %794 = vmatprep.subr.bf16.mxu0 0
        %795 = vmatpush1.bf16.msra.mxu0 %v714
        %796 = vmatprep.subr.bf16.mxu0 0
        %797 = vmatpush1.bf16.msra.mxu0 %v715
        %798 = vmatprep.subr.bf16.mxu0 0
        %799 = vmatpush1.bf16.msra.mxu0 %v716
        %800 = vmatprep.subr.bf16.mxu0 0
        %801 = vmatpush1.bf16.msra.mxu0 %v717
        %802 = vmatprep.subr.bf16.mxu0 0
        %803 = vmatpush1.bf16.msra.mxu0 %v718
        %804 = vmatprep.subr.bf16.mxu0 0
        %805 = vmatpush1.bf16.msra.mxu0 %v719
        %806 = vmatprep.subr.bf16.mxu0 0
        %807 = vmatpush1.bf16.msra.mxu0 %v720
        %808 = vmatprep.subr.bf16.mxu0 0
        %809 = vmatpush1.bf16.msra.mxu0 %v721
        %810 = vmatprep.subr.bf16.mxu0 0
        %811 = vmatpush1.bf16.msra.mxu0 %v722
        %812 = vmatprep.subr.bf16.mxu0 0
        %813 = vmatpush1.bf16.msra.mxu0 %v723
        %814 = vmatprep.subr.bf16.mxu0 0
        %815 = vmatpush1.bf16.msra.mxu0 %v788
        %816 = vmatprep.subr.bf16.mxu0 0
        %817 = vmatpush1.bf16.msra.mxu0 0
        %818 = vmatprep.subr.bf16.mxu0 0
        %819 = vmatpush1.bf16.msra.mxu0 0
        %820 = vmatprep.subr.bf16.mxu0 0
        %821 = vmatpush1.bf16.msra.mxu0 0
        %822 = vmatprep.mubr.bf16.mxu0 %v739
        %823 = vmatmul.mubr.bf16.gmra.mrb[0].mxu0 %v598
        %v824 = vpop.f32.mrb[0].mxu0
        %v825 = vadd.f32 %v660, %v824
        %v826 = vpop.f32.mrb[0].mxu0
        %v827 = vpop.f32.mrb[0].mxu0
        %v828 = vadd.f32 %v660, %v827
        %v829 = vpop.f32.mrb[0].mxu0
        %830 = vmatprep.mubr.bf16.mxu0 %v742
        %831 = vmatmul.mubr.bf16.gmra.mrb[0].mxu0 %v600
        %v832 = vpop.f32.mrb[0].mxu0
        %v833 = vadd.f32 %v660, %v832
        %v834 = vpop.f32.mrb[0].mxu0
        %v835 = vpop.f32.mrb[0].mxu0
        %v836 = vadd.f32 %v660, %v835
        %v837 = vpop.f32.mrb[0].mxu0
        %838 = vmatprep.mubr.bf16.mxu0 %v745
        %839 = vmatmul.mubr.bf16.gmra.mrb[0].mxu0 %v602
        %v840 = vpop.f32.mrb[0].mxu0
        %v841 = vadd.f32 %v660, %v840
        %v842 = vpop.f32.mrb[0].mxu0
        %v843 = vpop.f32.mrb[0].mxu0
        %v844 = vadd.f32 %v660, %v843
        %v845 = vpop.f32.mrb[0].mxu0
        %846 = vmatprep.mubr.bf16.mxu0 %v748
        %847 = vmatmul.mubr.bf16.gmra.mrb[0].mxu0 %v604
        %v848 = vpop.f32.mrb[0].mxu0
        %v849 = vadd.f32 %v660, %v848
        %v850 = vpop.f32.mrb[0].mxu0
        %v851 = vpop.f32.mrb[0].mxu0
        %v852 = vadd.f32 %v660, %v851
        %v853 = vpop.f32.mrb[0].mxu0
        %854 = vmatprep.mubr.bf16.mxu0 %v751
        %855 = vmatmul.mubr.bf16.gmra.mrb[0].mxu0 %v606
        %v856 = vpop.f32.mrb[0].mxu0
        %v857 = vadd.f32 %v660, %v856
        %v858 = vpop.f32.mrb[0].mxu0
        %v859 = vpop.f32.mrb[0].mxu0
        %v860 = vadd.f32 %v660, %v859
        %v861 = vpop.f32.mrb[0].mxu0
        %862 = vmatprep.mubr.bf16.mxu0 %v754
        %863 = vmatmul.mubr.bf16.gmra.mrb[0].mxu0 %v608
        %v864 = vpop.f32.mrb[0].mxu0
        %v865 = vadd.f32 %v660, %v864
        %v866 = vpop.f32.mrb[0].mxu0
        %v867 = vpop.f32.mrb[0].mxu0
        %v868 = vadd.f32 %v660, %v867
        %v869 = vpop.f32.mrb[0].mxu0
        %870 = vmatprep.mubr.bf16.mxu0 %v757
        %871 = vmatmul.mubr.bf16.gmra.mrb[0].mxu0 %v610
        %v872 = vpop.f32.mrb[0].mxu0
        %v873 = vadd.f32 %v660, %v872
        %v874 = vpop.f32.mrb[0].mxu0
        %v875 = vpop.f32.mrb[0].mxu0
        %v876 = vadd.f32 %v660, %v875
        %v877 = vpop.f32.mrb[0].mxu0
        %878 = vmatprep.mubr.bf16.mxu0 %v760
        %879 = vmatmul.mubr.bf16.gmra.mrb[0].mxu0 %v612
        %v880 = vpop.f32.mrb[0].mxu0
        %v881 = vadd.f32 %v660, %v880
        %v882 = vpop.f32.mrb[0].mxu0
        %v883 = vpop.f32.mrb[0].mxu0
        %v884 = vadd.f32 %v660, %v883
        %v885 = vpop.f32.mrb[0].mxu0
        %886 = vmatprep.mubr.bf16.mxu0 %v763
        %887 = vmatmul.mubr.bf16.gmra.mrb[0].mxu0 %v614
        %v888 = vpop.f32.mrb[0].mxu0
        %v889 = vadd.f32 %v660, %v888
        %v890 = vpop.f32.mrb[0].mxu0
        %v891 = vpop.f32.mrb[0].mxu0
        %v892 = vadd.f32 %v660, %v891
        %v893 = vpop.f32.mrb[0].mxu0
        %894 = vmatprep.mubr.bf16.mxu0 %v766
        %895 = vmatmul.mubr.bf16.gmra.mrb[0].mxu0 %v616
        %v896 = vpop.f32.mrb[0].mxu0
        %v897 = vadd.f32 %v660, %v896
        %v898 = vpop.f32.mrb[0].mxu0
        %v899 = vpop.f32.mrb[0].mxu0
        %v900 = vadd.f32 %v660, %v899
        %v901 = vpop.f32.mrb[0].mxu0
        %902 = vmatprep.mubr.bf16.mxu0 %v769
        %903 = vmatmul.mubr.bf16.gmra.mrb[0].mxu0 %v618
        %v904 = vpop.f32.mrb[0].mxu0
        %v905 = vadd.f32 %v660, %v904
        %v906 = vpop.f32.mrb[0].mxu0
        %v907 = vpop.f32.mrb[0].mxu0
        %v908 = vadd.f32 %v660, %v907
        %v909 = vpop.f32.mrb[0].mxu0
        %910 = vmatprep.mubr.bf16.mxu0 %v772
        %911 = vmatmul.mubr.bf16.gmra.mrb[0].mxu0 %v620
        %v912 = vpop.f32.mrb[0].mxu0
        %v913 = vadd.f32 %v660, %v912
        %v914 = vpop.f32.mrb[0].mxu0
        %v915 = vpop.f32.mrb[0].mxu0
        %v916 = vadd.f32 %v660, %v915
        %v917 = vpop.f32.mrb[0].mxu0
        %918 = vmatprep.mubr.bf16.mxu0 %v775
        %919 = vmatmul.mubr.bf16.gmra.mrb[0].mxu0 %v622
        %v920 = vpop.f32.mrb[0].mxu0
        %v921 = vadd.f32 %v660, %v920
        %v922 = vpop.f32.mrb[0].mxu0
        %v923 = vpop.f32.mrb[0].mxu0
        %v924 = vadd.f32 %v660, %v923
        %v925 = vpop.f32.mrb[0].mxu0
        %926 = vmatprep.mubr.bf16.mxu0 %v778
        %927 = vmatmul.mubr.bf16.gmra.mrb[0].mxu0 %v624
        %v928 = vpop.f32.mrb[0].mxu0
        %v929 = vadd.f32 %v660, %v928
        %v930 = vpop.f32.mrb[0].mxu0
        %v931 = vpop.f32.mrb[0].mxu0
        %v932 = vadd.f32 %v660, %v931
        %v933 = vpop.f32.mrb[0].mxu0
        %934 = vmatprep.mubr.bf16.mxu0 %v781
        %935 = vmatmul.mubr.bf16.gmra.mrb[0].mxu0 %v626
        %v936 = vpop.f32.mrb[0].mxu0
        %v937 = vadd.f32 %v660, %v936
        %v938 = vpop.f32.mrb[0].mxu0
        %v939 = vpop.f32.mrb[0].mxu0
        %v940 = vadd.f32 %v660, %v939
        %v941 = vpop.f32.mrb[0].mxu0
        %942 = vmatprep.mubr.bf16.mxu0 %v784
        %943 = vmatmul.mubr.bf16.gmra.mrb[0].mxu0 %v628
        %v944 = vpop.f32.mrb[0].mxu0
        %v945 = vadd.f32 %v660, %v944
        %v946 = vpop.f32.mrb[0].mxu0
        %v947 = vpop.f32.mrb[0].mxu0
        %v948 = vadd.f32 %v660, %v947
        %v949 = vpop.f32.mrb[0].mxu0
        %950 = vdwg.mxu0
        %v951 = vmul.f32 %v825, 0.2
        %v952 = vmul.f32 %v828, 0.2
        %v953 = vmul.f32 %v833, 0.2
        %v954 = vmul.f32 %v836, 0.2
        %v955 = vmul.f32 %v841, 0.2
        %v956 = vmul.f32 %v844, 0.2
        %v957 = vmul.f32 %v849, 0.2
        %v958 = vmul.f32 %v852, 0.2
        %v959 = vmul.f32 %v857, 0.2
        %v960 = vmul.f32 %v860, 0.2
        %v961 = vmul.f32 %v865, 0.2
        %v962 = vmul.f32 %v868, 0.2
        %v963 = vmul.f32 %v873, 0.2
        %v964 = vmul.f32 %v876, 0.2
        %v965 = vmul.f32 %v881, 0.2
        %v966 = vmul.f32 %v884, 0.2
        %v967 = vmul.f32 %v889, 0.2
        %v968 = vmul.f32 %v892, 0.2
        %v969 = vmul.f32 %v897, 0.2
        %v970 = vmul.f32 %v900, 0.2
        %v971 = vmul.f32 %v905, 0.2
        %v972 = vmul.f32 %v908, 0.2
        %v973 = vmul.f32 %v913, 0.2
        %v974 = vmul.f32 %v916, 0.2
        %v975 = vmul.f32 %v921, 0.2
        %v976 = vmul.f32 %v924, 0.2
        %v977 = vmul.f32 %v929, 0.2
        %v978 = vmul.f32 %v932, 0.2
        %v979 = vmul.f32 %v937, 0.2
        %v980 = vmul.f32 %v940, 0.2
        %v981 = vmul.f32 %v945, 0.2
        %v982 = vmul.f32 %v948, 0.2
        %v983 = vmax.f32 %v825, %v951
        %v984 = vmax.f32 %v828, %v952
        %v985 = vmax.f32 %v833, %v953
        %v986 = vmax.f32 %v836, %v954
        %v987 = vmax.f32 %v841, %v955
        %v988 = vmax.f32 %v844, %v956
        %v989 = vmax.f32 %v849, %v957
        %v990 = vmax.f32 %v852, %v958
        %v991 = vmax.f32 %v857, %v959
        %v992 = vmax.f32 %v860, %v960
        %v993 = vmax.f32 %v865, %v961
        %v994 = vmax.f32 %v868, %v962
        %v995 = vmax.f32 %v873, %v963
        %v996 = vmax.f32 %v876, %v964
        %v997 = vmax.f32 %v881, %v965
        %v998 = vmax.f32 %v884, %v966
        %v999 = vmax.f32 %v889, %v967
        %v1000 = vmax.f32 %v892, %v968
        %v1001 = vmax.f32 %v897, %v969
        %v1002 = vmax.f32 %v900, %v970
        %v1003 = vmax.f32 %v905, %v971
        %v1004 = vmax.f32 %v908, %v972
        %v1005 = vmax.f32 %v913, %v973
        %v1006 = vmax.f32 %v916, %v974
        %v1007 = vmax.f32 %v921, %v975
        %v1008 = vmax.f32 %v924, %v976
        %v1009 = vmax.f32 %v929, %v977
        %v1010 = vmax.f32 %v932, %v978
        %v1011 = vmax.f32 %v937, %v979
        %v1012 = vmax.f32 %v940, %v980
        %v1013 = vmax.f32 %v945, %v981
        %v1014 = vmax.f32 %v948, %v982
        %v1015 = vpack.c.bf16 %v984, %v983
        %v1016 = vpack.c.bf16 %v986, %v985
        %v1017 = vpack.c.bf16 %v988, %v987
        %v1018 = vpack.c.bf16 %v990, %v989
        %v1019 = vpack.c.bf16 %v992, %v991
        %v1020 = vpack.c.bf16 %v994, %v993
        %v1021 = vpack.c.bf16 %v996, %v995
        %v1022 = vpack.c.bf16 %v998, %v997
        %v1023 = vpack.c.bf16 %v1000, %v999
        %v1024 = vpack.c.bf16 %v1002, %v1001
        %v1025 = vpack.c.bf16 %v1004, %v1003
        %v1026 = vpack.c.bf16 %v1006, %v1005
        %v1027 = vpack.c.bf16 %v1008, %v1007
        %v1028 = vpack.c.bf16 %v1010, %v1009
        %v1029 = vpack.c.bf16 %v1012, %v1011
        %v1030 = vpack.c.bf16 %v1014, %v1013
        %v1031 = vld [vmem:[%s4] sm:$0xf]
        %v1032 = vld [vmem:[%s4 + $0x4] sm:$0xf]
        %v1033 = vld [vmem:[%s4 + $0x8] sm:$0xf]
        %v1034 = vld [vmem:[%s4 + $0xc] sm:$0xf]
        %v1035 = vld [vmem:[%s4 + $0x10] sm:$0xf]
        %v1036 = vld [vmem:[%s4 + $0x14] sm:$0xf]
        %v1037 = vld [vmem:[%s4 + $0x18] sm:$0xf]
        %v1038 = vld [vmem:[%s4 + $0x1c] sm:$0xf]
        %v1039 = vld [vmem:[%s4 + $0x20] sm:$0xf]
        %v1040 = vld [vmem:[%s4 + $0x24] sm:$0xf]
        %v1041 = vld [vmem:[%s4 + $0x28] sm:$0xf]
        %v1042 = vld [vmem:[%s4 + $0x2c] sm:$0xf]
        %v1043 = vld [vmem:[%s4 + $0x30] sm:$0xf]
        %v1044 = vld [vmem:[%s4 + $0x34] sm:$0xf]
        %v1045 = vld [vmem:[%s4 + $0x38] sm:$0xf]
        %v1046 = vld [vmem:[%s4 + $0x3c] sm:$0xf]
        %v1047 = vld [vmem:[%s5] sm:$0x1]
        %v1049 = vlaneseq
        %v1050 = vshrl.u32 %v1049, 7
        %v1051 = vsub.s32 0, %v1050
        %v1052 = vrot.slane %v1047, %v1051
        %v1070 = vunpack.c.l.b16 %v1031
        %v1071 = vunpack.c.l.b16 %v1032
        %v1072 = vunpack.c.l.b16 %v1033
        %v1073 = vunpack.c.l.b16 %v1034
        %v1074 = vunpack.c.l.b16 %v1035
        %v1075 = vunpack.c.l.b16 %v1036
        %v1076 = vunpack.c.l.b16 %v1037
        %v1077 = vunpack.c.l.b16 %v1038
        %v1078 = vunpack.c.l.b16 %v1039
        %v1079 = vunpack.c.l.b16 %v1040
        %v1080 = vunpack.c.l.b16 %v1041
        %v1081 = vunpack.c.l.b16 %v1042
        %v1082 = vunpack.c.l.b16 %v1043
        %v1083 = vunpack.c.l.b16 %v1044
        %v1084 = vunpack.c.l.b16 %v1045
        %v1085 = vunpack.c.l.b16 %v1046
        %v1086 = vpack.c.b16 %v1071, %v1070
        %v1087 = vpack.c.b16 %v1073, %v1072
        %v1088 = vpack.c.b16 %v1075, %v1074
        %v1089 = vpack.c.b16 %v1077, %v1076
        %v1090 = vpack.c.b16 %v1079, %v1078
        %v1091 = vpack.c.b16 %v1081, %v1080
        %v1092 = vpack.c.b16 %v1083, %v1082
        %v1093 = vpack.c.b16 %v1085, %v1084
        %1102 = vmatprep.subr.bf16.mxu0 0
        %1103 = vmatpush1.bf16.msra.mxu0 %v1086
        %1104 = vmatprep.subr.bf16.mxu0 0
        %1105 = vmatpush1.bf16.msra.mxu0 %v1087
        %1106 = vmatprep.subr.bf16.mxu0 0
        %1107 = vmatpush1.bf16.msra.mxu0 %v1088
        %1108 = vmatprep.subr.bf16.mxu0 0
        %1109 = vmatpush1.bf16.msra.mxu0 %v1089
        %1110 = vmatprep.subr.bf16.mxu0 0
        %1111 = vmatpush1.bf16.msra.mxu0 %v1090
        %1112 = vmatprep.subr.bf16.mxu0 0
        %1113 = vmatpush1.bf16.msra.mxu0 %v1091
        %1114 = vmatprep.subr.bf16.mxu0 0
        %1115 = vmatpush1.bf16.msra.mxu0 %v1092
        %1116 = vmatprep.subr.bf16.mxu0 0
        %1117 = vmatpush1.bf16.msra.mxu0 %v1093
        %1118 = vmatprep.subr.bf16.mxu0 0
        %1119 = vmatpush1.bf16.msra.mxu0 0
        %1120 = vmatprep.subr.bf16.mxu0 0
        %1121 = vmatpush1.bf16.msra.mxu0 0
        %1122 = vmatprep.subr.bf16.mxu0 0
        %1123 = vmatpush1.bf16.msra.mxu0 0
        %1124 = vmatprep.subr.bf16.mxu0 0
        %1125 = vmatpush1.bf16.msra.mxu0 0
        %1126 = vmatprep.subr.bf16.mxu0 0
        %1127 = vmatpush1.bf16.msra.mxu0 0
        %1128 = vmatprep.subr.bf16.mxu0 0
        %1129 = vmatpush1.bf16.msra.mxu0 0
        %1130 = vmatprep.subr.bf16.mxu0 0
        %1131 = vmatpush1.bf16.msra.mxu0 0
        %1132 = vmatprep.subr.bf16.mxu0 0
        %1133 = vmatpush1.bf16.msra.mxu0 0
        %1134 = vmatprep.mubr.bf16.mxu0 0
        %1135 = vmatmul.mubr.bf16.gmra.mrb[0].mxu0 %v1015
        %v1136 = vpop.f32.mrb[0].mxu0
        %v1137 = vadd.f32 %v1052, %v1136
        %v1138 = vpop.f32.mrb[0].mxu0
        %v1139 = vpop.f32.mrb[0].mxu0
        %v1140 = vadd.f32 %v1052, %v1139
        %v1141 = vpop.f32.mrb[0].mxu0
        %1142 = vmatprep.mubr.bf16.mxu0 0
        %1143 = vmatmul.mubr.bf16.gmra.mrb[0].mxu0 %v1016
        %v1144 = vpop.f32.mrb[0].mxu0
        %v1145 = vadd.f32 %v1052, %v1144
        %v1146 = vpop.f32.mrb[0].mxu0
        %v1147 = vpop.f32.mrb[0].mxu0
        %v1148 = vadd.f32 %v1052, %v1147
        %v1149 = vpop.f32.mrb[0].mxu0
        %1150 = vmatprep.mubr.bf16.mxu0 0
        %1151 = vmatmul.mubr.bf16.gmra.mrb[0].mxu0 %v1017
        %v1152 = vpop.f32.mrb[0].mxu0
        %v1153 = vadd.f32 %v1052, %v1152
        %v1154 = vpop.f32.mrb[0].mxu0
        %v1155 = vpop.f32.mrb[0].mxu0
        %v1156 = vadd.f32 %v1052, %v1155
        %v1157 = vpop.f32.mrb[0].mxu0
        %1158 = vmatprep.mubr.bf16.mxu0 0
        %1159 = vmatmul.mubr.bf16.gmra.mrb[0].mxu0 %v1018
        %v1160 = vpop.f32.mrb[0].mxu0
        %v1161 = vadd.f32 %v1052, %v1160
        %v1162 = vpop.f32.mrb[0].mxu0
        %v1163 = vpop.f32.mrb[0].mxu0
        %v1164 = vadd.f32 %v1052, %v1163
        %v1165 = vpop.f32.mrb[0].mxu0
        %1166 = vmatprep.mubr.bf16.mxu0 0
        %1167 = vmatmul.mubr.bf16.gmra.mrb[0].mxu0 %v1019
        %v1168 = vpop.f32.mrb[0].mxu0
        %v1169 = vadd.f32 %v1052, %v1168
        %v1170 = vpop.f32.mrb[0].mxu0
        %v1171 = vpop.f32.mrb[0].mxu0
        %v1172 = vadd.f32 %v1052, %v1171
        %v1173 = vpop.f32.mrb[0].mxu0
        %1174 = vmatprep.mubr.bf16.mxu0 0
        %1175 = vmatmul.mubr.bf16.gmra.mrb[0].mxu0 %v1020
        %v1176 = vpop.f32.mrb[0].mxu0
        %v1177 = vadd.f32 %v1052, %v1176
        %v1178 = vpop.f32.mrb[0].mxu0
        %v1179 = vpop.f32.mrb[0].mxu0
        %v1180 = vadd.f32 %v1052, %v1179
        %v1181 = vpop.f32.mrb[0].mxu0
        %1182 = vmatprep.mubr.bf16.mxu0 0
        %1183 = vmatmul.mubr.bf16.gmra.mrb[0].mxu0 %v1021
        %v1184 = vpop.f32.mrb[0].mxu0
        %v1185 = vadd.f32 %v1052, %v1184
        %v1186 = vpop.f32.mrb[0].mxu0
        %v1187 = vpop.f32.mrb[0].mxu0
        %v1188 = vadd.f32 %v1052, %v1187
        %v1189 = vpop.f32.mrb[0].mxu0
        %1190 = vmatprep.mubr.bf16.mxu0 0
        %1191 = vmatmul.mubr.bf16.gmra.mrb[0].mxu0 %v1022
        %v1192 = vpop.f32.mrb[0].mxu0
        %v1193 = vadd.f32 %v1052, %v1192
        %v1194 = vpop.f32.mrb[0].mxu0
        %v1195 = vpop.f32.mrb[0].mxu0
        %v1196 = vadd.f32 %v1052, %v1195
        %v1197 = vpop.f32.mrb[0].mxu0
        %1198 = vmatprep.mubr.bf16.mxu0 0
        %1199 = vmatmul.mubr.bf16.gmra.mrb[0].mxu0 %v1023
        %v1200 = vpop.f32.mrb[0].mxu0
        %v1201 = vadd.f32 %v1052, %v1200
        %v1202 = vpop.f32.mrb[0].mxu0
        %v1203 = vpop.f32.mrb[0].mxu0
        %v1204 = vadd.f32 %v1052, %v1203
        %v1205 = vpop.f32.mrb[0].mxu0
        %1206 = vmatprep.mubr.bf16.mxu0 0
        %1207 = vmatmul.mubr.bf16.gmra.mrb[0].mxu0 %v1024
        %v1208 = vpop.f32.mrb[0].mxu0
        %v1209 = vadd.f32 %v1052, %v1208
        %v1210 = vpop.f32.mrb[0].mxu0
        %v1211 = vpop.f32.mrb[0].mxu0
        %v1212 = vadd.f32 %v1052, %v1211
        %v1213 = vpop.f32.mrb[0].mxu0
        %1214 = vmatprep.mubr.bf16.mxu0 0
        %1215 = vmatmul.mubr.bf16.gmra.mrb[0].mxu0 %v1025
        %v1216 = vpop.f32.mrb[0].mxu0
        %v1217 = vadd.f32 %v1052, %v1216
        %v1218 = vpop.f32.mrb[0].mxu0
        %v1219 = vpop.f32.mrb[0].mxu0
        %v1220 = vadd.f32 %v1052, %v1219
        %v1221 = vpop.f32.mrb[0].mxu0
        %1222 = vmatprep.mubr.bf16.mxu0 0
        %1223 = vmatmul.mubr.bf16.gmra.mrb[0].mxu0 %v1026
        %v1224 = vpop.f32.mrb[0].mxu0
        %v1225 = vadd.f32 %v1052, %v1224
        %v1226 = vpop.f32.mrb[0].mxu0
        %v1227 = vpop.f32.mrb[0].mxu0
        %v1228 = vadd.f32 %v1052, %v1227
        %v1229 = vpop.f32.mrb[0].mxu0
        %1230 = vmatprep.mubr.bf16.mxu0 0
        %1231 = vmatmul.mubr.bf16.gmra.mrb[0].mxu0 %v1027
        %v1232 = vpop.f32.mrb[0].mxu0
        %v1233 = vadd.f32 %v1052, %v1232
        %v1234 = vpop.f32.mrb[0].mxu0
        %v1235 = vpop.f32.mrb[0].mxu0
        %v1236 = vadd.f32 %v1052, %v1235
        %v1237 = vpop.f32.mrb[0].mxu0
        %1238 = vmatprep.mubr.bf16.mxu0 0
        %1239 = vmatmul.mubr.bf16.gmra.mrb[0].mxu0 %v1028
        %v1240 = vpop.f32.mrb[0].mxu0
        %v1241 = vadd.f32 %v1052, %v1240
        %v1242 = vpop.f32.mrb[0].mxu0
        %v1243 = vpop.f32.mrb[0].mxu0
        %v1244 = vadd.f32 %v1052, %v1243
        %v1245 = vpop.f32.mrb[0].mxu0
        %1246 = vmatprep.mubr.bf16.mxu0 0
        %1247 = vmatmul.mubr.bf16.gmra.mrb[0].mxu0 %v1029
        %v1248 = vpop.f32.mrb[0].mxu0
        %v1249 = vadd.f32 %v1052, %v1248
        %v1250 = vpop.f32.mrb[0].mxu0
        %v1251 = vpop.f32.mrb[0].mxu0
        %v1252 = vadd.f32 %v1052, %v1251
        %v1253 = vpop.f32.mrb[0].mxu0
        %1254 = vmatprep.mubr.bf16.mxu0 0
        %1255 = vmatmul.mubr.bf16.gmra.mrb[0].mxu0 %v1030
        %v1256 = vpop.f32.mrb[0].mxu0
        %v1257 = vadd.f32 %v1052, %v1256
        %v1258 = vpop.f32.mrb[0].mxu0
        %v1259 = vpop.f32.mrb[0].mxu0
        %v1260 = vadd.f32 %v1052, %v1259
        %v1261 = vpop.f32.mrb[0].mxu0
        %1262 = vdwg.mxu0
        %v1263 = vmul.f32 %v1137, 0.2
        %v1264 = vmul.f32 %v1140, 0.2
        %v1265 = vmul.f32 %v1145, 0.2
        %v1266 = vmul.f32 %v1148, 0.2
        %v1267 = vmul.f32 %v1153, 0.2
        %v1268 = vmul.f32 %v1156, 0.2
        %v1269 = vmul.f32 %v1161, 0.2
        %v1270 = vmul.f32 %v1164, 0.2
        %v1271 = vmul.f32 %v1169, 0.2
        %v1272 = vmul.f32 %v1172, 0.2
        %v1273 = vmul.f32 %v1177, 0.2
        %v1274 = vmul.f32 %v1180, 0.2
        %v1275 = vmul.f32 %v1185, 0.2
        %v1276 = vmul.f32 %v1188, 0.2
        %v1277 = vmul.f32 %v1193, 0.2
        %v1278 = vmul.f32 %v1196, 0.2
        %v1279 = vmul.f32 %v1201, 0.2
        %v1280 = vmul.f32 %v1204, 0.2
        %v1281 = vmul.f32 %v1209, 0.2
        %v1282 = vmul.f32 %v1212, 0.2
        %v1283 = vmul.f32 %v1217, 0.2
        %v1284 = vmul.f32 %v1220, 0.2
        %v1285 = vmul.f32 %v1225, 0.2
        %v1286 = vmul.f32 %v1228, 0.2
        %v1287 = vmul.f32 %v1233, 0.2
        %v1288 = vmul.f32 %v1236, 0.2
        %v1289 = vmul.f32 %v1241, 0.2
        %v1290 = vmul.f32 %v1244, 0.2
        %v1291 = vmul.f32 %v1249, 0.2
        %v1292 = vmul.f32 %v1252, 0.2
        %v1293 = vmul.f32 %v1257, 0.2
        %v1294 = vmul.f32 %v1260, 0.2
        %v1295 = vmax.f32 %v1137, %v1263
        %v1296 = vmax.f32 %v1140, %v1264
        %v1297 = vmax.f32 %v1145, %v1265
        %v1298 = vmax.f32 %v1148, %v1266
        %v1299 = vmax.f32 %v1153, %v1267
        %v1300 = vmax.f32 %v1156, %v1268
        %v1301 = vmax.f32 %v1161, %v1269
        %v1302 = vmax.f32 %v1164, %v1270
        %v1303 = vmax.f32 %v1169, %v1271
        %v1304 = vmax.f32 %v1172, %v1272
        %v1305 = vmax.f32 %v1177, %v1273
        %v1306 = vmax.f32 %v1180, %v1274
        %v1307 = vmax.f32 %v1185, %v1275
        %v1308 = vmax.f32 %v1188, %v1276
        %v1309 = vmax.f32 %v1193, %v1277
        %v1310 = vmax.f32 %v1196, %v1278
        %v1311 = vmax.f32 %v1201, %v1279
        %v1312 = vmax.f32 %v1204, %v1280
        %v1313 = vmax.f32 %v1209, %v1281
        %v1314 = vmax.f32 %v1212, %v1282
        %v1315 = vmax.f32 %v1217, %v1283
        %v1316 = vmax.f32 %v1220, %v1284
        %v1317 = vmax.f32 %v1225, %v1285
        %v1318 = vmax.f32 %v1228, %v1286
        %v1319 = vmax.f32 %v1233, %v1287
        %v1320 = vmax.f32 %v1236, %v1288
        %v1321 = vmax.f32 %v1241, %v1289
        %v1322 = vmax.f32 %v1244, %v1290
        %v1323 = vmax.f32 %v1249, %v1291
        %v1324 = vmax.f32 %v1252, %v1292
        %v1325 = vmax.f32 %v1257, %v1293
        %v1326 = vmax.f32 %v1260, %v1294
        %v1327 = vpack.c.bf16 %v1296, %v1295
        %v1328 = vpack.c.bf16 %v1298, %v1297
        %v1329 = vpack.c.bf16 %v1300, %v1299
        %v1330 = vpack.c.bf16 %v1302, %v1301
        %v1331 = vpack.c.bf16 %v1304, %v1303
        %v1332 = vpack.c.bf16 %v1306, %v1305
        %v1333 = vpack.c.bf16 %v1308, %v1307
        %v1334 = vpack.c.bf16 %v1310, %v1309
        %v1335 = vpack.c.bf16 %v1312, %v1311
        %v1336 = vpack.c.bf16 %v1314, %v1313
        %v1337 = vpack.c.bf16 %v1316, %v1315
        %v1338 = vpack.c.bf16 %v1318, %v1317
        %v1339 = vpack.c.bf16 %v1320, %v1319
        %v1340 = vpack.c.bf16 %v1322, %v1321
        %v1341 = vpack.c.bf16 %v1324, %v1323
        %v1342 = vpack.c.bf16 %v1326, %v1325
        %v1343 = vld [vmem:[%s6] sm:$0xff]
        %v1344 = vld [vmem:[%s6 + $0x8] sm:$0xff]
        %v1345 = vld [vmem:[%s6 + $0x10] sm:$0xff]
        %v1346 = vld [vmem:[%s6 + $0x18] sm:$0xff]
        %v1347 = vld [vmem:[%s6 + $0x20] sm:$0xff]
        %v1348 = vld [vmem:[%s6 + $0x28] sm:$0xff]
        %v1349 = vld [vmem:[%s6 + $0x30] sm:$0xff]
        %v1350 = vld [vmem:[%s6 + $0x38] sm:$0xff]
        %v1351 = vld [vmem:[%s6 + $0x40] sm:$0xff]
        %v1352 = vld [vmem:[%s6 + $0x48] sm:$0xff]
        %v1353 = vld [vmem:[%s6 + $0x50] sm:$0xff]
        %v1354 = vld [vmem:[%s6 + $0x58] sm:$0xff]
        %v1355 = vld [vmem:[%s6 + $0x60] sm:$0xff]
        %v1356 = vld [vmem:[%s6 + $0x68] sm:$0xff]
        %v1357 = vld [vmem:[%s6 + $0x70] sm:$0xff]
        %v1358 = vld [vmem:[%s6 + $0x78] sm:$0xff]
        %v1359 = vld [vmem:[%s7] sm:$0x3]
        %v1361 = vlaneseq
        %v1362 = vshrl.u32 %v1361, 7
        %v1363 = vsub.s32 0, %v1362
        %v1364 = vrot.slane %v1359, %v1363
        %v1365 = vlaneseq
        %v1366 = vshrl.u32 %v1365, 7
        %v1367 = vsub.s32 1, %v1366
        %v1368 = vrot.slane %v1359, %v1367
        %v1387 = vunpack.c.l.b16 %v1343
        %v1388 = vunpack.c.h.b16 %v1343
        %v1389 = vunpack.c.l.b16 %v1344
        %v1390 = vunpack.c.h.b16 %v1344
        %v1391 = vunpack.c.l.b16 %v1345
        %v1392 = vunpack.c.h.b16 %v1345
        %v1393 = vunpack.c.l.b16 %v1346
        %v1394 = vunpack.c.h.b16 %v1346
        %v1395 = vunpack.c.l.b16 %v1347
        %v1396 = vunpack.c.h.b16 %v1347
        %v1397 = vunpack.c.l.b16 %v1348
        %v1398 = vunpack.c.h.b16 %v1348
        %v1399 = vunpack.c.l.b16 %v1349
        %v1400 = vunpack.c.h.b16 %v1349
        %v1401 = vunpack.c.l.b16 %v1350
        %v1402 = vunpack.c.h.b16 %v1350
        %v1403 = vunpack.c.l.b16 %v1351
        %v1404 = vunpack.c.h.b16 %v1351
        %v1405 = vunpack.c.l.b16 %v1352
        %v1406 = vunpack.c.h.b16 %v1352
        %v1407 = vunpack.c.l.b16 %v1353
        %v1408 = vunpack.c.h.b16 %v1353
        %v1409 = vunpack.c.l.b16 %v1354
        %v1410 = vunpack.c.h.b16 %v1354
        %v1411 = vunpack.c.l.b16 %v1355
        %v1412 = vunpack.c.h.b16 %v1355
        %v1413 = vunpack.c.l.b16 %v1356
        %v1414 = vunpack.c.h.b16 %v1356
        %v1415 = vunpack.c.l.b16 %v1357
        %v1416 = vunpack.c.h.b16 %v1357
        %v1417 = vunpack.c.l.b16 %v1358
        %v1418 = vunpack.c.h.b16 %v1358
        %v1419 = vpack.c.b16 %v1389, %v1387
        %v1420 = vpack.c.b16 %v1390, %v1388
        %v1421 = vpack.c.b16 %v1393, %v1391
        %v1422 = vpack.c.b16 %v1394, %v1392
        %v1423 = vpack.c.b16 %v1397, %v1395
        %v1424 = vpack.c.b16 %v1398, %v1396
        %v1425 = vpack.c.b16 %v1401, %v1399
        %v1426 = vpack.c.b16 %v1402, %v1400
        %v1427 = vpack.c.b16 %v1405, %v1403
        %v1428 = vpack.c.b16 %v1406, %v1404
        %v1429 = vpack.c.b16 %v1409, %v1407
        %v1430 = vpack.c.b16 %v1410, %v1408
        %v1431 = vpack.c.b16 %v1413, %v1411
        %v1432 = vpack.c.b16 %v1414, %v1412
        %v1433 = vpack.c.b16 %v1417, %v1415
        %v1434 = vpack.c.b16 %v1418, %v1416
        %1451 = vmatprep.subr.bf16.mxu0 %v1420
        %1452 = vmatpush1.bf16.msra.mxu0 %v1419
        %1453 = vmatprep.subr.bf16.mxu0 %v1422
        %1454 = vmatpush1.bf16.msra.mxu0 %v1421
        %1455 = vmatprep.subr.bf16.mxu0 %v1424
        %1456 = vmatpush1.bf16.msra.mxu0 %v1423
        %1457 = vmatprep.subr.bf16.mxu0 %v1426
        %1458 = vmatpush1.bf16.msra.mxu0 %v1425
        %1459 = vmatprep.subr.bf16.mxu0 %v1428
        %1460 = vmatpush1.bf16.msra.mxu0 %v1427
        %1461 = vmatprep.subr.bf16.mxu0 %v1430
        %1462 = vmatpush1.bf16.msra.mxu0 %v1429
        %1463 = vmatprep.subr.bf16.mxu0 %v1432
        %1464 = vmatpush1.bf16.msra.mxu0 %v1431
        %1465 = vmatprep.subr.bf16.mxu0 %v1434
        %1466 = vmatpush1.bf16.msra.mxu0 %v1433
        %1467 = vmatprep.subr.bf16.mxu0 0
        %1468 = vmatpush1.bf16.msra.mxu0 0
        %1469 = vmatprep.subr.bf16.mxu0 0
        %1470 = vmatpush1.bf16.msra.mxu0 0
        %1471 = vmatprep.subr.bf16.mxu0 0
        %1472 = vmatpush1.bf16.msra.mxu0 0
        %1473 = vmatprep.subr.bf16.mxu0 0
        %1474 = vmatpush1.bf16.msra.mxu0 0
        %1475 = vmatprep.subr.bf16.mxu0 0
        %1476 = vmatpush1.bf16.msra.mxu0 0
        %1477 = vmatprep.subr.bf16.mxu0 0
        %1478 = vmatpush1.bf16.msra.mxu0 0
        %1479 = vmatprep.subr.bf16.mxu0 0
        %1480 = vmatpush1.bf16.msra.mxu0 0
        %1481 = vmatprep.subr.bf16.mxu0 0
        %1482 = vmatpush1.bf16.msra.mxu0 0
        %1483 = vmatprep.mubr.bf16.mxu0 0
        %1484 = vmatmul.mubr.bf16.gmra.mrb[0].mxu0 %v1327
        %v1485 = vpop.f32.mrb[0].mxu0
        %v1486 = vadd.f32 %v1364, %v1485
        %v1487 = vpop.f32.mrb[0].mxu0
        %v1488 = vadd.f32 %v1368, %v1487
        %v1489 = vpop.f32.mrb[0].mxu0
        %v1490 = vadd.f32 %v1364, %v1489
        %v1491 = vpop.f32.mrb[0].mxu0
        %v1492 = vadd.f32 %v1368, %v1491
        %1493 = vmatprep.mubr.bf16.mxu0 0
        %1494 = vmatmul.mubr.bf16.gmra.mrb[0].mxu0 %v1328
        %v1495 = vpop.f32.mrb[0].mxu0
        %v1496 = vadd.f32 %v1364, %v1495
        %v1497 = vpop.f32.mrb[0].mxu0
        %v1498 = vadd.f32 %v1368, %v1497
        %v1499 = vpop.f32.mrb[0].mxu0
        %v1500 = vadd.f32 %v1364, %v1499
        %v1501 = vpop.f32.mrb[0].mxu0
        %v1502 = vadd.f32 %v1368, %v1501
        %1503 = vmatprep.mubr.bf16.mxu0 0
        %1504 = vmatmul.mubr.bf16.gmra.mrb[0].mxu0 %v1329
        %v1505 = vpop.f32.mrb[0].mxu0
        %v1506 = vadd.f32 %v1364, %v1505
        %v1507 = vpop.f32.mrb[0].mxu0
        %v1508 = vadd.f32 %v1368, %v1507
        %v1509 = vpop.f32.mrb[0].mxu0
        %v1510 = vadd.f32 %v1364, %v1509
        %v1511 = vpop.f32.mrb[0].mxu0
        %v1512 = vadd.f32 %v1368, %v1511
        %1513 = vmatprep.mubr.bf16.mxu0 0
        %1514 = vmatmul.mubr.bf16.gmra.mrb[0].mxu0 %v1330
        %v1515 = vpop.f32.mrb[0].mxu0
        %v1516 = vadd.f32 %v1364, %v1515
        %v1517 = vpop.f32.mrb[0].mxu0
        %v1518 = vadd.f32 %v1368, %v1517
        %v1519 = vpop.f32.mrb[0].mxu0
        %v1520 = vadd.f32 %v1364, %v1519
        %v1521 = vpop.f32.mrb[0].mxu0
        %v1522 = vadd.f32 %v1368, %v1521
        %1523 = vmatprep.mubr.bf16.mxu0 0
        %1524 = vmatmul.mubr.bf16.gmra.mrb[0].mxu0 %v1331
        %v1525 = vpop.f32.mrb[0].mxu0
        %v1526 = vadd.f32 %v1364, %v1525
        %v1527 = vpop.f32.mrb[0].mxu0
        %v1528 = vadd.f32 %v1368, %v1527
        %v1529 = vpop.f32.mrb[0].mxu0
        %v1530 = vadd.f32 %v1364, %v1529
        %v1531 = vpop.f32.mrb[0].mxu0
        %v1532 = vadd.f32 %v1368, %v1531
        %1533 = vmatprep.mubr.bf16.mxu0 0
        %1534 = vmatmul.mubr.bf16.gmra.mrb[0].mxu0 %v1332
        %v1535 = vpop.f32.mrb[0].mxu0
        %v1536 = vadd.f32 %v1364, %v1535
        %v1537 = vpop.f32.mrb[0].mxu0
        %v1538 = vadd.f32 %v1368, %v1537
        %v1539 = vpop.f32.mrb[0].mxu0
        %v1540 = vadd.f32 %v1364, %v1539
        %v1541 = vpop.f32.mrb[0].mxu0
        %v1542 = vadd.f32 %v1368, %v1541
        %1543 = vmatprep.mubr.bf16.mxu0 0
        %1544 = vmatmul.mubr.bf16.gmra.mrb[0].mxu0 %v1333
        %v1545 = vpop.f32.mrb[0].mxu0
        %v1546 = vadd.f32 %v1364, %v1545
        %v1547 = vpop.f32.mrb[0].mxu0
        %v1548 = vadd.f32 %v1368, %v1547
        %v1549 = vpop.f32.mrb[0].mxu0
        %v1550 = vadd.f32 %v1364, %v1549
        %v1551 = vpop.f32.mrb[0].mxu0
        %v1552 = vadd.f32 %v1368, %v1551
        %1553 = vmatprep.mubr.bf16.mxu0 0
        %1554 = vmatmul.mubr.bf16.gmra.mrb[0].mxu0 %v1334
        %v1555 = vpop.f32.mrb[0].mxu0
        %v1556 = vadd.f32 %v1364, %v1555
        %v1557 = vpop.f32.mrb[0].mxu0
        %v1558 = vadd.f32 %v1368, %v1557
        %v1559 = vpop.f32.mrb[0].mxu0
        %v1560 = vadd.f32 %v1364, %v1559
        %v1561 = vpop.f32.mrb[0].mxu0
        %v1562 = vadd.f32 %v1368, %v1561
        %1563 = vmatprep.mubr.bf16.mxu0 0
        %1564 = vmatmul.mubr.bf16.gmra.mrb[0].mxu0 %v1335
        %v1565 = vpop.f32.mrb[0].mxu0
        %v1566 = vadd.f32 %v1364, %v1565
        %v1567 = vpop.f32.mrb[0].mxu0
        %v1568 = vadd.f32 %v1368, %v1567
        %v1569 = vpop.f32.mrb[0].mxu0
        %v1570 = vadd.f32 %v1364, %v1569
        %v1571 = vpop.f32.mrb[0].mxu0
        %v1572 = vadd.f32 %v1368, %v1571
        %1573 = vmatprep.mubr.bf16.mxu0 0
        %1574 = vmatmul.mubr.bf16.gmra.mrb[0].mxu0 %v1336
        %v1575 = vpop.f32.mrb[0].mxu0
        %v1576 = vadd.f32 %v1364, %v1575
        %v1577 = vpop.f32.mrb[0].mxu0
        %v1578 = vadd.f32 %v1368, %v1577
        %v1579 = vpop.f32.mrb[0].mxu0
        %v1580 = vadd.f32 %v1364, %v1579
        %v1581 = vpop.f32.mrb[0].mxu0
        %v1582 = vadd.f32 %v1368, %v1581
        %1583 = vmatprep.mubr.bf16.mxu0 0
        %1584 = vmatmul.mubr.bf16.gmra.mrb[0].mxu0 %v1337
        %v1585 = vpop.f32.mrb[0].mxu0
        %v1586 = vadd.f32 %v1364, %v1585
        %v1587 = vpop.f32.mrb[0].mxu0
        %v1588 = vadd.f32 %v1368, %v1587
        %v1589 = vpop.f32.mrb[0].mxu0
        %v1590 = vadd.f32 %v1364, %v1589
        %v1591 = vpop.f32.mrb[0].mxu0
        %v1592 = vadd.f32 %v1368, %v1591
        %1593 = vmatprep.mubr.bf16.mxu0 0
        %1594 = vmatmul.mubr.bf16.gmra.mrb[0].mxu0 %v1338
        %v1595 = vpop.f32.mrb[0].mxu0
        %v1596 = vadd.f32 %v1364, %v1595
        %v1597 = vpop.f32.mrb[0].mxu0
        %v1598 = vadd.f32 %v1368, %v1597
        %v1599 = vpop.f32.mrb[0].mxu0
        %v1600 = vadd.f32 %v1364, %v1599
        %v1601 = vpop.f32.mrb[0].mxu0
        %v1602 = vadd.f32 %v1368, %v1601
        %1603 = vmatprep.mubr.bf16.mxu0 0
        %1604 = vmatmul.mubr.bf16.gmra.mrb[0].mxu0 %v1339
        %v1605 = vpop.f32.mrb[0].mxu0
        %v1606 = vadd.f32 %v1364, %v1605
        %v1607 = vpop.f32.mrb[0].mxu0
        %v1608 = vadd.f32 %v1368, %v1607
        %v1609 = vpop.f32.mrb[0].mxu0
        %v1610 = vadd.f32 %v1364, %v1609
        %v1611 = vpop.f32.mrb[0].mxu0
        %v1612 = vadd.f32 %v1368, %v1611
        %1613 = vmatprep.mubr.bf16.mxu0 0
        %1614 = vmatmul.mubr.bf16.gmra.mrb[0].mxu0 %v1340
        %v1615 = vpop.f32.mrb[0].mxu0
        %v1616 = vadd.f32 %v1364, %v1615
        %v1617 = vpop.f32.mrb[0].mxu0
        %v1618 = vadd.f32 %v1368, %v1617
        %v1619 = vpop.f32.mrb[0].mxu0
        %v1620 = vadd.f32 %v1364, %v1619
        %v1621 = vpop.f32.mrb[0].mxu0
        %v1622 = vadd.f32 %v1368, %v1621
        %1623 = vmatprep.mubr.bf16.mxu0 0
        %1624 = vmatmul.mubr.bf16.gmra.mrb[0].mxu0 %v1341
        %v1625 = vpop.f32.mrb[0].mxu0
        %v1626 = vadd.f32 %v1364, %v1625
        %v1627 = vpop.f32.mrb[0].mxu0
        %v1628 = vadd.f32 %v1368, %v1627
        %v1629 = vpop.f32.mrb[0].mxu0
        %v1630 = vadd.f32 %v1364, %v1629
        %v1631 = vpop.f32.mrb[0].mxu0
        %v1632 = vadd.f32 %v1368, %v1631
        %1633 = vmatprep.mubr.bf16.mxu0 0
        %1634 = vmatmul.mubr.bf16.gmra.mrb[0].mxu0 %v1342
        %v1635 = vpop.f32.mrb[0].mxu0
        %v1636 = vadd.f32 %v1364, %v1635
        %v1637 = vpop.f32.mrb[0].mxu0
        %v1638 = vadd.f32 %v1368, %v1637
        %v1639 = vpop.f32.mrb[0].mxu0
        %v1640 = vadd.f32 %v1364, %v1639
        %v1641 = vpop.f32.mrb[0].mxu0
        %v1642 = vadd.f32 %v1368, %v1641
        %1643 = vdwg.mxu0
        %v1644 = vmul.f32 %v1488, 0.5
        %v1645 = vmul.f32 %v1492, 0.5
        %v1646 = vmul.f32 %v1498, 0.5
        %v1647 = vmul.f32 %v1502, 0.5
        %v1648 = vmul.f32 %v1508, 0.5
        %v1649 = vmul.f32 %v1512, 0.5
        %v1650 = vmul.f32 %v1518, 0.5
        %v1651 = vmul.f32 %v1522, 0.5
        %v1652 = vmul.f32 %v1528, 0.5
        %v1653 = vmul.f32 %v1532, 0.5
        %v1654 = vmul.f32 %v1538, 0.5
        %v1655 = vmul.f32 %v1542, 0.5
        %v1656 = vmul.f32 %v1548, 0.5
        %v1657 = vmul.f32 %v1552, 0.5
        %v1658 = vmul.f32 %v1558, 0.5
        %v1659 = vmul.f32 %v1562, 0.5
        %v1660 = vmul.f32 %v1568, 0.5
        %v1661 = vmul.f32 %v1572, 0.5
        %v1662 = vmul.f32 %v1578, 0.5
        %v1663 = vmul.f32 %v1582, 0.5
        %v1664 = vmul.f32 %v1588, 0.5
        %v1665 = vmul.f32 %v1592, 0.5
        %v1666 = vmul.f32 %v1598, 0.5
        %v1667 = vmul.f32 %v1602, 0.5
        %v1668 = vmul.f32 %v1608, 0.5
        %v1669 = vmul.f32 %v1612, 0.5
        %v1670 = vmul.f32 %v1618, 0.5
        %v1671 = vmul.f32 %v1622, 0.5
        %v1672 = vmul.f32 %v1628, 0.5
        %v1673 = vmul.f32 %v1632, 0.5
        %v1674 = vmul.f32 %v1638, 0.5
        %v1675 = vmul.f32 %v1642, 0.5
        %v1676 = vmul.f32 %v1644, 1.442695
        %v1677 = vpow.pop %v1676
        %v1678 = vmul.f32 %v1645, 1.442695
        %v1679 = vpow.pop %v1678
        %v1680 = vmul.f32 %v1646, 1.442695
        %v1681 = vpow.pop %v1680
        %v1682 = vmul.f32 %v1647, 1.442695
        %v1683 = vpow.pop %v1682
        %v1684 = vmul.f32 %v1648, 1.442695
        %v1685 = vpow.pop %v1684
        %v1686 = vmul.f32 %v1649, 1.442695
        %v1687 = vpow.pop %v1686
        %v1688 = vmul.f32 %v1650, 1.442695
        %v1689 = vpow.pop %v1688
        %v1690 = vmul.f32 %v1651, 1.442695
        %v1691 = vpow.pop %v1690
        %v1692 = vmul.f32 %v1652, 1.442695
        %v1693 = vpow.pop %v1692
        %v1694 = vmul.f32 %v1653, 1.442695
        %v1695 = vpow.pop %v1694
        %v1696 = vmul.f32 %v1654, 1.442695
        %v1697 = vpow.pop %v1696
        %v1698 = vmul.f32 %v1655, 1.442695
        %v1699 = vpow.pop %v1698
        %v1700 = vmul.f32 %v1656, 1.442695
        %v1701 = vpow.pop %v1700
        %v1702 = vmul.f32 %v1657, 1.442695
        %v1703 = vpow.pop %v1702
        %v1704 = vmul.f32 %v1658, 1.442695
        %v1705 = vpow.pop %v1704
        %v1706 = vmul.f32 %v1659, 1.442695
        %v1707 = vpow.pop %v1706
        %v1708 = vmul.f32 %v1660, 1.442695
        %v1709 = vpow.pop %v1708
        %v1710 = vmul.f32 %v1661, 1.442695
        %v1711 = vpow.pop %v1710
        %v1712 = vmul.f32 %v1662, 1.442695
        %v1713 = vpow.pop %v1712
        %v1714 = vmul.f32 %v1663, 1.442695
        %v1715 = vpow.pop %v1714
        %v1716 = vmul.f32 %v1664, 1.442695
        %v1717 = vpow.pop %v1716
        %v1718 = vmul.f32 %v1665, 1.442695
        %v1719 = vpow.pop %v1718
        %v1720 = vmul.f32 %v1666, 1.442695
        %v1721 = vpow.pop %v1720
        %v1722 = vmul.f32 %v1667, 1.442695
        %v1723 = vpow.pop %v1722
        %v1724 = vmul.f32 %v1668, 1.442695
        %v1725 = vpow.pop %v1724
        %v1726 = vmul.f32 %v1669, 1.442695
        %v1727 = vpow.pop %v1726
        %v1728 = vmul.f32 %v1670, 1.442695
        %v1729 = vpow.pop %v1728
        %v1730 = vmul.f32 %v1671, 1.442695
        %v1731 = vpow.pop %v1730
        %v1732 = vmul.f32 %v1672, 1.442695
        %v1733 = vpow.pop %v1732
        %v1734 = vmul.f32 %v1673, 1.442695
        %v1735 = vpow.pop %v1734
        %v1736 = vmul.f32 %v1674, 1.442695
        %v1737 = vpow.pop %v1736
        %v1738 = vmul.f32 %v1675, 1.442695
        %v1739 = vpow.pop %v1738
        %v1740 = vld [vmem:[%s529] sm:$0xff]
        %v1741 = vld [vmem:[%s529 + $0x8] sm:$0xff]
        %v1742 = vld [vmem:[%s529 + $0x10] sm:$0xff]
        %v1743 = vld [vmem:[%s529 + $0x18] sm:$0xff]
        %v1744 = vld [vmem:[%s529 + $0x20] sm:$0xff]
        %v1745 = vld [vmem:[%s529 + $0x28] sm:$0xff]
        %v1746 = vld [vmem:[%s529 + $0x30] sm:$0xff]
        %v1747 = vld [vmem:[%s529 + $0x38] sm:$0xff]
        %v1748 = vld [vmem:[%s529 + $0x40] sm:$0xff]
        %v1749 = vld [vmem:[%s529 + $0x48] sm:$0xff]
        %v1750 = vld [vmem:[%s529 + $0x50] sm:$0xff]
        %v1751 = vld [vmem:[%s529 + $0x58] sm:$0xff]
        %v1752 = vld [vmem:[%s529 + $0x60] sm:$0xff]
        %v1753 = vld [vmem:[%s529 + $0x68] sm:$0xff]
        %v1754 = vld [vmem:[%s529 + $0x70] sm:$0xff]
        %v1755 = vld [vmem:[%s529 + $0x78] sm:$0xff]
        %v1756 = vld [vmem:[%s529 + $0x80] sm:$0xff]
        %v1757 = vld [vmem:[%s529 + $0x88] sm:$0xff]
        %v1758 = vld [vmem:[%s529 + $0x90] sm:$0xff]
        %v1759 = vld [vmem:[%s529 + $0x98] sm:$0xff]
        %v1760 = vld [vmem:[%s529 + $0xa0] sm:$0xff]
        %v1761 = vld [vmem:[%s529 + $0xa8] sm:$0xff]
        %v1762 = vld [vmem:[%s529 + $0xb0] sm:$0xff]
        %v1763 = vld [vmem:[%s529 + $0xb8] sm:$0xff]
        %v1764 = vld [vmem:[%s529 + $0xc0] sm:$0xff]
        %v1765 = vld [vmem:[%s529 + $0xc8] sm:$0xff]
        %v1766 = vld [vmem:[%s529 + $0xd0] sm:$0xff]
        %v1767 = vld [vmem:[%s529 + $0xd8] sm:$0xff]
        %v1768 = vld [vmem:[%s529 + $0xe0] sm:$0xff]
        %v1769 = vld [vmem:[%s529 + $0xe8] sm:$0xff]
        %v1770 = vld [vmem:[%s529 + $0xf0] sm:$0xff]
        %v1771 = vld [vmem:[%s529 + $0xf8] sm:$0xff]
        %v1772 = vmul.f32 %v1677, %v1740
        %v1773 = vmul.f32 %v1679, %v1741
        %v1774 = vmul.f32 %v1681, %v1742
        %v1775 = vmul.f32 %v1683, %v1743
        %v1776 = vmul.f32 %v1685, %v1744
        %v1777 = vmul.f32 %v1687, %v1745
        %v1778 = vmul.f32 %v1689, %v1746
        %v1779 = vmul.f32 %v1691, %v1747
        %v1780 = vmul.f32 %v1693, %v1748
        %v1781 = vmul.f32 %v1695, %v1749
        %v1782 = vmul.f32 %v1697, %v1750
        %v1783 = vmul.f32 %v1699, %v1751
        %v1784 = vmul.f32 %v1701, %v1752
        %v1785 = vmul.f32 %v1703, %v1753
        %v1786 = vmul.f32 %v1705, %v1754
        %v1787 = vmul.f32 %v1707, %v1755
        %v1788 = vmul.f32 %v1709, %v1756
        %v1789 = vmul.f32 %v1711, %v1757
        %v1790 = vmul.f32 %v1713, %v1758
        %v1791 = vmul.f32 %v1715, %v1759
        %v1792 = vmul.f32 %v1717, %v1760
        %v1793 = vmul.f32 %v1719, %v1761
        %v1794 = vmul.f32 %v1721, %v1762
        %v1795 = vmul.f32 %v1723, %v1763
        %v1796 = vmul.f32 %v1725, %v1764
        %v1797 = vmul.f32 %v1727, %v1765
        %v1798 = vmul.f32 %v1729, %v1766
        %v1799 = vmul.f32 %v1731, %v1767
        %v1800 = vmul.f32 %v1733, %v1768
        %v1801 = vmul.f32 %v1735, %v1769
        %v1802 = vmul.f32 %v1737, %v1770
        %v1803 = vmul.f32 %v1739, %v1771
        %v1804 = vadd.f32 %v1486, %v1772
        %v1805 = vadd.f32 %v1490, %v1773
        %v1806 = vadd.f32 %v1496, %v1774
        %v1807 = vadd.f32 %v1500, %v1775
        %v1808 = vadd.f32 %v1506, %v1776
        %v1809 = vadd.f32 %v1510, %v1777
        %v1810 = vadd.f32 %v1516, %v1778
        %v1811 = vadd.f32 %v1520, %v1779
        %v1812 = vadd.f32 %v1526, %v1780
        %v1813 = vadd.f32 %v1530, %v1781
        %v1814 = vadd.f32 %v1536, %v1782
        %v1815 = vadd.f32 %v1540, %v1783
        %v1816 = vadd.f32 %v1546, %v1784
        %v1817 = vadd.f32 %v1550, %v1785
        %v1818 = vadd.f32 %v1556, %v1786
        %v1819 = vadd.f32 %v1560, %v1787
        %v1820 = vadd.f32 %v1566, %v1788
        %v1821 = vadd.f32 %v1570, %v1789
        %v1822 = vadd.f32 %v1576, %v1790
        %v1823 = vadd.f32 %v1580, %v1791
        %v1824 = vadd.f32 %v1586, %v1792
        %v1825 = vadd.f32 %v1590, %v1793
        %v1826 = vadd.f32 %v1596, %v1794
        %v1827 = vadd.f32 %v1600, %v1795
        %v1828 = vadd.f32 %v1606, %v1796
        %v1829 = vadd.f32 %v1610, %v1797
        %v1830 = vadd.f32 %v1616, %v1798
        %v1831 = vadd.f32 %v1620, %v1799
        %v1832 = vadd.f32 %v1626, %v1800
        %v1833 = vadd.f32 %v1630, %v1801
        %v1834 = vadd.f32 %v1636, %v1802
        %v1835 = vadd.f32 %v1640, %v1803
        %v1836 = vpack.c.bf16 %v1805, %v1804
        %v1837 = vpack.c.bf16 %v1807, %v1806
        %v1838 = vpack.c.bf16 %v1809, %v1808
        %v1839 = vpack.c.bf16 %v1811, %v1810
        %v1840 = vpack.c.bf16 %v1813, %v1812
        %v1841 = vpack.c.bf16 %v1815, %v1814
        %v1842 = vpack.c.bf16 %v1817, %v1816
        %v1843 = vpack.c.bf16 %v1819, %v1818
        %v1844 = vpack.c.bf16 %v1821, %v1820
        %v1845 = vpack.c.bf16 %v1823, %v1822
        %v1846 = vpack.c.bf16 %v1825, %v1824
        %v1847 = vpack.c.bf16 %v1827, %v1826
        %v1848 = vpack.c.bf16 %v1829, %v1828
        %v1849 = vpack.c.bf16 %v1831, %v1830
        %v1850 = vpack.c.bf16 %v1833, %v1832
        %v1851 = vpack.c.bf16 %v1835, %v1834
        %v1852 = vld [vmem:[%s8] sm:$0xf]
        %v1853 = vld [vmem:[%s8 + $0x4] sm:$0xf]
        %v1854 = vld [vmem:[%s9] sm:$0x1]
        %v1856 = vlaneseq
        %v1857 = vshrl.u32 %v1856, 7
        %v1858 = vsub.s32 0, %v1857
        %v1859 = vrot.slane %v1854, %v1858
        %v1863 = vunpack.c.l.b16 %v1852
        %v1864 = vunpack.c.l.b16 %v1853
        %v1865 = vpack.c.b16 %v1864, %v1863
        %vm1867 = vcmask 130048
        %v1869 = vsel %vm1867, %v1836, 0
        %v1872 = vsel %vm1867, %v1837, 0
        %v1875 = vsel %vm1867, %v1838, 0
        %v1878 = vsel %vm1867, %v1839, 0
        %v1881 = vsel %vm1867, %v1840, 0
        %v1884 = vsel %vm1867, %v1841, 0
        %v1887 = vsel %vm1867, %v1842, 0
        %v1890 = vsel %vm1867, %v1843, 0
        %v1893 = vsel %vm1867, %v1844, 0
        %v1896 = vsel %vm1867, %v1845, 0
        %v1899 = vsel %vm1867, %v1846, 0
        %v1902 = vsel %vm1867, %v1847, 0
        %v1905 = vsel %vm1867, %v1848, 0
        %v1908 = vsel %vm1867, %v1849, 0
        %v1911 = vsel %vm1867, %v1850, 0
        %v1914 = vsel %vm1867, %v1851, 0
        %1916 = vmatprep.subr.bf16.mxu0 0
        %1917 = vmatpush1.bf16.msra.mxu0 %v1865
        %1918 = vmatprep.subr.bf16.mxu0 0
        %1919 = vmatpush1.bf16.msra.mxu0 0
        %1920 = vmatprep.subr.bf16.mxu0 0
        %1921 = vmatpush1.bf16.msra.mxu0 0
        %1922 = vmatprep.subr.bf16.mxu0 0
        %1923 = vmatpush1.bf16.msra.mxu0 0
        %1924 = vmatprep.subr.bf16.mxu0 0
        %1925 = vmatpush1.bf16.msra.mxu0 0
        %1926 = vmatprep.subr.bf16.mxu0 0
        %1927 = vmatpush1.bf16.msra.mxu0 0
        %1928 = vmatprep.subr.bf16.mxu0 0
        %1929 = vmatpush1.bf16.msra.mxu0 0
        %1930 = vmatprep.subr.bf16.mxu0 0
        %1931 = vmatpush1.bf16.msra.mxu0 0
        %1932 = vmatprep.subr.bf16.mxu0 0
        %1933 = vmatpush1.bf16.msra.mxu0 0
        %1934 = vmatprep.subr.bf16.mxu0 0
        %1935 = vmatpush1.bf16.msra.mxu0 0
        %1936 = vmatprep.subr.bf16.mxu0 0
        %1937 = vmatpush1.bf16.msra.mxu0 0
        %1938 = vmatprep.subr.bf16.mxu0 0
        %1939 = vmatpush1.bf16.msra.mxu0 0
        %1940 = vmatprep.subr.bf16.mxu0 0
        %1941 = vmatpush1.bf16.msra.mxu0 0
        %1942 = vmatprep.subr.bf16.mxu0 0
        %1943 = vmatpush1.bf16.msra.mxu0 0
        %1944 = vmatprep.subr.bf16.mxu0 0
        %1945 = vmatpush1.bf16.msra.mxu0 0
        %1946 = vmatprep.subr.bf16.mxu0 0
        %1947 = vmatpush1.bf16.msra.mxu0 0
        %1948 = vmatprep.mubr.bf16.mxu0 0
        %1949 = vmatmul.mubr.bf16.gmra.mrb[0].mxu0 %v1869
        %v1950 = vpop.f32.mrb[0].mxu0
        %v1951 = vadd.f32 %v1859, %v1950
        %v1952 = vpop.f32.mrb[0].mxu0
        %v1953 = vpop.f32.mrb[0].mxu0
        %v1954 = vadd.f32 %v1859, %v1953
        %v1955 = vpop.f32.mrb[0].mxu0
        %1956 = vmatprep.mubr.bf16.mxu0 0
        %1957 = vmatmul.mubr.bf16.gmra.mrb[0].mxu0 %v1872
        %v1958 = vpop.f32.mrb[0].mxu0
        %v1959 = vadd.f32 %v1859, %v1958
        %v1960 = vpop.f32.mrb[0].mxu0
        %v1961 = vpop.f32.mrb[0].mxu0
        %v1962 = vadd.f32 %v1859, %v1961
        %v1963 = vpop.f32.mrb[0].mxu0
        %1964 = vmatprep.mubr.bf16.mxu0 0
        %1965 = vmatmul.mubr.bf16.gmra.mrb[0].mxu0 %v1875
        %v1966 = vpop.f32.mrb[0].mxu0
        %v1967 = vadd.f32 %v1859, %v1966
        %v1968 = vpop.f32.mrb[0].mxu0
        %v1969 = vpop.f32.mrb[0].mxu0
        %v1970 = vadd.f32 %v1859, %v1969
        %v1971 = vpop.f32.mrb[0].mxu0
        %1972 = vmatprep.mubr.bf16.mxu0 0
        %1973 = vmatmul.mubr.bf16.gmra.mrb[0].mxu0 %v1878
        %v1974 = vpop.f32.mrb[0].mxu0
        %v1975 = vadd.f32 %v1859, %v1974
        %v1976 = vpop.f32.mrb[0].mxu0
        %v1977 = vpop.f32.mrb[0].mxu0
        %v1978 = vadd.f32 %v1859, %v1977
        %v1979 = vpop.f32.mrb[0].mxu0
        %1980 = vmatprep.mubr.bf16.mxu0 0
        %1981 = vmatmul.mubr.bf16.gmra.mrb[0].mxu0 %v1881
        %v1982 = vpop.f32.mrb[0].mxu0
        %v1983 = vadd.f32 %v1859, %v1982
        %v1984 = vpop.f32.mrb[0].mxu0
        %v1985 = vpop.f32.mrb[0].mxu0
        %v1986 = vadd.f32 %v1859, %v1985
        %v1987 = vpop.f32.mrb[0].mxu0
        %1988 = vmatprep.mubr.bf16.mxu0 0
        %1989 = vmatmul.mubr.bf16.gmra.mrb[0].mxu0 %v1884
        %v1990 = vpop.f32.mrb[0].mxu0
        %v1991 = vadd.f32 %v1859, %v1990
        %v1992 = vpop.f32.mrb[0].mxu0
        %v1993 = vpop.f32.mrb[0].mxu0
        %v1994 = vadd.f32 %v1859, %v1993
        %v1995 = vpop.f32.mrb[0].mxu0
        %1996 = vmatprep.mubr.bf16.mxu0 0
        %1997 = vmatmul.mubr.bf16.gmra.mrb[0].mxu0 %v1887
        %v1998 = vpop.f32.mrb[0].mxu0
        %v1999 = vadd.f32 %v1859, %v1998
        %v2000 = vpop.f32.mrb[0].mxu0
        %v2001 = vpop.f32.mrb[0].mxu0
        %v2002 = vadd.f32 %v1859, %v2001
        %v2003 = vpop.f32.mrb[0].mxu0
        %2004 = vmatprep.mubr.bf16.mxu0 0
        %2005 = vmatmul.mubr.bf16.gmra.mrb[0].mxu0 %v1890
        %v2006 = vpop.f32.mrb[0].mxu0
        %v2007 = vadd.f32 %v1859, %v2006
        %v2008 = vpop.f32.mrb[0].mxu0
        %v2009 = vpop.f32.mrb[0].mxu0
        %v2010 = vadd.f32 %v1859, %v2009
        %v2011 = vpop.f32.mrb[0].mxu0
        %2012 = vmatprep.mubr.bf16.mxu0 0
        %2013 = vmatmul.mubr.bf16.gmra.mrb[0].mxu0 %v1893
        %v2014 = vpop.f32.mrb[0].mxu0
        %v2015 = vadd.f32 %v1859, %v2014
        %v2016 = vpop.f32.mrb[0].mxu0
        %v2017 = vpop.f32.mrb[0].mxu0
        %v2018 = vadd.f32 %v1859, %v2017
        %v2019 = vpop.f32.mrb[0].mxu0
        %2020 = vmatprep.mubr.bf16.mxu0 0
        %2021 = vmatmul.mubr.bf16.gmra.mrb[0].mxu0 %v1896
        %v2022 = vpop.f32.mrb[0].mxu0
        %v2023 = vadd.f32 %v1859, %v2022
        %v2024 = vpop.f32.mrb[0].mxu0
        %v2025 = vpop.f32.mrb[0].mxu0
        %v2026 = vadd.f32 %v1859, %v2025
        %v2027 = vpop.f32.mrb[0].mxu0
        %2028 = vmatprep.mubr.bf16.mxu0 0
        %2029 = vmatmul.mubr.bf16.gmra.mrb[0].mxu0 %v1899
        %v2030 = vpop.f32.mrb[0].mxu0
        %v2031 = vadd.f32 %v1859, %v2030
        %v2032 = vpop.f32.mrb[0].mxu0
        %v2033 = vpop.f32.mrb[0].mxu0
        %v2034 = vadd.f32 %v1859, %v2033
        %v2035 = vpop.f32.mrb[0].mxu0
        %2036 = vmatprep.mubr.bf16.mxu0 0
        %2037 = vmatmul.mubr.bf16.gmra.mrb[0].mxu0 %v1902
        %v2038 = vpop.f32.mrb[0].mxu0
        %v2039 = vadd.f32 %v1859, %v2038
        %v2040 = vpop.f32.mrb[0].mxu0
        %v2041 = vpop.f32.mrb[0].mxu0
        %v2042 = vadd.f32 %v1859, %v2041
        %v2043 = vpop.f32.mrb[0].mxu0
        %2044 = vmatprep.mubr.bf16.mxu0 0
        %2045 = vmatmul.mubr.bf16.gmra.mrb[0].mxu0 %v1905
        %v2046 = vpop.f32.mrb[0].mxu0
        %v2047 = vadd.f32 %v1859, %v2046
        %v2048 = vpop.f32.mrb[0].mxu0
        %v2049 = vpop.f32.mrb[0].mxu0
        %v2050 = vadd.f32 %v1859, %v2049
        %v2051 = vpop.f32.mrb[0].mxu0
        %2052 = vmatprep.mubr.bf16.mxu0 0
        %2053 = vmatmul.mubr.bf16.gmra.mrb[0].mxu0 %v1908
        %v2054 = vpop.f32.mrb[0].mxu0
        %v2055 = vadd.f32 %v1859, %v2054
        %v2056 = vpop.f32.mrb[0].mxu0
        %v2057 = vpop.f32.mrb[0].mxu0
        %v2058 = vadd.f32 %v1859, %v2057
        %v2059 = vpop.f32.mrb[0].mxu0
        %2060 = vmatprep.mubr.bf16.mxu0 0
        %2061 = vmatmul.mubr.bf16.gmra.mrb[0].mxu0 %v1911
        %v2062 = vpop.f32.mrb[0].mxu0
        %v2063 = vadd.f32 %v1859, %v2062
        %v2064 = vpop.f32.mrb[0].mxu0
        %v2065 = vpop.f32.mrb[0].mxu0
        %v2066 = vadd.f32 %v1859, %v2065
        %v2067 = vpop.f32.mrb[0].mxu0
        %2068 = vmatprep.mubr.bf16.mxu0 0
        %2069 = vmatmul.mubr.bf16.gmra.mrb[0].mxu0 %v1914
        %v2070 = vpop.f32.mrb[0].mxu0
        %v2071 = vadd.f32 %v1859, %v2070
        %v2072 = vpop.f32.mrb[0].mxu0
        %v2073 = vpop.f32.mrb[0].mxu0
        %v2074 = vadd.f32 %v1859, %v2073
        %v2075 = vpop.f32.mrb[0].mxu0
        %2076 = vdwg.mxu0
        %v2077 = vmul.f32 %v1951, 0.2
        %v2078 = vmul.f32 %v1954, 0.2
        %v2079 = vmul.f32 %v1959, 0.2
        %v2080 = vmul.f32 %v1962, 0.2
        %v2081 = vmul.f32 %v1967, 0.2
        %v2082 = vmul.f32 %v1970, 0.2
        %v2083 = vmul.f32 %v1975, 0.2
        %v2084 = vmul.f32 %v1978, 0.2
        %v2085 = vmul.f32 %v1983, 0.2
        %v2086 = vmul.f32 %v1986, 0.2
        %v2087 = vmul.f32 %v1991, 0.2
        %v2088 = vmul.f32 %v1994, 0.2
        %v2089 = vmul.f32 %v1999, 0.2
        %v2090 = vmul.f32 %v2002, 0.2
        %v2091 = vmul.f32 %v2007, 0.2
        %v2092 = vmul.f32 %v2010, 0.2
        %v2093 = vmul.f32 %v2015, 0.2
        %v2094 = vmul.f32 %v2018, 0.2
        %v2095 = vmul.f32 %v2023, 0.2
        %v2096 = vmul.f32 %v2026, 0.2
        %v2097 = vmul.f32 %v2031, 0.2
        %v2098 = vmul.f32 %v2034, 0.2
        %v2099 = vmul.f32 %v2039, 0.2
        %v2100 = vmul.f32 %v2042, 0.2
        %v2101 = vmul.f32 %v2047, 0.2
        %v2102 = vmul.f32 %v2050, 0.2
        %v2103 = vmul.f32 %v2055, 0.2
        %v2104 = vmul.f32 %v2058, 0.2
        %v2105 = vmul.f32 %v2063, 0.2
        %v2106 = vmul.f32 %v2066, 0.2
        %v2107 = vmul.f32 %v2071, 0.2
        %v2108 = vmul.f32 %v2074, 0.2
        %v2109 = vmax.f32 %v1951, %v2077
        %v2110 = vmax.f32 %v1954, %v2078
        %v2111 = vmax.f32 %v1959, %v2079
        %v2112 = vmax.f32 %v1962, %v2080
        %v2113 = vmax.f32 %v1967, %v2081
        %v2114 = vmax.f32 %v1970, %v2082
        %v2115 = vmax.f32 %v1975, %v2083
        %v2116 = vmax.f32 %v1978, %v2084
        %v2117 = vmax.f32 %v1983, %v2085
        %v2118 = vmax.f32 %v1986, %v2086
        %v2119 = vmax.f32 %v1991, %v2087
        %v2120 = vmax.f32 %v1994, %v2088
        %v2121 = vmax.f32 %v1999, %v2089
        %v2122 = vmax.f32 %v2002, %v2090
        %v2123 = vmax.f32 %v2007, %v2091
        %v2124 = vmax.f32 %v2010, %v2092
        %v2125 = vmax.f32 %v2015, %v2093
        %v2126 = vmax.f32 %v2018, %v2094
        %v2127 = vmax.f32 %v2023, %v2095
        %v2128 = vmax.f32 %v2026, %v2096
        %v2129 = vmax.f32 %v2031, %v2097
        %v2130 = vmax.f32 %v2034, %v2098
        %v2131 = vmax.f32 %v2039, %v2099
        %v2132 = vmax.f32 %v2042, %v2100
        %v2133 = vmax.f32 %v2047, %v2101
        %v2134 = vmax.f32 %v2050, %v2102
        %v2135 = vmax.f32 %v2055, %v2103
        %v2136 = vmax.f32 %v2058, %v2104
        %v2137 = vmax.f32 %v2063, %v2105
        %v2138 = vmax.f32 %v2066, %v2106
        %v2139 = vmax.f32 %v2071, %v2107
        %v2140 = vmax.f32 %v2074, %v2108
        %v2141 = vpack.c.bf16 %v2110, %v2109
        %v2142 = vpack.c.bf16 %v2112, %v2111
        %v2143 = vpack.c.bf16 %v2114, %v2113
        %v2144 = vpack.c.bf16 %v2116, %v2115
        %v2145 = vpack.c.bf16 %v2118, %v2117
        %v2146 = vpack.c.bf16 %v2120, %v2119
        %v2147 = vpack.c.bf16 %v2122, %v2121
        %v2148 = vpack.c.bf16 %v2124, %v2123
        %v2149 = vpack.c.bf16 %v2126, %v2125
        %v2150 = vpack.c.bf16 %v2128, %v2127
        %v2151 = vpack.c.bf16 %v2130, %v2129
        %v2152 = vpack.c.bf16 %v2132, %v2131
        %v2153 = vpack.c.bf16 %v2134, %v2133
        %v2154 = vpack.c.bf16 %v2136, %v2135
        %v2155 = vpack.c.bf16 %v2138, %v2137
        %v2156 = vpack.c.bf16 %v2140, %v2139
        %v2157 = vld [vmem:[%s10] sm:$0xf]
        %v2158 = vld [vmem:[%s10 + $0x4] sm:$0xf]
        %v2159 = vld [vmem:[%s10 + $0x8] sm:$0xf]
        %v2160 = vld [vmem:[%s10 + $0xc] sm:$0xf]
        %v2161 = vld [vmem:[%s10 + $0x10] sm:$0xf]
        %v2162 = vld [vmem:[%s10 + $0x14] sm:$0xf]
        %v2163 = vld [vmem:[%s10 + $0x18] sm:$0xf]
        %v2164 = vld [vmem:[%s10 + $0x1c] sm:$0xf]
        %v2165 = vld [vmem:[%s10 + $0x20] sm:$0xf]
        %v2166 = vld [vmem:[%s10 + $0x24] sm:$0xf]
        %v2167 = vld [vmem:[%s10 + $0x28] sm:$0xf]
        %v2168 = vld [vmem:[%s10 + $0x2c] sm:$0xf]
        %v2169 = vld [vmem:[%s10 + $0x30] sm:$0xf]
        %v2170 = vld [vmem:[%s10 + $0x34] sm:$0xf]
        %v2171 = vld [vmem:[%s10 + $0x38] sm:$0xf]
        %v2172 = vld [vmem:[%s10 + $0x3c] sm:$0xf]
        %v2173 = vld [vmem:[%s11] sm:$0x1]
        %v2175 = vlaneseq
        %v2176 = vshrl.u32 %v2175, 7
        %v2177 = vsub.s32 0, %v2176
        %v2178 = vrot.slane %v2173, %v2177
        %v2196 = vunpack.c.l.b16 %v2157
        %v2197 = vunpack.c.l.b16 %v2158
        %v2198 = vunpack.c.l.b16 %v2159
        %v2199 = vunpack.c.l.b16 %v2160
        %v2200 = vunpack.c.l.b16 %v2161
        %v2201 = vunpack.c.l.b16 %v2162
        %v2202 = vunpack.c.l.b16 %v2163
        %v2203 = vunpack.c.l.b16 %v2164
        %v2204 = vunpack.c.l.b16 %v2165
        %v2205 = vunpack.c.l.b16 %v2166
        %v2206 = vunpack.c.l.b16 %v2167
        %v2207 = vunpack.c.l.b16 %v2168
        %v2208 = vunpack.c.l.b16 %v2169
        %v2209 = vunpack.c.l.b16 %v2170
        %v2210 = vunpack.c.l.b16 %v2171
        %v2211 = vunpack.c.l.b16 %v2172
        %v2212 = vpack.c.b16 %v2197, %v2196
        %v2213 = vpack.c.b16 %v2199, %v2198
        %v2214 = vpack.c.b16 %v2201, %v2200
        %v2215 = vpack.c.b16 %v2203, %v2202
        %v2216 = vpack.c.b16 %v2205, %v2204
        %v2217 = vpack.c.b16 %v2207, %v2206
        %v2218 = vpack.c.b16 %v2209, %v2208
        %v2219 = vpack.c.b16 %v2211, %v2210
        %2228 = vmatprep.subr.bf16.mxu0 0
        %2229 = vmatpush1.bf16.msra.mxu0 %v2212
        %2230 = vmatprep.subr.bf16.mxu0 0
        %2231 = vmatpush1.bf16.msra.mxu0 %v2213
        %2232 = vmatprep.subr.bf16.mxu0 0
        %2233 = vmatpush1.bf16.msra.mxu0 %v2214
        %2234 = vmatprep.subr.bf16.mxu0 0
        %2235 = vmatpush1.bf16.msra.mxu0 %v2215
        %2236 = vmatprep.subr.bf16.mxu0 0
        %2237 = vmatpush1.bf16.msra.mxu0 %v2216
        %2238 = vmatprep.subr.bf16.mxu0 0
        %2239 = vmatpush1.bf16.msra.mxu0 %v2217
        %2240 = vmatprep.subr.bf16.mxu0 0
        %2241 = vmatpush1.bf16.msra.mxu0 %v2218
        %2242 = vmatprep.subr.bf16.mxu0 0
        %2243 = vmatpush1.bf16.msra.mxu0 %v2219
        %2244 = vmatprep.subr.bf16.mxu0 0
        %2245 = vmatpush1.bf16.msra.mxu0 0
        %2246 = vmatprep.subr.bf16.mxu0 0
        %2247 = vmatpush1.bf16.msra.mxu0 0
        %2248 = vmatprep.subr.bf16.mxu0 0
        %2249 = vmatpush1.bf16.msra.mxu0 0
        %2250 = vmatprep.subr.bf16.mxu0 0
        %2251 = vmatpush1.bf16.msra.mxu0 0
        %2252 = vmatprep.subr.bf16.mxu0 0
        %2253 = vmatpush1.bf16.msra.mxu0 0
        %2254 = vmatprep.subr.bf16.mxu0 0
        %2255 = vmatpush1.bf16.msra.mxu0 0
        %2256 = vmatprep.subr.bf16.mxu0 0
        %2257 = vmatpush1.bf16.msra.mxu0 0
        %2258 = vmatprep.subr.bf16.mxu0 0
        %2259 = vmatpush1.bf16.msra.mxu0 0
        %2260 = vmatprep.mubr.bf16.mxu0 0
        %2261 = vmatmul.mubr.bf16.gmra.mrb[0].mxu0 %v2141
        %v2262 = vpop.f32.mrb[0].mxu0
        %v2263 = vadd.f32 %v2178, %v2262
        %v2264 = vpop.f32.mrb[0].mxu0
        %v2265 = vpop.f32.mrb[0].mxu0
        %v2266 = vadd.f32 %v2178, %v2265
        %v2267 = vpop.f32.mrb[0].mxu0
        %2268 = vmatprep.mubr.bf16.mxu0 0
        %2269 = vmatmul.mubr.bf16.gmra.mrb[0].mxu0 %v2142
        %v2270 = vpop.f32.mrb[0].mxu0
        %v2271 = vadd.f32 %v2178, %v2270
        %v2272 = vpop.f32.mrb[0].mxu0
        %v2273 = vpop.f32.mrb[0].mxu0
        %v2274 = vadd.f32 %v2178, %v2273
        %v2275 = vpop.f32.mrb[0].mxu0
        %2276 = vmatprep.mubr.bf16.mxu0 0
        %2277 = vmatmul.mubr.bf16.gmra.mrb[0].mxu0 %v2143
        %v2278 = vpop.f32.mrb[0].mxu0
        %v2279 = vadd.f32 %v2178, %v2278
        %v2280 = vpop.f32.mrb[0].mxu0
        %v2281 = vpop.f32.mrb[0].mxu0
        %v2282 = vadd.f32 %v2178, %v2281
        %v2283 = vpop.f32.mrb[0].mxu0
        %2284 = vmatprep.mubr.bf16.mxu0 0
        %2285 = vmatmul.mubr.bf16.gmra.mrb[0].mxu0 %v2144
        %v2286 = vpop.f32.mrb[0].mxu0
        %v2287 = vadd.f32 %v2178, %v2286
        %v2288 = vpop.f32.mrb[0].mxu0
        %v2289 = vpop.f32.mrb[0].mxu0
        %v2290 = vadd.f32 %v2178, %v2289
        %v2291 = vpop.f32.mrb[0].mxu0
        %2292 = vmatprep.mubr.bf16.mxu0 0
        %2293 = vmatmul.mubr.bf16.gmra.mrb[0].mxu0 %v2145
        %v2294 = vpop.f32.mrb[0].mxu0
        %v2295 = vadd.f32 %v2178, %v2294
        %v2296 = vpop.f32.mrb[0].mxu0
        %v2297 = vpop.f32.mrb[0].mxu0
        %v2298 = vadd.f32 %v2178, %v2297
        %v2299 = vpop.f32.mrb[0].mxu0
        %2300 = vmatprep.mubr.bf16.mxu0 0
        %2301 = vmatmul.mubr.bf16.gmra.mrb[0].mxu0 %v2146
        %v2302 = vpop.f32.mrb[0].mxu0
        %v2303 = vadd.f32 %v2178, %v2302
        %v2304 = vpop.f32.mrb[0].mxu0
        %v2305 = vpop.f32.mrb[0].mxu0
        %v2306 = vadd.f32 %v2178, %v2305
        %v2307 = vpop.f32.mrb[0].mxu0
        %2308 = vmatprep.mubr.bf16.mxu0 0
        %2309 = vmatmul.mubr.bf16.gmra.mrb[0].mxu0 %v2147
        %v2310 = vpop.f32.mrb[0].mxu0
        %v2311 = vadd.f32 %v2178, %v2310
        %v2312 = vpop.f32.mrb[0].mxu0
        %v2313 = vpop.f32.mrb[0].mxu0
        %v2314 = vadd.f32 %v2178, %v2313
        %v2315 = vpop.f32.mrb[0].mxu0
        %2316 = vmatprep.mubr.bf16.mxu0 0
        %2317 = vmatmul.mubr.bf16.gmra.mrb[0].mxu0 %v2148
        %v2318 = vpop.f32.mrb[0].mxu0
        %v2319 = vadd.f32 %v2178, %v2318
        %v2320 = vpop.f32.mrb[0].mxu0
        %v2321 = vpop.f32.mrb[0].mxu0
        %v2322 = vadd.f32 %v2178, %v2321
        %v2323 = vpop.f32.mrb[0].mxu0
        %2324 = vmatprep.mubr.bf16.mxu0 0
        %2325 = vmatmul.mubr.bf16.gmra.mrb[0].mxu0 %v2149
        %v2326 = vpop.f32.mrb[0].mxu0
        %v2327 = vadd.f32 %v2178, %v2326
        %v2328 = vpop.f32.mrb[0].mxu0
        %v2329 = vpop.f32.mrb[0].mxu0
        %v2330 = vadd.f32 %v2178, %v2329
        %v2331 = vpop.f32.mrb[0].mxu0
        %2332 = vmatprep.mubr.bf16.mxu0 0
        %2333 = vmatmul.mubr.bf16.gmra.mrb[0].mxu0 %v2150
        %v2334 = vpop.f32.mrb[0].mxu0
        %v2335 = vadd.f32 %v2178, %v2334
        %v2336 = vpop.f32.mrb[0].mxu0
        %v2337 = vpop.f32.mrb[0].mxu0
        %v2338 = vadd.f32 %v2178, %v2337
        %v2339 = vpop.f32.mrb[0].mxu0
        %2340 = vmatprep.mubr.bf16.mxu0 0
        %2341 = vmatmul.mubr.bf16.gmra.mrb[0].mxu0 %v2151
        %v2342 = vpop.f32.mrb[0].mxu0
        %v2343 = vadd.f32 %v2178, %v2342
        %v2344 = vpop.f32.mrb[0].mxu0
        %v2345 = vpop.f32.mrb[0].mxu0
        %v2346 = vadd.f32 %v2178, %v2345
        %v2347 = vpop.f32.mrb[0].mxu0
        %2348 = vmatprep.mubr.bf16.mxu0 0
        %2349 = vmatmul.mubr.bf16.gmra.mrb[0].mxu0 %v2152
        %v2350 = vpop.f32.mrb[0].mxu0
        %v2351 = vadd.f32 %v2178, %v2350
        %v2352 = vpop.f32.mrb[0].mxu0
        %v2353 = vpop.f32.mrb[0].mxu0
        %v2354 = vadd.f32 %v2178, %v2353
        %v2355 = vpop.f32.mrb[0].mxu0
        %2356 = vmatprep.mubr.bf16.mxu0 0
        %2357 = vmatmul.mubr.bf16.gmra.mrb[0].mxu0 %v2153
        %v2358 = vpop.f32.mrb[0].mxu0
        %v2359 = vadd.f32 %v2178, %v2358
        %v2360 = vpop.f32.mrb[0].mxu0
        %v2361 = vpop.f32.mrb[0].mxu0
        %v2362 = vadd.f32 %v2178, %v2361
        %v2363 = vpop.f32.mrb[0].mxu0
        %2364 = vmatprep.mubr.bf16.mxu0 0
        %2365 = vmatmul.mubr.bf16.gmra.mrb[0].mxu0 %v2154
        %v2366 = vpop.f32.mrb[0].mxu0
        %v2367 = vadd.f32 %v2178, %v2366
        %v2368 = vpop.f32.mrb[0].mxu0
        %v2369 = vpop.f32.mrb[0].mxu0
        %v2370 = vadd.f32 %v2178, %v2369
        %v2371 = vpop.f32.mrb[0].mxu0
        %2372 = vmatprep.mubr.bf16.mxu0 0
        %2373 = vmatmul.mubr.bf16.gmra.mrb[0].mxu0 %v2155
        %v2374 = vpop.f32.mrb[0].mxu0
        %v2375 = vadd.f32 %v2178, %v2374
        %v2376 = vpop.f32.mrb[0].mxu0
        %v2377 = vpop.f32.mrb[0].mxu0
        %v2378 = vadd.f32 %v2178, %v2377
        %v2379 = vpop.f32.mrb[0].mxu0
        %2380 = vmatprep.mubr.bf16.mxu0 0
        %2381 = vmatmul.mubr.bf16.gmra.mrb[0].mxu0 %v2156
        %v2382 = vpop.f32.mrb[0].mxu0
        %v2383 = vadd.f32 %v2178, %v2382
        %v2384 = vpop.f32.mrb[0].mxu0
        %v2385 = vpop.f32.mrb[0].mxu0
        %v2386 = vadd.f32 %v2178, %v2385
        %v2387 = vpop.f32.mrb[0].mxu0
        %2388 = vdwg.mxu0
        %v2389 = vmul.f32 %v2263, 0.2
        %v2390 = vmul.f32 %v2266, 0.2
        %v2391 = vmul.f32 %v2271, 0.2
        %v2392 = vmul.f32 %v2274, 0.2
        %v2393 = vmul.f32 %v2279, 0.2
        %v2394 = vmul.f32 %v2282, 0.2
        %v2395 = vmul.f32 %v2287, 0.2
        %v2396 = vmul.f32 %v2290, 0.2
        %v2397 = vmul.f32 %v2295, 0.2
        %v2398 = vmul.f32 %v2298, 0.2
        %v2399 = vmul.f32 %v2303, 0.2
        %v2400 = vmul.f32 %v2306, 0.2
        %v2401 = vmul.f32 %v2311, 0.2
        %v2402 = vmul.f32 %v2314, 0.2
        %v2403 = vmul.f32 %v2319, 0.2
        %v2404 = vmul.f32 %v2322, 0.2
        %v2405 = vmul.f32 %v2327, 0.2
        %v2406 = vmul.f32 %v2330, 0.2
        %v2407 = vmul.f32 %v2335, 0.2
        %v2408 = vmul.f32 %v2338, 0.2
        %v2409 = vmul.f32 %v2343, 0.2
        %v2410 = vmul.f32 %v2346, 0.2
        %v2411 = vmul.f32 %v2351, 0.2
        %v2412 = vmul.f32 %v2354, 0.2
        %v2413 = vmul.f32 %v2359, 0.2
        %v2414 = vmul.f32 %v2362, 0.2
        %v2415 = vmul.f32 %v2367, 0.2
        %v2416 = vmul.f32 %v2370, 0.2
        %v2417 = vmul.f32 %v2375, 0.2
        %v2418 = vmul.f32 %v2378, 0.2
        %v2419 = vmul.f32 %v2383, 0.2
        %v2420 = vmul.f32 %v2386, 0.2
        %v2421 = vmax.f32 %v2263, %v2389
        %v2422 = vmax.f32 %v2266, %v2390
        %v2423 = vmax.f32 %v2271, %v2391
        %v2424 = vmax.f32 %v2274, %v2392
        %v2425 = vmax.f32 %v2279, %v2393
        %v2426 = vmax.f32 %v2282, %v2394
        %v2427 = vmax.f32 %v2287, %v2395
        %v2428 = vmax.f32 %v2290, %v2396
        %v2429 = vmax.f32 %v2295, %v2397
        %v2430 = vmax.f32 %v2298, %v2398
        %v2431 = vmax.f32 %v2303, %v2399
        %v2432 = vmax.f32 %v2306, %v2400
        %v2433 = vmax.f32 %v2311, %v2401
        %v2434 = vmax.f32 %v2314, %v2402
        %v2435 = vmax.f32 %v2319, %v2403
        %v2436 = vmax.f32 %v2322, %v2404
        %v2437 = vmax.f32 %v2327, %v2405
        %v2438 = vmax.f32 %v2330, %v2406
        %v2439 = vmax.f32 %v2335, %v2407
        %v2440 = vmax.f32 %v2338, %v2408
        %v2441 = vmax.f32 %v2343, %v2409
        %v2442 = vmax.f32 %v2346, %v2410
        %v2443 = vmax.f32 %v2351, %v2411
        %v2444 = vmax.f32 %v2354, %v2412
        %v2445 = vmax.f32 %v2359, %v2413
        %v2446 = vmax.f32 %v2362, %v2414
        %v2447 = vmax.f32 %v2367, %v2415
        %v2448 = vmax.f32 %v2370, %v2416
        %v2449 = vmax.f32 %v2375, %v2417
        %v2450 = vmax.f32 %v2378, %v2418
        %v2451 = vmax.f32 %v2383, %v2419
        %v2452 = vmax.f32 %v2386, %v2420
        %v2453 = vpack.c.bf16 %v2422, %v2421
        %v2454 = vpack.c.bf16 %v2424, %v2423
        %v2455 = vpack.c.bf16 %v2426, %v2425
        %v2456 = vpack.c.bf16 %v2428, %v2427
        %v2457 = vpack.c.bf16 %v2430, %v2429
        %v2458 = vpack.c.bf16 %v2432, %v2431
        %v2459 = vpack.c.bf16 %v2434, %v2433
        %v2460 = vpack.c.bf16 %v2436, %v2435
        %v2461 = vpack.c.bf16 %v2438, %v2437
        %v2462 = vpack.c.bf16 %v2440, %v2439
        %v2463 = vpack.c.bf16 %v2442, %v2441
        %v2464 = vpack.c.bf16 %v2444, %v2443
        %v2465 = vpack.c.bf16 %v2446, %v2445
        %v2466 = vpack.c.bf16 %v2448, %v2447
        %v2467 = vpack.c.bf16 %v2450, %v2449
        %v2468 = vpack.c.bf16 %v2452, %v2451
        %v2469 = vld [vmem:[%s12] sm:$0xff]
        %v2470 = vld [vmem:[%s12 + $0x8] sm:$0xff]
        %v2471 = vld [vmem:[%s12 + $0x10] sm:$0xff]
        %v2472 = vld [vmem:[%s12 + $0x18] sm:$0xff]
        %v2473 = vld [vmem:[%s12 + $0x20] sm:$0xff]
        %v2474 = vld [vmem:[%s12 + $0x28] sm:$0xff]
        %v2475 = vld [vmem:[%s12 + $0x30] sm:$0xff]
        %v2476 = vld [vmem:[%s12 + $0x38] sm:$0xff]
        %v2477 = vld [vmem:[%s12 + $0x40] sm:$0xff]
        %v2478 = vld [vmem:[%s12 + $0x48] sm:$0xff]
        %v2479 = vld [vmem:[%s12 + $0x50] sm:$0xff]
        %v2480 = vld [vmem:[%s12 + $0x58] sm:$0xff]
        %v2481 = vld [vmem:[%s12 + $0x60] sm:$0xff]
        %v2482 = vld [vmem:[%s12 + $0x68] sm:$0xff]
        %v2483 = vld [vmem:[%s12 + $0x70] sm:$0xff]
        %v2484 = vld [vmem:[%s12 + $0x78] sm:$0xff]
        %v2485 = vld [vmem:[%s13] sm:$0x3]
        %v2487 = vlaneseq
        %v2488 = vshrl.u32 %v2487, 7
        %v2489 = vsub.s32 0, %v2488
        %v2490 = vrot.slane %v2485, %v2489
        %v2491 = vlaneseq
        %v2492 = vshrl.u32 %v2491, 7
        %v2493 = vsub.s32 1, %v2492
        %v2494 = vrot.slane %v2485, %v2493
        %v2513 = vunpack.c.l.b16 %v2469
        %v2514 = vunpack.c.h.b16 %v2469
        %v2515 = vunpack.c.l.b16 %v2470
        %v2516 = vunpack.c.h.b16 %v2470
        %v2517 = vunpack.c.l.b16 %v2471
        %v2518 = vunpack.c.h.b16 %v2471
        %v2519 = vunpack.c.l.b16 %v2472
        %v2520 = vunpack.c.h.b16 %v2472
        %v2521 = vunpack.c.l.b16 %v2473
        %v2522 = vunpack.c.h.b16 %v2473
        %v2523 = vunpack.c.l.b16 %v2474
        %v2524 = vunpack.c.h.b16 %v2474
        %v2525 = vunpack.c.l.b16 %v2475
        %v2526 = vunpack.c.h.b16 %v2475
        %v2527 = vunpack.c.l.b16 %v2476
        %v2528 = vunpack.c.h.b16 %v2476
        %v2529 = vunpack.c.l.b16 %v2477
        %v2530 = vunpack.c.h.b16 %v2477
        %v2531 = vunpack.c.l.b16 %v2478
        %v2532 = vunpack.c.h.b16 %v2478
        %v2533 = vunpack.c.l.b16 %v2479
        %v2534 = vunpack.c.h.b16 %v2479
        %v2535 = vunpack.c.l.b16 %v2480
        %v2536 = vunpack.c.h.b16 %v2480
        %v2537 = vunpack.c.l.b16 %v2481
        %v2538 = vunpack.c.h.b16 %v2481
        %v2539 = vunpack.c.l.b16 %v2482
        %v2540 = vunpack.c.h.b16 %v2482
        %v2541 = vunpack.c.l.b16 %v2483
        %v2542 = vunpack.c.h.b16 %v2483
        %v2543 = vunpack.c.l.b16 %v2484
        %v2544 = vunpack.c.h.b16 %v2484
        %v2545 = vpack.c.b16 %v2515, %v2513
        %v2546 = vpack.c.b16 %v2516, %v2514
        %v2547 = vpack.c.b16 %v2519, %v2517
        %v2548 = vpack.c.b16 %v2520, %v2518
        %v2549 = vpack.c.b16 %v2523, %v2521
        %v2550 = vpack.c.b16 %v2524, %v2522
        %v2551 = vpack.c.b16 %v2527, %v2525
        %v2552 = vpack.c.b16 %v2528, %v2526
        %v2553 = vpack.c.b16 %v2531, %v2529
        %v2554 = vpack.c.b16 %v2532, %v2530
        %v2555 = vpack.c.b16 %v2535, %v2533
        %v2556 = vpack.c.b16 %v2536, %v2534
        %v2557 = vpack.c.b16 %v2539, %v2537
        %v2558 = vpack.c.b16 %v2540, %v2538
        %v2559 = vpack.c.b16 %v2543, %v2541
        %v2560 = vpack.c.b16 %v2544, %v2542
        %2577 = vmatprep.subr.bf16.mxu0 %v2546
        %2578 = vmatpush1.bf16.msra.mxu0 %v2545
        %2579 = vmatprep.subr.bf16.mxu0 %v2548
        %2580 = vmatpush1.bf16.msra.mxu0 %v2547
        %2581 = vmatprep.subr.bf16.mxu0 %v2550
        %2582 = vmatpush1.bf16.msra.mxu0 %v2549
        %2583 = vmatprep.subr.bf16.mxu0 %v2552
        %2584 = vmatpush1.bf16.msra.mxu0 %v2551
        %2585 = vmatprep.subr.bf16.mxu0 %v2554
        %2586 = vmatpush1.bf16.msra.mxu0 %v2553
        %2587 = vmatprep.subr.bf16.mxu0 %v2556
        %2588 = vmatpush1.bf16.msra.mxu0 %v2555
        %2589 = vmatprep.subr.bf16.mxu0 %v2558
        %2590 = vmatpush1.bf16.msra.mxu0 %v2557
        %2591 = vmatprep.subr.bf16.mxu0 %v2560
        %2592 = vmatpush1.bf16.msra.mxu0 %v2559
        %2593 = vmatprep.subr.bf16.mxu0 0
        %2594 = vmatpush1.bf16.msra.mxu0 0
        %2595 = vmatprep.subr.bf16.mxu0 0
        %2596 = vmatpush1.bf16.msra.mxu0 0
        %2597 = vmatprep.subr.bf16.mxu0 0
        %2598 = vmatpush1.bf16.msra.mxu0 0
        %2599 = vmatprep.subr.bf16.mxu0 0
        %2600 = vmatpush1.bf16.msra.mxu0 0
        %2601 = vmatprep.subr.bf16.mxu0 0
        %2602 = vmatpush1.bf16.msra.mxu0 0
        %2603 = vmatprep.subr.bf16.mxu0 0
        %2604 = vmatpush1.bf16.msra.mxu0 0
        %2605 = vmatprep.subr.bf16.mxu0 0
        %2606 = vmatpush1.bf16.msra.mxu0 0
        %2607 = vmatprep.subr.bf16.mxu0 0
        %2608 = vmatpush1.bf16.msra.mxu0 0
        %2609 = vmatprep.mubr.bf16.mxu0 0
        %2610 = vmatmul.mubr.bf16.gmra.mrb[0].mxu0 %v2453
        %v2611 = vpop.f32.mrb[0].mxu0
        %v2612 = vadd.f32 %v2490, %v2611
        %v2613 = vpop.f32.mrb[0].mxu0
        %v2614 = vadd.f32 %v2494, %v2613
        %v2615 = vpop.f32.mrb[0].mxu0
        %v2616 = vadd.f32 %v2490, %v2615
        %v2617 = vpop.f32.mrb[0].mxu0
        %v2618 = vadd.f32 %v2494, %v2617
        %2619 = vmatprep.mubr.bf16.mxu0 0
        %2620 = vmatmul.mubr.bf16.gmra.mrb[0].mxu0 %v2454
        %v2621 = vpop.f32.mrb[0].mxu0
        %v2622 = vadd.f32 %v2490, %v2621
        %v2623 = vpop.f32.mrb[0].mxu0
        %v2624 = vadd.f32 %v2494, %v2623
        %v2625 = vpop.f32.mrb[0].mxu0
        %v2626 = vadd.f32 %v2490, %v2625
        %v2627 = vpop.f32.mrb[0].mxu0
        %v2628 = vadd.f32 %v2494, %v2627
        %2629 = vmatprep.mubr.bf16.mxu0 0
        %2630 = vmatmul.mubr.bf16.gmra.mrb[0].mxu0 %v2455
        %v2631 = vpop.f32.mrb[0].mxu0
        %v2632 = vadd.f32 %v2490, %v2631
        %v2633 = vpop.f32.mrb[0].mxu0
        %v2634 = vadd.f32 %v2494, %v2633
        %v2635 = vpop.f32.mrb[0].mxu0
        %v2636 = vadd.f32 %v2490, %v2635
        %v2637 = vpop.f32.mrb[0].mxu0
        %v2638 = vadd.f32 %v2494, %v2637
        %2639 = vmatprep.mubr.bf16.mxu0 0
        %2640 = vmatmul.mubr.bf16.gmra.mrb[0].mxu0 %v2456
        %v2641 = vpop.f32.mrb[0].mxu0
        %v2642 = vadd.f32 %v2490, %v2641
        %v2643 = vpop.f32.mrb[0].mxu0
        %v2644 = vadd.f32 %v2494, %v2643
        %v2645 = vpop.f32.mrb[0].mxu0
        %v2646 = vadd.f32 %v2490, %v2645
        %v2647 = vpop.f32.mrb[0].mxu0
        %v2648 = vadd.f32 %v2494, %v2647
        %2649 = vmatprep.mubr.bf16.mxu0 0
        %2650 = vmatmul.mubr.bf16.gmra.mrb[0].mxu0 %v2457
        %v2651 = vpop.f32.mrb[0].mxu0
        %v2652 = vadd.f32 %v2490, %v2651
        %v2653 = vpop.f32.mrb[0].mxu0
        %v2654 = vadd.f32 %v2494, %v2653
        %v2655 = vpop.f32.mrb[0].mxu0
        %v2656 = vadd.f32 %v2490, %v2655
        %v2657 = vpop.f32.mrb[0].mxu0
        %v2658 = vadd.f32 %v2494, %v2657
        %2659 = vmatprep.mubr.bf16.mxu0 0
        %2660 = vmatmul.mubr.bf16.gmra.mrb[0].mxu0 %v2458
        %v2661 = vpop.f32.mrb[0].mxu0
        %v2662 = vadd.f32 %v2490, %v2661
        %v2663 = vpop.f32.mrb[0].mxu0
        %v2664 = vadd.f32 %v2494, %v2663
        %v2665 = vpop.f32.mrb[0].mxu0
        %v2666 = vadd.f32 %v2490, %v2665
        %v2667 = vpop.f32.mrb[0].mxu0
        %v2668 = vadd.f32 %v2494, %v2667
        %2669 = vmatprep.mubr.bf16.mxu0 0
        %2670 = vmatmul.mubr.bf16.gmra.mrb[0].mxu0 %v2459
        %v2671 = vpop.f32.mrb[0].mxu0
        %v2672 = vadd.f32 %v2490, %v2671
        %v2673 = vpop.f32.mrb[0].mxu0
        %v2674 = vadd.f32 %v2494, %v2673
        %v2675 = vpop.f32.mrb[0].mxu0
        %v2676 = vadd.f32 %v2490, %v2675
        %v2677 = vpop.f32.mrb[0].mxu0
        %v2678 = vadd.f32 %v2494, %v2677
        %2679 = vmatprep.mubr.bf16.mxu0 0
        %2680 = vmatmul.mubr.bf16.gmra.mrb[0].mxu0 %v2460
        %v2681 = vpop.f32.mrb[0].mxu0
        %v2682 = vadd.f32 %v2490, %v2681
        %v2683 = vpop.f32.mrb[0].mxu0
        %v2684 = vadd.f32 %v2494, %v2683
        %v2685 = vpop.f32.mrb[0].mxu0
        %v2686 = vadd.f32 %v2490, %v2685
        %v2687 = vpop.f32.mrb[0].mxu0
        %v2688 = vadd.f32 %v2494, %v2687
        %2689 = vmatprep.mubr.bf16.mxu0 0
        %2690 = vmatmul.mubr.bf16.gmra.mrb[0].mxu0 %v2461
        %v2691 = vpop.f32.mrb[0].mxu0
        %v2692 = vadd.f32 %v2490, %v2691
        %v2693 = vpop.f32.mrb[0].mxu0
        %v2694 = vadd.f32 %v2494, %v2693
        %v2695 = vpop.f32.mrb[0].mxu0
        %v2696 = vadd.f32 %v2490, %v2695
        %v2697 = vpop.f32.mrb[0].mxu0
        %v2698 = vadd.f32 %v2494, %v2697
        %2699 = vmatprep.mubr.bf16.mxu0 0
        %2700 = vmatmul.mubr.bf16.gmra.mrb[0].mxu0 %v2462
        %v2701 = vpop.f32.mrb[0].mxu0
        %v2702 = vadd.f32 %v2490, %v2701
        %v2703 = vpop.f32.mrb[0].mxu0
        %v2704 = vadd.f32 %v2494, %v2703
        %v2705 = vpop.f32.mrb[0].mxu0
        %v2706 = vadd.f32 %v2490, %v2705
        %v2707 = vpop.f32.mrb[0].mxu0
        %v2708 = vadd.f32 %v2494, %v2707
        %2709 = vmatprep.mubr.bf16.mxu0 0
        %2710 = vmatmul.mubr.bf16.gmra.mrb[0].mxu0 %v2463
        %v2711 = vpop.f32.mrb[0].mxu0
        %v2712 = vadd.f32 %v2490, %v2711
        %v2713 = vpop.f32.mrb[0].mxu0
        %v2714 = vadd.f32 %v2494, %v2713
        %v2715 = vpop.f32.mrb[0].mxu0
        %v2716 = vadd.f32 %v2490, %v2715
        %v2717 = vpop.f32.mrb[0].mxu0
        %v2718 = vadd.f32 %v2494, %v2717
        %2719 = vmatprep.mubr.bf16.mxu0 0
        %2720 = vmatmul.mubr.bf16.gmra.mrb[0].mxu0 %v2464
        %v2721 = vpop.f32.mrb[0].mxu0
        %v2722 = vadd.f32 %v2490, %v2721
        %v2723 = vpop.f32.mrb[0].mxu0
        %v2724 = vadd.f32 %v2494, %v2723
        %v2725 = vpop.f32.mrb[0].mxu0
        %v2726 = vadd.f32 %v2490, %v2725
        %v2727 = vpop.f32.mrb[0].mxu0
        %v2728 = vadd.f32 %v2494, %v2727
        %2729 = vmatprep.mubr.bf16.mxu0 0
        %2730 = vmatmul.mubr.bf16.gmra.mrb[0].mxu0 %v2465
        %v2731 = vpop.f32.mrb[0].mxu0
        %v2732 = vadd.f32 %v2490, %v2731
        %v2733 = vpop.f32.mrb[0].mxu0
        %v2734 = vadd.f32 %v2494, %v2733
        %v2735 = vpop.f32.mrb[0].mxu0
        %v2736 = vadd.f32 %v2490, %v2735
        %v2737 = vpop.f32.mrb[0].mxu0
        %v2738 = vadd.f32 %v2494, %v2737
        %2739 = vmatprep.mubr.bf16.mxu0 0
        %2740 = vmatmul.mubr.bf16.gmra.mrb[0].mxu0 %v2466
        %v2741 = vpop.f32.mrb[0].mxu0
        %v2742 = vadd.f32 %v2490, %v2741
        %v2743 = vpop.f32.mrb[0].mxu0
        %v2744 = vadd.f32 %v2494, %v2743
        %v2745 = vpop.f32.mrb[0].mxu0
        %v2746 = vadd.f32 %v2490, %v2745
        %v2747 = vpop.f32.mrb[0].mxu0
        %v2748 = vadd.f32 %v2494, %v2747
        %2749 = vmatprep.mubr.bf16.mxu0 0
        %2750 = vmatmul.mubr.bf16.gmra.mrb[0].mxu0 %v2467
        %v2751 = vpop.f32.mrb[0].mxu0
        %v2752 = vadd.f32 %v2490, %v2751
        %v2753 = vpop.f32.mrb[0].mxu0
        %v2754 = vadd.f32 %v2494, %v2753
        %v2755 = vpop.f32.mrb[0].mxu0
        %v2756 = vadd.f32 %v2490, %v2755
        %v2757 = vpop.f32.mrb[0].mxu0
        %v2758 = vadd.f32 %v2494, %v2757
        %2759 = vmatprep.mubr.bf16.mxu0 0
        %2760 = vmatmul.mubr.bf16.gmra.mrb[0].mxu0 %v2468
        %v2761 = vpop.f32.mrb[0].mxu0
        %v2762 = vadd.f32 %v2490, %v2761
        %v2763 = vpop.f32.mrb[0].mxu0
        %v2764 = vadd.f32 %v2494, %v2763
        %v2765 = vpop.f32.mrb[0].mxu0
        %v2766 = vadd.f32 %v2490, %v2765
        %v2767 = vpop.f32.mrb[0].mxu0
        %v2768 = vadd.f32 %v2494, %v2767
        %2769 = vdwg.mxu0
        %v2770 = vsub.f32 0.0, %v2612
        %v2771 = vsub.f32 0.0, %v2614
        %v2772 = vsub.f32 0.0, %v2616
        %v2773 = vsub.f32 0.0, %v2618
        %v2774 = vsub.f32 0.0, %v2622
        %v2775 = vsub.f32 0.0, %v2624
        %v2776 = vsub.f32 0.0, %v2626
        %v2777 = vsub.f32 0.0, %v2628
        %v2778 = vsub.f32 0.0, %v2632
        %v2779 = vsub.f32 0.0, %v2634
        %v2780 = vsub.f32 0.0, %v2636
        %v2781 = vsub.f32 0.0, %v2638
        %v2782 = vsub.f32 0.0, %v2642
        %v2783 = vsub.f32 0.0, %v2644
        %v2784 = vsub.f32 0.0, %v2646
        %v2785 = vsub.f32 0.0, %v2648
        %v2786 = vsub.f32 0.0, %v2652
        %v2787 = vsub.f32 0.0, %v2654
        %v2788 = vsub.f32 0.0, %v2656
        %v2789 = vsub.f32 0.0, %v2658
        %v2790 = vsub.f32 0.0, %v2662
        %v2791 = vsub.f32 0.0, %v2664
        %v2792 = vsub.f32 0.0, %v2666
        %v2793 = vsub.f32 0.0, %v2668
        %v2794 = vsub.f32 0.0, %v2672
        %v2795 = vsub.f32 0.0, %v2674
        %v2796 = vsub.f32 0.0, %v2676
        %v2797 = vsub.f32 0.0, %v2678
        %v2798 = vsub.f32 0.0, %v2682
        %v2799 = vsub.f32 0.0, %v2684
        %v2800 = vsub.f32 0.0, %v2686
        %v2801 = vsub.f32 0.0, %v2688
        %v2802 = vsub.f32 0.0, %v2692
        %v2803 = vsub.f32 0.0, %v2694
        %v2804 = vsub.f32 0.0, %v2696
        %v2805 = vsub.f32 0.0, %v2698
        %v2806 = vsub.f32 0.0, %v2702
        %v2807 = vsub.f32 0.0, %v2704
        %v2808 = vsub.f32 0.0, %v2706
        %v2809 = vsub.f32 0.0, %v2708
        %v2810 = vsub.f32 0.0, %v2712
        %v2811 = vsub.f32 0.0, %v2714
        %v2812 = vsub.f32 0.0, %v2716
        %v2813 = vsub.f32 0.0, %v2718
        %v2814 = vsub.f32 0.0, %v2722
        %v2815 = vsub.f32 0.0, %v2724
        %v2816 = vsub.f32 0.0, %v2726
        %v2817 = vsub.f32 0.0, %v2728
        %v2818 = vsub.f32 0.0, %v2732
        %v2819 = vsub.f32 0.0, %v2734
        %v2820 = vsub.f32 0.0, %v2736
        %v2821 = vsub.f32 0.0, %v2738
        %v2822 = vsub.f32 0.0, %v2742
        %v2823 = vsub.f32 0.0, %v2744
        %v2824 = vsub.f32 0.0, %v2746
        %v2825 = vsub.f32 0.0, %v2748
        %v2826 = vsub.f32 0.0, %v2752
        %v2827 = vsub.f32 0.0, %v2754
        %v2828 = vsub.f32 0.0, %v2756
        %v2829 = vsub.f32 0.0, %v2758
        %v2830 = vsub.f32 0.0, %v2762
        %v2831 = vsub.f32 0.0, %v2764
        %v2832 = vsub.f32 0.0, %v2766
        %v2833 = vsub.f32 0.0, %v2768
        %v2834 = vmul.f32 %v2770, 1.442695
        %v2835 = vpow.pop %v2834
        %v2836 = vmul.f32 %v2771, 1.442695
        %v2837 = vpow.pop %v2836
        %v2838 = vmul.f32 %v2772, 1.442695
        %v2839 = vpow.pop %v2838
        %v2840 = vmul.f32 %v2773, 1.442695
        %v2841 = vpow.pop %v2840
        %v2842 = vmul.f32 %v2774, 1.442695
        %v2843 = vpow.pop %v2842
        %v2844 = vmul.f32 %v2775, 1.442695
        %v2845 = vpow.pop %v2844
        %v2846 = vmul.f32 %v2776, 1.442695
        %v2847 = vpow.pop %v2846
        %v2848 = vmul.f32 %v2777, 1.442695
        %v2849 = vpow.pop %v2848
        %v2850 = vmul.f32 %v2778, 1.442695
        %v2851 = vpow.pop %v2850
        %v2852 = vmul.f32 %v2779, 1.442695
        %v2853 = vpow.pop %v2852
        %v2854 = vmul.f32 %v2780, 1.442695
        %v2855 = vpow.pop %v2854
        %v2856 = vmul.f32 %v2781, 1.442695
        %v2857 = vpow.pop %v2856
        %v2858 = vmul.f32 %v2782, 1.442695
        %v2859 = vpow.pop %v2858
        %v2860 = vmul.f32 %v2783, 1.442695
        %v2861 = vpow.pop %v2860
        %v2862 = vmul.f32 %v2784, 1.442695
        %v2863 = vpow.pop %v2862
        %v2864 = vmul.f32 %v2785, 1.442695
        %v2865 = vpow.pop %v2864
        %v2866 = vmul.f32 %v2786, 1.442695
        %v2867 = vpow.pop %v2866
        %v2868 = vmul.f32 %v2787, 1.442695
        %v2869 = vpow.pop %v2868
        %v2870 = vmul.f32 %v2788, 1.442695
        %v2871 = vpow.pop %v2870
        %v2872 = vmul.f32 %v2789, 1.442695
        %v2873 = vpow.pop %v2872
        %v2874 = vmul.f32 %v2790, 1.442695
        %v2875 = vpow.pop %v2874
        %v2876 = vmul.f32 %v2791, 1.442695
        %v2877 = vpow.pop %v2876
        %v2878 = vmul.f32 %v2792, 1.442695
        %v2879 = vpow.pop %v2878
        %v2880 = vmul.f32 %v2793, 1.442695
        %v2881 = vpow.pop %v2880
        %v2882 = vmul.f32 %v2794, 1.442695
        %v2883 = vpow.pop %v2882
        %v2884 = vmul.f32 %v2795, 1.442695
        %v2885 = vpow.pop %v2884
        %v2886 = vmul.f32 %v2796, 1.442695
        %v2887 = vpow.pop %v2886
        %v2888 = vmul.f32 %v2797, 1.442695
        %v2889 = vpow.pop %v2888
        %v2890 = vmul.f32 %v2798, 1.442695
        %v2891 = vpow.pop %v2890
        %v2892 = vmul.f32 %v2799, 1.442695
        %v2893 = vpow.pop %v2892
        %v2894 = vmul.f32 %v2800, 1.442695
        %v2895 = vpow.pop %v2894
        %v2896 = vmul.f32 %v2801, 1.442695
        %v2897 = vpow.pop %v2896
        %v2898 = vmul.f32 %v2802, 1.442695
        %v2899 = vpow.pop %v2898
        %v2900 = vmul.f32 %v2803, 1.442695
        %v2901 = vpow.pop %v2900
        %v2902 = vmul.f32 %v2804, 1.442695
        %v2903 = vpow.pop %v2902
        %v2904 = vmul.f32 %v2805, 1.442695
        %v2905 = vpow.pop %v2904
        %v2906 = vmul.f32 %v2806, 1.442695
        %v2907 = vpow.pop %v2906
        %v2908 = vmul.f32 %v2807, 1.442695
        %v2909 = vpow.pop %v2908
        %v2910 = vmul.f32 %v2808, 1.442695
        %v2911 = vpow.pop %v2910
        %v2912 = vmul.f32 %v2809, 1.442695
        %v2913 = vpow.pop %v2912
        %v2914 = vmul.f32 %v2810, 1.442695
        %v2915 = vpow.pop %v2914
        %v2916 = vmul.f32 %v2811, 1.442695
        %v2917 = vpow.pop %v2916
        %v2918 = vmul.f32 %v2812, 1.442695
        %v2919 = vpow.pop %v2918
        %v2920 = vmul.f32 %v2813, 1.442695
        %v2921 = vpow.pop %v2920
        %v2922 = vmul.f32 %v2814, 1.442695
        %v2923 = vpow.pop %v2922
        %v2924 = vmul.f32 %v2815, 1.442695
        %v2925 = vpow.pop %v2924
        %v2926 = vmul.f32 %v2816, 1.442695
        %v2927 = vpow.pop %v2926
        %v2928 = vmul.f32 %v2817, 1.442695
        %v2929 = vpow.pop %v2928
        %v2930 = vmul.f32 %v2818, 1.442695
        %v2931 = vpow.pop %v2930
        %v2932 = vmul.f32 %v2819, 1.442695
        %v2933 = vpow.pop %v2932
        %v2934 = vmul.f32 %v2820, 1.442695
        %v2935 = vpow.pop %v2934
        %v2936 = vmul.f32 %v2821, 1.442695
        %v2937 = vpow.pop %v2936
        %v2938 = vmul.f32 %v2822, 1.442695
        %v2939 = vpow.pop %v2938
        %v2940 = vmul.f32 %v2823, 1.442695
        %v2941 = vpow.pop %v2940
        %v2942 = vmul.f32 %v2824, 1.442695
        %v2943 = vpow.pop %v2942
        %v2944 = vmul.f32 %v2825, 1.442695
        %v2945 = vpow.pop %v2944
        %v2946 = vmul.f32 %v2826, 1.442695
        %v2947 = vpow.pop %v2946
        %v2948 = vmul.f32 %v2827, 1.442695
        %v2949 = vpow.pop %v2948
        %v2950 = vmul.f32 %v2828, 1.442695
        %v2951 = vpow.pop %v2950
        %v2952 = vmul.f32 %v2829, 1.442695
        %v2953 = vpow.pop %v2952
        %v2954 = vmul.f32 %v2830, 1.442695
        %v2955 = vpow.pop %v2954
        %v2956 = vmul.f32 %v2831, 1.442695
        %v2957 = vpow.pop %v2956
        %v2958 = vmul.f32 %v2832, 1.442695
        %v2959 = vpow.pop %v2958
        %v2960 = vmul.f32 %v2833, 1.442695
        %v2961 = vpow.pop %v2960
        %v2962 = vadd.f32 %v2835, 1.0
        %v2963 = vadd.f32 %v2837, 1.0
        %v2964 = vadd.f32 %v2839, 1.0
        %v2965 = vadd.f32 %v2841, 1.0
        %v2966 = vadd.f32 %v2843, 1.0
        %v2967 = vadd.f32 %v2845, 1.0
        %v2968 = vadd.f32 %v2847, 1.0
        %v2969 = vadd.f32 %v2849, 1.0
        %v2970 = vadd.f32 %v2851, 1.0
        %v2971 = vadd.f32 %v2853, 1.0
        %v2972 = vadd.f32 %v2855, 1.0
        %v2973 = vadd.f32 %v2857, 1.0
        %v2974 = vadd.f32 %v2859, 1.0
        %v2975 = vadd.f32 %v2861, 1.0
        %v2976 = vadd.f32 %v2863, 1.0
        %v2977 = vadd.f32 %v2865, 1.0
        %v2978 = vadd.f32 %v2867, 1.0
        %v2979 = vadd.f32 %v2869, 1.0
        %v2980 = vadd.f32 %v2871, 1.0
        %v2981 = vadd.f32 %v2873, 1.0
        %v2982 = vadd.f32 %v2875, 1.0
        %v2983 = vadd.f32 %v2877, 1.0
        %v2984 = vadd.f32 %v2879, 1.0
        %v2985 = vadd.f32 %v2881, 1.0
        %v2986 = vadd.f32 %v2883, 1.0
        %v2987 = vadd.f32 %v2885, 1.0
        %v2988 = vadd.f32 %v2887, 1.0
        %v2989 = vadd.f32 %v2889, 1.0
        %v2990 = vadd.f32 %v2891, 1.0
        %v2991 = vadd.f32 %v2893, 1.0
        %v2992 = vadd.f32 %v2895, 1.0
        %v2993 = vadd.f32 %v2897, 1.0
        %v2994 = vadd.f32 %v2899, 1.0
        %v2995 = vadd.f32 %v2901, 1.0
        %v2996 = vadd.f32 %v2903, 1.0
        %v2997 = vadd.f32 %v2905, 1.0
        %v2998 = vadd.f32 %v2907, 1.0
        %v2999 = vadd.f32 %v2909, 1.0
        %v3000 = vadd.f32 %v2911, 1.0
        %v3001 = vadd.f32 %v2913, 1.0
        %v3002 = vadd.f32 %v2915, 1.0
        %v3003 = vadd.f32 %v2917, 1.0
        %v3004 = vadd.f32 %v2919, 1.0
        %v3005 = vadd.f32 %v2921, 1.0
        %v3006 = vadd.f32 %v2923, 1.0
        %v3007 = vadd.f32 %v2925, 1.0
        %v3008 = vadd.f32 %v2927, 1.0
        %v3009 = vadd.f32 %v2929, 1.0
        %v3010 = vadd.f32 %v2931, 1.0
        %v3011 = vadd.f32 %v2933, 1.0
        %v3012 = vadd.f32 %v2935, 1.0
        %v3013 = vadd.f32 %v2937, 1.0
        %v3014 = vadd.f32 %v2939, 1.0
        %v3015 = vadd.f32 %v2941, 1.0
        %v3016 = vadd.f32 %v2943, 1.0
        %v3017 = vadd.f32 %v2945, 1.0
        %v3018 = vadd.f32 %v2947, 1.0
        %v3019 = vadd.f32 %v2949, 1.0
        %v3020 = vadd.f32 %v2951, 1.0
        %v3021 = vadd.f32 %v2953, 1.0
        %v3022 = vadd.f32 %v2955, 1.0
        %v3023 = vadd.f32 %v2957, 1.0
        %v3024 = vadd.f32 %v2959, 1.0
        %v3025 = vadd.f32 %v2961, 1.0
        %v3026 = vrcp.pop %v2962
        %v3027 = vrcp.pop %v2963
        %v3028 = vrcp.pop %v2964
        %v3029 = vrcp.pop %v2965
        %v3030 = vrcp.pop %v2966
        %v3031 = vrcp.pop %v2967
        %v3032 = vrcp.pop %v2968
        %v3033 = vrcp.pop %v2969
        %v3034 = vrcp.pop %v2970
        %v3035 = vrcp.pop %v2971
        %v3036 = vrcp.pop %v2972
        %v3037 = vrcp.pop %v2973
        %v3038 = vrcp.pop %v2974
        %v3039 = vrcp.pop %v2975
        %v3040 = vrcp.pop %v2976
        %v3041 = vrcp.pop %v2977
        %v3042 = vrcp.pop %v2978
        %v3043 = vrcp.pop %v2979
        %v3044 = vrcp.pop %v2980
        %v3045 = vrcp.pop %v2981
        %v3046 = vrcp.pop %v2982
        %v3047 = vrcp.pop %v2983
        %v3048 = vrcp.pop %v2984
        %v3049 = vrcp.pop %v2985
        %v3050 = vrcp.pop %v2986
        %v3051 = vrcp.pop %v2987
        %v3052 = vrcp.pop %v2988
        %v3053 = vrcp.pop %v2989
        %v3054 = vrcp.pop %v2990
        %v3055 = vrcp.pop %v2991
        %v3056 = vrcp.pop %v2992
        %v3057 = vrcp.pop %v2993
        %v3058 = vrcp.pop %v2994
        %v3059 = vrcp.pop %v2995
        %v3060 = vrcp.pop %v2996
        %v3061 = vrcp.pop %v2997
        %v3062 = vrcp.pop %v2998
        %v3063 = vrcp.pop %v2999
        %v3064 = vrcp.pop %v3000
        %v3065 = vrcp.pop %v3001
        %v3066 = vrcp.pop %v3002
        %v3067 = vrcp.pop %v3003
        %v3068 = vrcp.pop %v3004
        %v3069 = vrcp.pop %v3005
        %v3070 = vrcp.pop %v3006
        %v3071 = vrcp.pop %v3007
        %v3072 = vrcp.pop %v3008
        %v3073 = vrcp.pop %v3009
        %v3074 = vrcp.pop %v3010
        %v3075 = vrcp.pop %v3011
        %v3076 = vrcp.pop %v3012
        %v3077 = vrcp.pop %v3013
        %v3078 = vrcp.pop %v3014
        %v3079 = vrcp.pop %v3015
        %v3080 = vrcp.pop %v3016
        %v3081 = vrcp.pop %v3017
        %v3082 = vrcp.pop %v3018
        %v3083 = vrcp.pop %v3019
        %v3084 = vrcp.pop %v3020
        %v3085 = vrcp.pop %v3021
        %v3086 = vrcp.pop %v3022
        %v3087 = vrcp.pop %v3023
        %v3088 = vrcp.pop %v3024
        %v3089 = vrcp.pop %v3025
        %v3090 = vpack.c.bf16 %v3028, %v3026
        %v3091 = vpack.c.bf16 %v3029, %v3027
        %v3092 = vpack.c.bf16 %v3032, %v3030
        %v3093 = vpack.c.bf16 %v3033, %v3031
        %v3094 = vpack.c.bf16 %v3036, %v3034
        %v3095 = vpack.c.bf16 %v3037, %v3035
        %v3096 = vpack.c.bf16 %v3040, %v3038
        %v3097 = vpack.c.bf16 %v3041, %v3039
        %v3098 = vpack.c.bf16 %v3044, %v3042
        %v3099 = vpack.c.bf16 %v3045, %v3043
        %v3100 = vpack.c.bf16 %v3048, %v3046
        %v3101 = vpack.c.bf16 %v3049, %v3047
        %v3102 = vpack.c.bf16 %v3052, %v3050
        %v3103 = vpack.c.bf16 %v3053, %v3051
        %v3104 = vpack.c.bf16 %v3056, %v3054
        %v3105 = vpack.c.bf16 %v3057, %v3055
        %v3106 = vpack.c.bf16 %v3060, %v3058
        %v3107 = vpack.c.bf16 %v3061, %v3059
        %v3108 = vpack.c.bf16 %v3064, %v3062
        %v3109 = vpack.c.bf16 %v3065, %v3063
        %v3110 = vpack.c.bf16 %v3068, %v3066
        %v3111 = vpack.c.bf16 %v3069, %v3067
        %v3112 = vpack.c.bf16 %v3072, %v3070
        %v3113 = vpack.c.bf16 %v3073, %v3071
        %v3114 = vpack.c.bf16 %v3076, %v3074
        %v3115 = vpack.c.bf16 %v3077, %v3075
        %v3116 = vpack.c.bf16 %v3080, %v3078
        %v3117 = vpack.c.bf16 %v3081, %v3079
        %v3118 = vpack.c.bf16 %v3084, %v3082
        %v3119 = vpack.c.bf16 %v3085, %v3083
        %v3120 = vpack.c.bf16 %v3088, %v3086
        %v3121 = vpack.c.bf16 %v3089, %v3087
        %v3154 = vunpack.c.l.b16 %v3090
        %v3155 = vunpack.c.l.b16 %v3091
        %v3156 = vunpack.c.h.b16 %v3090
        %v3157 = vunpack.c.h.b16 %v3091
        %v3158 = vunpack.c.l.b16 %v3092
        %v3159 = vunpack.c.l.b16 %v3093
        %v3160 = vunpack.c.h.b16 %v3092
        %v3161 = vunpack.c.h.b16 %v3093
        %v3162 = vunpack.c.l.b16 %v3094
        %v3163 = vunpack.c.l.b16 %v3095
        %v3164 = vunpack.c.h.b16 %v3094
        %v3165 = vunpack.c.h.b16 %v3095
        %v3166 = vunpack.c.l.b16 %v3096
        %v3167 = vunpack.c.l.b16 %v3097
        %v3168 = vunpack.c.h.b16 %v3096
        %v3169 = vunpack.c.h.b16 %v3097
        %v3170 = vunpack.c.l.b16 %v3098
        %v3171 = vunpack.c.l.b16 %v3099
        %v3172 = vunpack.c.h.b16 %v3098
        %v3173 = vunpack.c.h.b16 %v3099
        %v3174 = vunpack.c.l.b16 %v3100
        %v3175 = vunpack.c.l.b16 %v3101
        %v3176 = vunpack.c.h.b16 %v3100
        %v3177 = vunpack.c.h.b16 %v3101
        %v3178 = vunpack.c.l.b16 %v3102
        %v3179 = vunpack.c.l.b16 %v3103
        %v3180 = vunpack.c.h.b16 %v3102
        %v3181 = vunpack.c.h.b16 %v3103
        %v3182 = vunpack.c.l.b16 %v3104
        %v3183 = vunpack.c.l.b16 %v3105
        %v3184 = vunpack.c.h.b16 %v3104
        %v3185 = vunpack.c.h.b16 %v3105
        %v3186 = vunpack.c.l.b16 %v3106
        %v3187 = vunpack.c.l.b16 %v3107
        %v3188 = vunpack.c.h.b16 %v3106
        %v3189 = vunpack.c.h.b16 %v3107
        %v3190 = vunpack.c.l.b16 %v3108
        %v3191 = vunpack.c.l.b16 %v3109
        %v3192 = vunpack.c.h.b16 %v3108
        %v3193 = vunpack.c.h.b16 %v3109
        %v3194 = vunpack.c.l.b16 %v3110
        %v3195 = vunpack.c.l.b16 %v3111
        %v3196 = vunpack.c.h.b16 %v3110
        %v3197 = vunpack.c.h.b16 %v3111
        %v3198 = vunpack.c.l.b16 %v3112
        %v3199 = vunpack.c.l.b16 %v3113
        %v3200 = vunpack.c.h.b16 %v3112
        %v3201 = vunpack.c.h.b16 %v3113
        %v3202 = vunpack.c.l.b16 %v3114
        %v3203 = vunpack.c.l.b16 %v3115
        %v3204 = vunpack.c.h.b16 %v3114
        %v3205 = vunpack.c.h.b16 %v3115
        %v3206 = vunpack.c.l.b16 %v3116
        %v3207 = vunpack.c.l.b16 %v3117
        %v3208 = vunpack.c.h.b16 %v3116
        %v3209 = vunpack.c.h.b16 %v3117
        %v3210 = vunpack.c.l.b16 %v3118
        %v3211 = vunpack.c.l.b16 %v3119
        %v3212 = vunpack.c.h.b16 %v3118
        %v3213 = vunpack.c.h.b16 %v3119
        %v3214 = vunpack.c.l.b16 %v3120
        %v3215 = vunpack.c.l.b16 %v3121
        %v3216 = vunpack.c.h.b16 %v3120
        %v3217 = vunpack.c.h.b16 %v3121
        %v3218 = vpack.c.b16 %v3155, %v3154
        %v3219 = vpack.c.b16 %v3157, %v3156
        %v3220 = vpack.c.b16 %v3159, %v3158
        %v3221 = vpack.c.b16 %v3161, %v3160
        %v3222 = vpack.c.b16 %v3163, %v3162
        %v3223 = vpack.c.b16 %v3165, %v3164
        %v3224 = vpack.c.b16 %v3167, %v3166
        %v3225 = vpack.c.b16 %v3169, %v3168
        %v3226 = vpack.c.b16 %v3171, %v3170
        %v3227 = vpack.c.b16 %v3173, %v3172
        %v3228 = vpack.c.b16 %v3175, %v3174
        %v3229 = vpack.c.b16 %v3177, %v3176
        %v3230 = vpack.c.b16 %v3179, %v3178
        %v3231 = vpack.c.b16 %v3181, %v3180
        %v3232 = vpack.c.b16 %v3183, %v3182
        %v3233 = vpack.c.b16 %v3185, %v3184
        %v3234 = vpack.c.b16 %v3187, %v3186
        %v3235 = vpack.c.b16 %v3189, %v3188
        %v3236 = vpack.c.b16 %v3191, %v3190
        %v3237 = vpack.c.b16 %v3193, %v3192
        %v3238 = vpack.c.b16 %v3195, %v3194
        %v3239 = vpack.c.b16 %v3197, %v3196
        %v3240 = vpack.c.b16 %v3199, %v3198
        %v3241 = vpack.c.b16 %v3201, %v3200
        %v3242 = vpack.c.b16 %v3203, %v3202
        %v3243 = vpack.c.b16 %v3205, %v3204
        %v3244 = vpack.c.b16 %v3207, %v3206
        %v3245 = vpack.c.b16 %v3209, %v3208
        %v3246 = vpack.c.b16 %v3211, %v3210
        %v3247 = vpack.c.b16 %v3213, %v3212
        %v3248 = vpack.c.b16 %v3215, %v3214
        %v3249 = vpack.c.b16 %v3217, %v3216
        %3282 = vst [vmem:[%s510] sm:$0xff] %v3218
        %3283 = vst [vmem:[%s510 + $0x8] sm:$0xff] %v3219
        %3284 = vst [vmem:[%s510 + $0x10] sm:$0xff] %v3220
        %3285 = vst [vmem:[%s510 + $0x18] sm:$0xff] %v3221
        %3286 = vst [vmem:[%s510 + $0x20] sm:$0xff] %v3222
        %3287 = vst [vmem:[%s510 + $0x28] sm:$0xff] %v3223
        %3288 = vst [vmem:[%s510 + $0x30] sm:$0xff] %v3224
        %3289 = vst [vmem:[%s510 + $0x38] sm:$0xff] %v3225
        %3290 = vst [vmem:[%s510 + $0x40] sm:$0xff] %v3226
        %3291 = vst [vmem:[%s510 + $0x48] sm:$0xff] %v3227
        %3292 = vst [vmem:[%s510 + $0x50] sm:$0xff] %v3228
        %3293 = vst [vmem:[%s510 + $0x58] sm:$0xff] %v3229
        %3294 = vst [vmem:[%s510 + $0x60] sm:$0xff] %v3230
        %3295 = vst [vmem:[%s510 + $0x68] sm:$0xff] %v3231
        %3296 = vst [vmem:[%s510 + $0x70] sm:$0xff] %v3232
        %3297 = vst [vmem:[%s510 + $0x78] sm:$0xff] %v3233
        %3298 = vst [vmem:[%s510 + $0x80] sm:$0xff] %v3234
        %3299 = vst [vmem:[%s510 + $0x88] sm:$0xff] %v3235
        %3300 = vst [vmem:[%s510 + $0x90] sm:$0xff] %v3236
        %3301 = vst [vmem:[%s510 + $0x98] sm:$0xff] %v3237
        %3302 = vst [vmem:[%s510 + $0xa0] sm:$0xff] %v3238
        %3303 = vst [vmem:[%s510 + $0xa8] sm:$0xff] %v3239
        %3304 = vst [vmem:[%s510 + $0xb0] sm:$0xff] %v3240
        %3305 = vst [vmem:[%s510 + $0xb8] sm:$0xff] %v3241
        %3306 = vst [vmem:[%s510 + $0xc0] sm:$0xff] %v3242
        %3307 = vst [vmem:[%s510 + $0xc8] sm:$0xff] %v3243
        %3308 = vst [vmem:[%s510 + $0xd0] sm:$0xff] %v3244
        %3309 = vst [vmem:[%s510 + $0xd8] sm:$0xff] %v3245
        %3310 = vst [vmem:[%s510 + $0xe0] sm:$0xff] %v3246
        %3311 = vst [vmem:[%s510 + $0xe8] sm:$0xff] %v3247
        %3312 = vst [vmem:[%s510 + $0xf0] sm:$0xff] %v3248
        %3313 = vst [vmem:[%s510 + $0xf8] sm:$0xff] %v3249
        %v3314 = vpack.c.bf16 %v1490, %v1486
        %v3315 = vpack.c.bf16 %v1492, %v1488
        %v3316 = vpack.c.bf16 %v1500, %v1496
        %v3317 = vpack.c.bf16 %v1502, %v1498
        %v3318 = vpack.c.bf16 %v1510, %v1506
        %v3319 = vpack.c.bf16 %v1512, %v1508
        %v3320 = vpack.c.bf16 %v1520, %v1516
        %v3321 = vpack.c.bf16 %v1522, %v1518
        %v3322 = vpack.c.bf16 %v1530, %v1526
        %v3323 = vpack.c.bf16 %v1532, %v1528
        %v3324 = vpack.c.bf16 %v1540, %v1536
        %v3325 = vpack.c.bf16 %v1542, %v1538
        %v3326 = vpack.c.bf16 %v1550, %v1546
        %v3327 = vpack.c.bf16 %v1552, %v1548
        %v3328 = vpack.c.bf16 %v1560, %v1556
        %v3329 = vpack.c.bf16 %v1562, %v1558
        %v3330 = vpack.c.bf16 %v1570, %v1566
        %v3331 = vpack.c.bf16 %v1572, %v1568
        %v3332 = vpack.c.bf16 %v1580, %v1576
        %v3333 = vpack.c.bf16 %v1582, %v1578
        %v3334 = vpack.c.bf16 %v1590, %v1586
        %v3335 = vpack.c.bf16 %v1592, %v1588
        %v3336 = vpack.c.bf16 %v1600, %v1596
        %v3337 = vpack.c.bf16 %v1602, %v1598
        %v3338 = vpack.c.bf16 %v1610, %v1606
        %v3339 = vpack.c.bf16 %v1612, %v1608
        %v3340 = vpack.c.bf16 %v1620, %v1616
        %v3341 = vpack.c.bf16 %v1622, %v1618
        %v3342 = vpack.c.bf16 %v1630, %v1626
        %v3343 = vpack.c.bf16 %v1632, %v1628
        %v3344 = vpack.c.bf16 %v1640, %v1636
        %v3345 = vpack.c.bf16 %v1642, %v1638
        %v3378 = vunpack.c.l.b16 %v3314
        %v3379 = vunpack.c.l.b16 %v3315
        %v3380 = vunpack.c.h.b16 %v3314
        %v3381 = vunpack.c.h.b16 %v3315
        %v3382 = vunpack.c.l.b16 %v3316
        %v3383 = vunpack.c.l.b16 %v3317
        %v3384 = vunpack.c.h.b16 %v3316
        %v3385 = vunpack.c.h.b16 %v3317
        %v3386 = vunpack.c.l.b16 %v3318
        %v3387 = vunpack.c.l.b16 %v3319
        %v3388 = vunpack.c.h.b16 %v3318
        %v3389 = vunpack.c.h.b16 %v3319
        %v3390 = vunpack.c.l.b16 %v3320
        %v3391 = vunpack.c.l.b16 %v3321
        %v3392 = vunpack.c.h.b16 %v3320
        %v3393 = vunpack.c.h.b16 %v3321
        %v3394 = vunpack.c.l.b16 %v3322
        %v3395 = vunpack.c.l.b16 %v3323
        %v3396 = vunpack.c.h.b16 %v3322
        %v3397 = vunpack.c.h.b16 %v3323
        %v3398 = vunpack.c.l.b16 %v3324
        %v3399 = vunpack.c.l.b16 %v3325
        %v3400 = vunpack.c.h.b16 %v3324
        %v3401 = vunpack.c.h.b16 %v3325
        %v3402 = vunpack.c.l.b16 %v3326
        %v3403 = vunpack.c.l.b16 %v3327
        %v3404 = vunpack.c.h.b16 %v3326
        %v3405 = vunpack.c.h.b16 %v3327
        %v3406 = vunpack.c.l.b16 %v3328
        %v3407 = vunpack.c.l.b16 %v3329
        %v3408 = vunpack.c.h.b16 %v3328
        %v3409 = vunpack.c.h.b16 %v3329
        %v3410 = vunpack.c.l.b16 %v3330
        %v3411 = vunpack.c.l.b16 %v3331
        %v3412 = vunpack.c.h.b16 %v3330
        %v3413 = vunpack.c.h.b16 %v3331
        %v3414 = vunpack.c.l.b16 %v3332
        %v3415 = vunpack.c.l.b16 %v3333
        %v3416 = vunpack.c.h.b16 %v3332
        %v3417 = vunpack.c.h.b16 %v3333
        %v3418 = vunpack.c.l.b16 %v3334
        %v3419 = vunpack.c.l.b16 %v3335
        %v3420 = vunpack.c.h.b16 %v3334
        %v3421 = vunpack.c.h.b16 %v3335
        %v3422 = vunpack.c.l.b16 %v3336
        %v3423 = vunpack.c.l.b16 %v3337
        %v3424 = vunpack.c.h.b16 %v3336
        %v3425 = vunpack.c.h.b16 %v3337
        %v3426 = vunpack.c.l.b16 %v3338
        %v3427 = vunpack.c.l.b16 %v3339
        %v3428 = vunpack.c.h.b16 %v3338
        %v3429 = vunpack.c.h.b16 %v3339
        %v3430 = vunpack.c.l.b16 %v3340
        %v3431 = vunpack.c.l.b16 %v3341
        %v3432 = vunpack.c.h.b16 %v3340
        %v3433 = vunpack.c.h.b16 %v3341
        %v3434 = vunpack.c.l.b16 %v3342
        %v3435 = vunpack.c.l.b16 %v3343
        %v3436 = vunpack.c.h.b16 %v3342
        %v3437 = vunpack.c.h.b16 %v3343
        %v3438 = vunpack.c.l.b16 %v3344
        %v3439 = vunpack.c.l.b16 %v3345
        %v3440 = vunpack.c.h.b16 %v3344
        %v3441 = vunpack.c.h.b16 %v3345
        %v3442 = vpack.c.b16 %v3379, %v3378
        %v3443 = vpack.c.b16 %v3381, %v3380
        %v3444 = vpack.c.b16 %v3383, %v3382
        %v3445 = vpack.c.b16 %v3385, %v3384
        %v3446 = vpack.c.b16 %v3387, %v3386
        %v3447 = vpack.c.b16 %v3389, %v3388
        %v3448 = vpack.c.b16 %v3391, %v3390
        %v3449 = vpack.c.b16 %v3393, %v3392
        %v3450 = vpack.c.b16 %v3395, %v3394
        %v3451 = vpack.c.b16 %v3397, %v3396
        %v3452 = vpack.c.b16 %v3399, %v3398
        %v3453 = vpack.c.b16 %v3401, %v3400
        %v3454 = vpack.c.b16 %v3403, %v3402
        %v3455 = vpack.c.b16 %v3405, %v3404
        %v3456 = vpack.c.b16 %v3407, %v3406
        %v3457 = vpack.c.b16 %v3409, %v3408
        %v3458 = vpack.c.b16 %v3411, %v3410
        %v3459 = vpack.c.b16 %v3413, %v3412
        %v3460 = vpack.c.b16 %v3415, %v3414
        %v3461 = vpack.c.b16 %v3417, %v3416
        %v3462 = vpack.c.b16 %v3419, %v3418
        %v3463 = vpack.c.b16 %v3421, %v3420
        %v3464 = vpack.c.b16 %v3423, %v3422
        %v3465 = vpack.c.b16 %v3425, %v3424
        %v3466 = vpack.c.b16 %v3427, %v3426
        %v3467 = vpack.c.b16 %v3429, %v3428
        %v3468 = vpack.c.b16 %v3431, %v3430
        %v3469 = vpack.c.b16 %v3433, %v3432
        %v3470 = vpack.c.b16 %v3435, %v3434
        %v3471 = vpack.c.b16 %v3437, %v3436
        %v3472 = vpack.c.b16 %v3439, %v3438
        %v3473 = vpack.c.b16 %v3441, %v3440
        %3506 = vst [vmem:[%s517] sm:$0xff] %v3442
        %3507 = vst [vmem:[%s517 + $0x8] sm:$0xff] %v3443
        %3508 = vst [vmem:[%s517 + $0x10] sm:$0xff] %v3444
        %3509 = vst [vmem:[%s517 + $0x18] sm:$0xff] %v3445
        %3510 = vst [vmem:[%s517 + $0x20] sm:$0xff] %v3446
        %3511 = vst [vmem:[%s517 + $0x28] sm:$0xff] %v3447
        %3512 = vst [vmem:[%s517 + $0x30] sm:$0xff] %v3448
        %3513 = vst [vmem:[%s517 + $0x38] sm:$0xff] %v3449
        %3514 = vst [vmem:[%s517 + $0x40] sm:$0xff] %v3450
        %3515 = vst [vmem:[%s517 + $0x48] sm:$0xff] %v3451
        %3516 = vst [vmem:[%s517 + $0x50] sm:$0xff] %v3452
        %3517 = vst [vmem:[%s517 + $0x58] sm:$0xff] %v3453
        %3518 = vst [vmem:[%s517 + $0x60] sm:$0xff] %v3454
        %3519 = vst [vmem:[%s517 + $0x68] sm:$0xff] %v3455
        %3520 = vst [vmem:[%s517 + $0x70] sm:$0xff] %v3456
        %3521 = vst [vmem:[%s517 + $0x78] sm:$0xff] %v3457
        %3522 = vst [vmem:[%s517 + $0x80] sm:$0xff] %v3458
        %3523 = vst [vmem:[%s517 + $0x88] sm:$0xff] %v3459
        %3524 = vst [vmem:[%s517 + $0x90] sm:$0xff] %v3460
        %3525 = vst [vmem:[%s517 + $0x98] sm:$0xff] %v3461
        %3526 = vst [vmem:[%s517 + $0xa0] sm:$0xff] %v3462
        %3527 = vst [vmem:[%s517 + $0xa8] sm:$0xff] %v3463
        %3528 = vst [vmem:[%s517 + $0xb0] sm:$0xff] %v3464
        %3529 = vst [vmem:[%s517 + $0xb8] sm:$0xff] %v3465
        %3530 = vst [vmem:[%s517 + $0xc0] sm:$0xff] %v3466
        %3531 = vst [vmem:[%s517 + $0xc8] sm:$0xff] %v3467
        %3532 = vst [vmem:[%s517 + $0xd0] sm:$0xff] %v3468
        %3533 = vst [vmem:[%s517 + $0xd8] sm:$0xff] %v3469
        %3534 = vst [vmem:[%s517 + $0xe0] sm:$0xff] %v3470
        %3535 = vst [vmem:[%s517 + $0xe8] sm:$0xff] %v3471
        %3536 = vst [vmem:[%s517 + $0xf0] sm:$0xff] %v3472
        %3537 = vst [vmem:[%s517 + $0xf8] sm:$0xff] %v3473
        %s3538 = sand.u32 %s345, 1
        %s3539 = scalar_lea.sflag [#allocation3], %s3538
        %s3540 = sand.u32 %s345, 1
        %s3541 = smul.addr %s3540, 256
        %s3542 = scalar_lea.vmem [#allocation2], %s3541
        %s3543 = sand.u32 %s371, 1
        %s3544 = scalar_lea.sflag [#allocation5], %s3543
        %s3545 = sand.u32 %s371, 1
        %s3546 = smul.addr %s3545, 256
        %s3547 = scalar_lea.vmem [#allocation4], %s3546
        // Predicated region
        $region77: #{tpu_custom_call.1} parent=75 // pred_check
          %p3548 = pneg %p355
        $region78: #{tpu_custom_call.1} parent=75 // pred_check_branch
          %3550 = sbr.rel (%p3548) target = $region80
        $region79: #{tpu_custom_call.1} parent=75 // pred_region
          %s3551 = smul.u32 32, %s33
          %s3553 = ssub.s32 4096, 4096
          %3554 = vsyncadd %s3539, %s3553
          %s3555 = smul.addr %s3551, 2
          %s3556 = smul.addr %s3555, 64
          %s3557 = scalar_lea.hbm %s14, %s3556
          %s3558 = sshll.u32 %s3542, 4
          %s3559 = int_to_ptr.vmem [resolvable:$true] %s3558
          %3564 = dma.vmem_to_hbm [thread:$0]  %s3559, 4096, %s3557, %s3539, 128, 128, 8
        $region80: #{tpu_custom_call.1} parent=75 // pred_fallthru
          _
        // Predicated region
        $region81: #{tpu_custom_call.1} parent=75 // pred_check
          %p3565 = pneg %p381
        $region82: #{tpu_custom_call.1} parent=75 // pred_check_branch
          %3567 = sbr.rel (%p3565) target = $region84
        $region83: #{tpu_custom_call.1} parent=75 // pred_region
          %s3568 = smul.u32 32, %s33
          %s3570 = ssub.s32 4096, 4096
          %3571 = vsyncadd %s3544, %s3570
          %s3572 = smul.addr %s3568, 2
          %s3573 = smul.addr %s3572, 64
          %s3574 = scalar_lea.hbm %s15, %s3573
          %s3575 = sshll.u32 %s3547, 4
          %s3576 = int_to_ptr.vmem [resolvable:$true] %s3575
          %3581 = dma.vmem_to_hbm [thread:$0]  %s3576, 4096, %s3574, %s3544, 128, 128, 8
        $region84: #{tpu_custom_call.1} parent=75 // pred_fallthru
          _
      $region76: #{tpu_custom_call.1} parent=5 // pred_fallthru
        _
      %p3582 = scmp.le.s32.totalorder 2, %s28
      // Predicated region
      $region85: #{tpu_custom_call.1} parent=5 // pred_check
        %p3583 = pneg %p3582
      $region86: #{tpu_custom_call.1} parent=5 // pred_check_branch
        %3585 = sbr.rel (%p3583) target = $region88
      $region87: #{tpu_custom_call.1} parent=5 // pred_region
        %s3586 = ssub.s32 %s28, 2
        // Predicated region
        $region89: #{tpu_custom_call.1} parent=87 // pred_check
          %p3587 = pneg %p361
        $region90: #{tpu_custom_call.1} parent=87 // pred_check_branch
          %3589 = sbr.rel (%p3587) target = $region92
        $region91: #{tpu_custom_call.1} parent=87 // pred_region
          %s3590 = sand.u32 %s346, 1
          %s3591 = scalar_lea.sflag [#allocation3], %s3590
          %s3592 = sand.u32 %s346, 1
          %s3593 = smul.addr %s3592, 256
          %s3594 = scalar_lea.vmem [#allocation2], %s3593
          %3595 = dma.done %s3591, 4096
        $region92: #{tpu_custom_call.1} parent=87 // pred_fallthru
          _
        // Predicated region
        $region93: #{tpu_custom_call.1} parent=87 // pred_check
          %p3596 = pneg %p387
        $region94: #{tpu_custom_call.1} parent=87 // pred_check_branch
          %3598 = sbr.rel (%p3596) target = $region96
        $region95: #{tpu_custom_call.1} parent=87 // pred_region
          %s3599 = sand.u32 %s372, 1
          %s3600 = scalar_lea.sflag [#allocation5], %s3599
          %s3601 = sand.u32 %s372, 1
          %s3602 = smul.addr %s3601, 256
          %s3603 = scalar_lea.vmem [#allocation4], %s3602
          %3604 = dma.done %s3600, 4096
        $region96: #{tpu_custom_call.1} parent=87 // pred_fallthru
          _
      $region88: #{tpu_custom_call.1} parent=5 // pred_fallthru
        _
    $region6: #{tpu_custom_call.1} parent=1 // loop_footer
      %s32 = sadd.s32 1, %s28
    $region7: #{tpu_custom_call.1} parent=1 // loop_footer_branch
      %27 = sbr.rel target = $region3
    $region8: #{tpu_custom_call.1} parent=1 // loop_exit
      _
    %3605 = vsyncpa [#allocation3], 1
    %s3606 = scalar_lea.sflag [#allocation3], 1
    %3607 = vsyncpa %s3606, 1
    %3608 = vsyncpa [#allocation5], 1
    %s3609 = scalar_lea.sflag [#allocation5], 1
    %3610 = vsyncpa %s3609, 1

</llo_original>
